<compile_context>
chip_gen: v6e
topology: v6e:2x2x1
jax: 0.10.0
libtpu: 0.0.40
codegen_flags: <defaults>
</compile_context>

<pallas_src>
import jax
import jax.numpy as jnp
from jax import lax
from jax.experimental import pallas as pl
from jax.experimental.pallas import tpu as pltpu


def m11_blocks(c_in, n_channel):
    nc = n_channel
    # (c_in, c_out, kernel, padding, stride) per conv layer, grouped by block.
    return [
        [(c_in, nc, 80, 38, 4)],
        [(nc, nc, 3, 1, 1), (nc, nc, 3, 1, 1)],
        [(nc, 2 * nc, 3, 1, 1), (2 * nc, 2 * nc, 3, 1, 1)],
        [(2 * nc, 4 * nc, 3, 1, 1), (4 * nc, 4 * nc, 3, 1, 1),
         (4 * nc, 4 * nc, 3, 1, 1)],
        [(4 * nc, 8 * nc, 3, 1, 1), (8 * nc, 8 * nc, 3, 1, 1)],
    ]


def m11_forward(x_ncl, params, n_channel):
    """Forward pass of M11 (inference).  x_ncl: (N, C_in, L) -> (N, 1, n_out)."""
    conv_params, (fc_w, fc_b) = params
    N, C_in, L = x_ncl.shape
    nc = n_channel
    assert nc % 8 == 0, "kernel assumes n_channel is a multiple of 8"
    blocks = m11_blocks(C_in, nc)
    for blk in blocks[1:]:
        for (_ci, _co, k, p, s) in blk:
            assert k == 3 and p == 1 and s == 1
    n_k3 = sum(len(b) for b in blocks) - 1
    c_last, n_out = fc_w.shape
    eps = 1e-5

    # ---- fold BatchNorm (eval mode) + conv bias into per-channel scale/shift -
    folded = []
    for (w, b, gamma, beta, rmean, rvar) in conv_params:
        scale = gamma / jnp.sqrt(rvar + eps)
        shift = (beta + (b - rmean) * scale).reshape(-1, 1).astype(jnp.float32)
        folded.append((w * scale[:, None, None], shift))

    # ---- stem conv (k=80, stride 4): host-side im2col, phase-split by pool0 --
    c0i, c0o, k0, p0, s0 = blocks[0][0]
    assert s0 == 4
    Lp = L + 2 * p0
    assert (Lp - k0) % s0 == 0
    L0 = (Lp - k0) // s0 + 1
    assert L0 % 4 == 0
    L0q = L0 // 4
    # every max-pool input must be divisible by 4 (PyTorch would truncate)
    cur_check = L0q
    for _ in range(1, len(blocks)):
        assert cur_check % 4 == 0 and cur_check >= 4
        cur_check //= 4
    final_len = cur_check

    K0 = C_in * k0
    xp = jnp.pad(x_ncl.astype(jnp.float32), ((0, 0), (0, 0), (p0, p0)))
    # input position for (phase t, tap a, output column j) = 16*j + 4*t + a
    idx = (4 * jnp.arange(4))[:, None, None] \
        + jnp.arange(k0)[None, :, None] \
        + (16 * jnp.arange(L0q))[None, None, :]              # (4, k0, L0q)
    x_stem = xp[:, :, idx]                                    # (N, Cin, 4, k0, L0q)
    x_stem = x_stem.transpose(0, 2, 1, 3, 4).reshape(N, 4 * K0, L0q)
    x_stem = x_stem.astype(jnp.bfloat16)
    w0 = folded[0][0].reshape(c0o, K0).astype(jnp.bfloat16)   # row order ci*k0+a
    sh0 = folded[0][1]

    # ---- k=3 convs: weights packed as (Cout, 3*Cin) (tap-major, bf16) --------
    k3_w, k3_sh = [], []
    for (w_s, sh) in folded[1:]:
        co, ci_, kk = w_s.shape
        k3_w.append(jnp.transpose(w_s, (0, 2, 1)).reshape(co, kk * ci_)
                    .astype(jnp.bfloat16))
        k3_sh.append(sh)

    # ---- max-pool(4,4) selection matrices (bf16, tiny after pool0 fusion) ----
    pool_lens = []
    cur = L0q
    for _ in range(1, len(blocks)):
        pool_lens.append(cur)
        cur //= 4
    sels = []
    for r in pool_lens:
        if r > 4:
            p_ = r // 4
            s_ = jnp.zeros((r - 3, p_), jnp.float32)
            s_ = s_.at[4 * jnp.arange(p_), jnp.arange(p_)].set(1.0)
            sels.append(s_.astype(jnp.bfloat16))
    n_sel = len(sels)

    fcw_t = jnp.transpose(fc_w).astype(jnp.float32)           # (n_out, c_last)
    fcb_c = fc_b.reshape(n_out, 1).astype(jnp.float32)

    inputs = [x_stem, w0, sh0]
    for w_, sh_ in zip(k3_w, k3_sh):
        inputs += [w_, sh_]
    inputs += [fcw_t, fcb_c]
    inputs += sels

    def const_spec(arr):
        nd = arr.ndim
        return pl.BlockSpec(arr.shape, lambda n, _nd=nd: (0,) * _nd)

    in_specs = [pl.BlockSpec((1, 4 * K0, L0q), lambda n: (n, 0, 0))]
    in_specs += [const_spec(a) for a in inputs[1:]]

    def kernel(*refs):
        x_ref = refs[0]
        w0_ref, sh0_ref = refs[1], refs[2]
        conv_refs = refs[3:3 + 2 * n_k3]
        fcw_ref = refs[3 + 2 * n_k3]
        fcb_ref = refs[4 + 2 * n_k3]
        sel_refs = refs[5 + 2 * n_k3: 5 + 2 * n_k3 + n_sel]
        o_ref = refs[5 + 2 * n_k3 + n_sel]
        tap_ref = refs[-1]                                    # (3*c_last, L0q+2) f32

        def store_taps(y, co, real):
            # Lay the activation out so the next k=3 conv reads one contiguous
            # (3*Cin, real) operand at tap_ref[:, 1:1+real]; the pad=1 zero
            # columns are already in place (guard columns).
            tap_ref[0:co, 2:2 + real] = y
            tap_ref[co:2 * co, 1:1 + real] = y
            tap_ref[2 * co:3 * co, 0:real] = y
            zc = jnp.zeros((co, 1), jnp.float32)
            tap_ref[0:co, 1:2] = zc
            tap_ref[2 * co:3 * co, real:real + 1] = zc

        # ---- stem conv fused with the first max-pool (max over 4 phases) ----
        m = None
        for t in range(4):
            xt = x_ref[0, t * K0:(t + 1) * K0, :]             # (K0, L0q) bf16
            pt = jnp.dot(w0_ref[...], xt, preferred_element_type=jnp.float32)
            m = pt if m is None else jnp.maximum(m, pt)
        y = jnp.maximum(m + sh0_ref[...], 0.0)                # (c0o, L0q) f32
        store_taps(y, c0o, L0q)

        # ---- k=3 conv blocks + max-pools, all VMEM-resident ------------------
        cur_l = L0q
        ci_idx = 0
        si = 0
        feat = None
        for bi in range(1, len(blocks)):
            nb = len(blocks[bi])
            cout_l = blocks[bi][-1][1]
            for li, (cin_l, cout_l, _k, _p, _s) in enumerate(blocks[bi]):
                w_ref = conv_refs[2 * ci_idx]
                sh_ref = conv_refs[2 * ci_idx + 1]
                taps = tap_ref[0:3 * cin_l, 1:1 + cur_l].astype(jnp.bfloat16)
                acc = jnp.dot(w_ref[...], taps,
                              preferred_element_type=jnp.float32)
                y = jnp.maximum(acc + sh_ref[...], 0.0)       # (cout_l, cur_l)
                if li < nb - 1:
                    store_taps(y, cout_l, cur_l)              # next op is a conv
                else:
                    tap_ref[0:cout_l, 0:cur_l] = y            # plain, for the pool
                ci_idx += 1
            # max-pool kernel=4 stride=4 over the plain copy
            pooled = cur_l // 4
            ms = tap_ref[0:cout_l, 0:cur_l - 3]
            for t in range(1, 4):
                ms = jnp.maximum(ms, tap_ref[0:cout_l, t:t + cur_l - 3])
            if cur_l == 4:
                pv = ms                                       # already the max
            else:
                pv = jnp.dot(ms.astype(jnp.bfloat16), sel_refs[si][...],
                             preferred_element_type=jnp.float32)
                si += 1
            if bi < len(blocks) - 1:
                store_taps(pv, cout_l, pooled)
            else:
                feat = pv                                     # (c_last, final_len)
            cur_l = pooled

        # ---- head: avg-pool + Linear + log_softmax (kept in f32) -------------
        logits = jnp.dot(fcw_ref[...], feat,
                         preferred_element_type=jnp.float32)  # (n_out, final_len)
        logits = jnp.sum(logits, axis=1, keepdims=True) * (1.0 / cur_l)
        logits = logits + fcb_ref[...]                        # (n_out, 1)
        zmax = jnp.max(logits, axis=0, keepdims=True)
        z = logits - zmax
        lse = jnp.log(jnp.sum(jnp.exp(z), axis=0, keepdims=True))
        o_ref[0] = z - lse

    out = pl.pallas_call(
        kernel,
        out_shape=jax.ShapeDtypeStruct((N, n_out, 1), jnp.float32),
        grid=(N,),
        in_specs=in_specs,
        out_specs=pl.BlockSpec((1, n_out, 1), lambda n: (n, 0, 0)),
        scratch_shapes=[pltpu.VMEM((3 * c_last, L0q + 2), jnp.float32)],
        compiler_params=pltpu.CompilerParams(
            dimension_semantics=("parallel",),
            vmem_limit_bytes=32 * 1024 * 1024),
    )(*inputs)
    return jnp.transpose(out, (0, 2, 1))                      # (N, 1, n_out)


# ----------------------------- pure-JAX reference ---------------------------

def m11_reference(x_ncl, params, n_channel):
    conv_params, (fc_w, fc_b) = params
    blocks = m11_blocks(x_ncl.shape[1], n_channel)
    x = x_ncl.astype(jnp.float32)
    idx = 0
    for blk in blocks:
        for (_ci, _co, _k, p, s) in blk:
            w, b, gamma, beta, rmean, rvar = conv_params[idx]
            y = lax.conv_general_dilated(
                x, w, window_strides=(s,), padding=[(p, p)],
                dimension_numbers=("NCH", "OIH", "NCH"),
                precision=lax.Precision.HIGHEST)
            y = y + b[None, :, None]
            scale = gamma / jnp.sqrt(rvar + 1e-5)
            y = (y - rmean[None, :, None]) * scale[None, :, None] + beta[None, :, None]
            x = jnp.maximum(y, 0.0)
            idx += 1
        Nb, Cb, Lb = x.shape
        x = x[:, :, :(Lb // 4) * 4].reshape(Nb, Cb, Lb // 4, 4).max(axis=-1)
    feat = jnp.mean(x, axis=-1)
    logits = feat @ fc_w + fc_b
    return jax.nn.log_softmax(logits, axis=-1)[:, None, :]


# --------------------------- parameter construction -------------------------

def init_conv_params(key, cin, cout, k):
    k1, k2, k3, k4, k5, k6 = jax.random.split(key, 6)
    fan_in = cin * k
    w = jax.random.normal(k1, (cout, cin, k), jnp.float32) / jnp.sqrt(fan_in)
    b = 0.01 * jax.random.normal(k2, (cout,), jnp.float32)
    gamma = 1.0 + 0.1 * jax.random.normal(k3, (cout,), jnp.float32)
    beta = 0.1 * jax.random.normal(k4, (cout,), jnp.float32)
    rmean = 0.05 * jax.random.normal(k5, (cout,), jnp.float32)
    rvar = 1.0 + 0.1 * jnp.abs(jax.random.normal(k6, (cout,), jnp.float32))
    return (w, b, gamma, beta, rmean, rvar)


if __name__ == "__main__":
    key = jax.random.PRNGKey(0)
    N, C_in, L = 2, 1, 4096        # smallest L surviving stride-4 + 5 pools of 4
    n_channel = 8                  # small demo width (PyTorch default is 64)
    n_output = 35

    blocks = m11_blocks(C_in, n_channel)
    layer_io = [(ci, co, k) for blk in blocks for (ci, co, k, _p, _s) in blk]
    keys = jax.random.split(key, len(layer_io) + 3)
    conv_params = [init_conv_params(keys[i], ci, co, k)
                   for i, (ci, co, k) in enumerate(layer_io)]
    c_last = 8 * n_channel
    # fc weight stored as (in_features, out_features) == nn.Linear weight^T
    fc_w = jax.random.normal(keys[-3], (c_last, n_output),
                             jnp.float32) / jnp.sqrt(c_last)
    fc_b = 0.01 * jax.random.normal(keys[-2], (n_output,), jnp.float32)
    x = jax.random.normal(keys[-1], (N, C_in, L), jnp.float32)

    params = (conv_params, (fc_w, fc_b))
    out = m11_forward(x, params, n_channel)
    out = jax.block_until_ready(out)
    assert out.shape == (N, 1, n_output), out.shape
    assert bool(jnp.all(jnp.isfinite(out)))

    ref = m11_reference(x, params, n_channel)
    err = float(jnp.max(jnp.abs(out - ref)))
    # bf16 conv/pool matmul operands vs an all-f32 reference -> loose tolerance
    assert err < 1.5e-1, f"max abs err vs reference: {err}"
    print("KERNEL_OK")
</pallas_src>

<mosaic_0001>
module attributes {stable_mosaic.version = 11 : i64} {
  func.func @kernel(%arg0: i32, %arg1: memref<1x320x256xbf16, #tpu.memory_space<vmem>>, %arg2: memref<8x80xbf16, #tpu.memory_space<vmem>>, %arg3: memref<8x1xf32, #tpu.memory_space<vmem>>, %arg4: memref<8x24xbf16, #tpu.memory_space<vmem>>, %arg5: memref<8x1xf32, #tpu.memory_space<vmem>>, %arg6: memref<8x24xbf16, #tpu.memory_space<vmem>>, %arg7: memref<8x1xf32, #tpu.memory_space<vmem>>, %arg8: memref<16x24xbf16, #tpu.memory_space<vmem>>, %arg9: memref<16x1xf32, #tpu.memory_space<vmem>>, %arg10: memref<16x48xbf16, #tpu.memory_space<vmem>>, %arg11: memref<16x1xf32, #tpu.memory_space<vmem>>, %arg12: memref<32x48xbf16, #tpu.memory_space<vmem>>, %arg13: memref<32x1xf32, #tpu.memory_space<vmem>>, %arg14: memref<32x96xbf16, #tpu.memory_space<vmem>>, %arg15: memref<32x1xf32, #tpu.memory_space<vmem>>, %arg16: memref<32x96xbf16, #tpu.memory_space<vmem>>, %arg17: memref<32x1xf32, #tpu.memory_space<vmem>>, %arg18: memref<64x96xbf16, #tpu.memory_space<vmem>>, %arg19: memref<64x1xf32, #tpu.memory_space<vmem>>, %arg20: memref<64x192xbf16, #tpu.memory_space<vmem>>, %arg21: memref<64x1xf32, #tpu.memory_space<vmem>>, %arg22: memref<35x64xf32, #tpu.memory_space<vmem>>, %arg23: memref<35x1xf32, #tpu.memory_space<vmem>>, %arg24: memref<253x64xbf16, #tpu.memory_space<vmem>>, %arg25: memref<61x16xbf16, #tpu.memory_space<vmem>>, %arg26: memref<13x4xbf16, #tpu.memory_space<vmem>>, %arg27: memref<1x35x1xf32, #tpu.memory_space<vmem>>, %arg28: memref<192x258xf32, #tpu.memory_space<vmem>>) attributes {dimension_semantics = [#tpu.dimension_semantics<parallel>], iteration_bounds = array<i64: 2>, scalar_prefetch = 0 : i64, scratch_operands = 1 : i64, tpu.core_type = #tpu.core_type<tc>, window_params = [{transform_indices = @transform_0, window_bounds = array<i64: 1, 320, 256>}, {pipeline_mode = #tpu.pipeline_mode<synchronous>, transform_indices = @transform_1, window_bounds = array<i64: 8, 80>}, {pipeline_mode = #tpu.pipeline_mode<synchronous>, transform_indices = @transform_2, window_bounds = array<i64: 8, 1>}, {pipeline_mode = #tpu.pipeline_mode<synchronous>, transform_indices = @transform_3, window_bounds = array<i64: 8, 24>}, {pipeline_mode = #tpu.pipeline_mode<synchronous>, transform_indices = @transform_4, window_bounds = array<i64: 8, 1>}, {pipeline_mode = #tpu.pipeline_mode<synchronous>, transform_indices = @transform_5, window_bounds = array<i64: 8, 24>}, {pipeline_mode = #tpu.pipeline_mode<synchronous>, transform_indices = @transform_6, window_bounds = array<i64: 8, 1>}, {pipeline_mode = #tpu.pipeline_mode<synchronous>, transform_indices = @transform_7, window_bounds = array<i64: 16, 24>}, {pipeline_mode = #tpu.pipeline_mode<synchronous>, transform_indices = @transform_8, window_bounds = array<i64: 16, 1>}, {pipeline_mode = #tpu.pipeline_mode<synchronous>, transform_indices = @transform_9, window_bounds = array<i64: 16, 48>}, {pipeline_mode = #tpu.pipeline_mode<synchronous>, transform_indices = @transform_10, window_bounds = array<i64: 16, 1>}, {pipeline_mode = #tpu.pipeline_mode<synchronous>, transform_indices = @transform_11, window_bounds = array<i64: 32, 48>}, {pipeline_mode = #tpu.pipeline_mode<synchronous>, transform_indices = @transform_12, window_bounds = array<i64: 32, 1>}, {pipeline_mode = #tpu.pipeline_mode<synchronous>, transform_indices = @transform_13, window_bounds = array<i64: 32, 96>}, {pipeline_mode = #tpu.pipeline_mode<synchronous>, transform_indices = @transform_14, window_bounds = array<i64: 32, 1>}, {pipeline_mode = #tpu.pipeline_mode<synchronous>, transform_indices = @transform_15, window_bounds = array<i64: 32, 96>}, {pipeline_mode = #tpu.pipeline_mode<synchronous>, transform_indices = @transform_16, window_bounds = array<i64: 32, 1>}, {pipeline_mode = #tpu.pipeline_mode<synchronous>, transform_indices = @transform_17, window_bounds = array<i64: 64, 96>}, {pipeline_mode = #tpu.pipeline_mode<synchronous>, transform_indices = @transform_18, window_bounds = array<i64: 64, 1>}, {pipeline_mode = #tpu.pipeline_mode<synchronous>, transform_indices = @transform_19, window_bounds = array<i64: 64, 192>}, {pipeline_mode = #tpu.pipeline_mode<synchronous>, transform_indices = @transform_20, window_bounds = array<i64: 64, 1>}, {pipeline_mode = #tpu.pipeline_mode<synchronous>, transform_indices = @transform_21, window_bounds = array<i64: 35, 64>}, {pipeline_mode = #tpu.pipeline_mode<synchronous>, transform_indices = @transform_22, window_bounds = array<i64: 35, 1>}, {pipeline_mode = #tpu.pipeline_mode<synchronous>, transform_indices = @transform_23, window_bounds = array<i64: 253, 64>}, {pipeline_mode = #tpu.pipeline_mode<synchronous>, transform_indices = @transform_24, window_bounds = array<i64: 61, 16>}, {pipeline_mode = #tpu.pipeline_mode<synchronous>, transform_indices = @transform_25, window_bounds = array<i64: 13, 4>}, {transform_indices = @transform_26, window_bounds = array<i64: 1, 35, 1>}]} {
    %c0 = arith.constant 0 : index
    %c0_0 = arith.constant 0 : index
    %c0_1 = arith.constant 0 : index
    %0 = vector.load %arg1[%c0, %c0_0, %c0_1] : memref<1x320x256xbf16, #tpu.memory_space<vmem>>, vector<1x80x256xbf16>
    %1 = vector.shape_cast %0 : vector<1x80x256xbf16> to vector<80x256xbf16>
    %c0_2 = arith.constant 0 : index
    %c0_3 = arith.constant 0 : index
    %2 = vector.load %arg2[%c0_2, %c0_3] : memref<8x80xbf16, #tpu.memory_space<vmem>>, vector<8x80xbf16>
    %cst = arith.constant dense<0.000000e+00> : vector<8x256xf32>
    %3 = tpu.matmul %2, %1, %cst {dimension_numbers = #tpu.dot_dimension_numbers<[1], [0], [0], [1], [0, 0, 1, 1], [], []>} : vector<8x80xbf16>, vector<80x256xbf16>, vector<8x256xf32> -> vector<8x256xf32>
    %c0_4 = arith.constant 0 : index
    %c80 = arith.constant 80 : index
    %c0_5 = arith.constant 0 : index
    %4 = vector.load %arg1[%c0_4, %c80, %c0_5] : memref<1x320x256xbf16, #tpu.memory_space<vmem>>, vector<1x80x256xbf16>
    %5 = vector.shape_cast %4 : vector<1x80x256xbf16> to vector<80x256xbf16>
    %c0_6 = arith.constant 0 : index
    %c0_7 = arith.constant 0 : index
    %6 = vector.load %arg2[%c0_6, %c0_7] : memref<8x80xbf16, #tpu.memory_space<vmem>>, vector<8x80xbf16>
    %cst_8 = arith.constant dense<0.000000e+00> : vector<8x256xf32>
    %7 = tpu.matmul %6, %5, %cst_8 {dimension_numbers = #tpu.dot_dimension_numbers<[1], [0], [0], [1], [0, 0, 1, 1], [], []>} : vector<8x80xbf16>, vector<80x256xbf16>, vector<8x256xf32> -> vector<8x256xf32>
    %8 = arith.maximumf %3, %7 : vector<8x256xf32>
    %c0_9 = arith.constant 0 : index
    %c160 = arith.constant 160 : index
    %c0_10 = arith.constant 0 : index
    %9 = vector.load %arg1[%c0_9, %c160, %c0_10] : memref<1x320x256xbf16, #tpu.memory_space<vmem>>, vector<1x80x256xbf16>
    %10 = vector.shape_cast %9 : vector<1x80x256xbf16> to vector<80x256xbf16>
    %c0_11 = arith.constant 0 : index
    %c0_12 = arith.constant 0 : index
    %11 = vector.load %arg2[%c0_11, %c0_12] : memref<8x80xbf16, #tpu.memory_space<vmem>>, vector<8x80xbf16>
    %cst_13 = arith.constant dense<0.000000e+00> : vector<8x256xf32>
    %12 = tpu.matmul %11, %10, %cst_13 {dimension_numbers = #tpu.dot_dimension_numbers<[1], [0], [0], [1], [0, 0, 1, 1], [], []>} : vector<8x80xbf16>, vector<80x256xbf16>, vector<8x256xf32> -> vector<8x256xf32>
    %13 = arith.maximumf %8, %12 : vector<8x256xf32>
    %c0_14 = arith.constant 0 : index
    %c240 = arith.constant 240 : index
    %c0_15 = arith.constant 0 : index
    %14 = vector.load %arg1[%c0_14, %c240, %c0_15] : memref<1x320x256xbf16, #tpu.memory_space<vmem>>, vector<1x80x256xbf16>
    %15 = vector.shape_cast %14 : vector<1x80x256xbf16> to vector<80x256xbf16>
    %c0_16 = arith.constant 0 : index
    %c0_17 = arith.constant 0 : index
    %16 = vector.load %arg2[%c0_16, %c0_17] : memref<8x80xbf16, #tpu.memory_space<vmem>>, vector<8x80xbf16>
    %cst_18 = arith.constant dense<0.000000e+00> : vector<8x256xf32>
    %17 = tpu.matmul %16, %15, %cst_18 {dimension_numbers = #tpu.dot_dimension_numbers<[1], [0], [0], [1], [0, 0, 1, 1], [], []>} : vector<8x80xbf16>, vector<80x256xbf16>, vector<8x256xf32> -> vector<8x256xf32>
    %18 = arith.maximumf %13, %17 : vector<8x256xf32>
    %c0_19 = arith.constant 0 : index
    %c0_20 = arith.constant 0 : index
    %19 = vector.load %arg3[%c0_19, %c0_20] : memref<8x1xf32, #tpu.memory_space<vmem>>, vector<8x1xf32>
    %20 = vector.broadcast %19 : vector<8x1xf32> to vector<8x256xf32>
    %21 = arith.addf %18, %20 : vector<8x256xf32>
    %cst_21 = arith.constant 0.000000e+00 : f32
    %22 = vector.broadcast %cst_21 : f32 to vector<8x256xf32>
    %23 = arith.maximumf %21, %22 : vector<8x256xf32>
    %c0_22 = arith.constant 0 : index
    %c2 = arith.constant 2 : index
    %24 = vector.load %arg28[%c0_22, %c2] : memref<192x258xf32, #tpu.memory_space<vmem>>, vector<8x256xf32>
    tpu.vector_store %arg28[%c0_22, %c2], %23 {strides = array<i32>} : memref<192x258xf32, #tpu.memory_space<vmem>>, vector<8x256xf32>,
    %c8 = arith.constant 8 : index
    %c1 = arith.constant 1 : index
    %25 = vector.load %arg28[%c8, %c1] : memref<192x258xf32, #tpu.memory_space<vmem>>, vector<8x256xf32>
    tpu.vector_store %arg28[%c8, %c1], %23 {strides = array<i32>} : memref<192x258xf32, #tpu.memory_space<vmem>>, vector<8x256xf32>,
    %c16 = arith.constant 16 : index
    %c0_23 = arith.constant 0 : index
    %26 = vector.load %arg28[%c16, %c0_23] : memref<192x258xf32, #tpu.memory_space<vmem>>, vector<8x256xf32>
    tpu.vector_store %arg28[%c16, %c0_23], %23 {strides = array<i32>} : memref<192x258xf32, #tpu.memory_space<vmem>>, vector<8x256xf32>,
    %cst_24 = arith.constant 0.000000e+00 : f32
    %27 = vector.broadcast %cst_24 : f32 to vector<8x1xf32>
    %c0_25 = arith.constant 0 : index
    %c1_26 = arith.constant 1 : index
    %28 = vector.load %arg28[%c0_25, %c1_26] : memref<192x258xf32, #tpu.memory_space<vmem>>, vector<8x1xf32>
    tpu.vector_store %arg28[%c0_25, %c1_26], %27 {strides = array<i32>} : memref<192x258xf32, #tpu.memory_space<vmem>>, vector<8x1xf32>,
    %c16_27 = arith.constant 16 : index
    %c256 = arith.constant 256 : index
    %29 = vector.load %arg28[%c16_27, %c256] : memref<192x258xf32, #tpu.memory_space<vmem>>, vector<8x1xf32>
    tpu.vector_store %arg28[%c16_27, %c256], %27 {strides = array<i32>} : memref<192x258xf32, #tpu.memory_space<vmem>>, vector<8x1xf32>,
    %c0_28 = arith.constant 0 : index
    %c1_29 = arith.constant 1 : index
    %30 = vector.load %arg28[%c0_28, %c1_29] : memref<192x258xf32, #tpu.memory_space<vmem>>, vector<24x256xf32>
    %31 = arith.truncf %30 : vector<24x256xf32> to vector<24x256xbf16>
    %c0_30 = arith.constant 0 : index
    %c0_31 = arith.constant 0 : index
    %32 = vector.load %arg4[%c0_30, %c0_31] : memref<8x24xbf16, #tpu.memory_space<vmem>>, vector<8x24xbf16>
    %cst_32 = arith.constant dense<0.000000e+00> : vector<8x256xf32>
    %33 = tpu.matmul %32, %31, %cst_32 {dimension_numbers = #tpu.dot_dimension_numbers<[1], [0], [0], [1], [0, 0, 1, 1], [], []>} : vector<8x24xbf16>, vector<24x256xbf16>, vector<8x256xf32> -> vector<8x256xf32>
    %c0_33 = arith.constant 0 : index
    %c0_34 = arith.constant 0 : index
    %34 = vector.load %arg5[%c0_33, %c0_34] : memref<8x1xf32, #tpu.memory_space<vmem>>, vector<8x1xf32>
    %35 = vector.broadcast %34 : vector<8x1xf32> to vector<8x256xf32>
    %36 = arith.addf %33, %35 : vector<8x256xf32>
    %cst_35 = arith.constant 0.000000e+00 : f32
    %37 = vector.broadcast %cst_35 : f32 to vector<8x256xf32>
    %38 = arith.maximumf %36, %37 : vector<8x256xf32>
    %c0_36 = arith.constant 0 : index
    %c2_37 = arith.constant 2 : index
    %39 = vector.load %arg28[%c0_36, %c2_37] : memref<192x258xf32, #tpu.memory_space<vmem>>, vector<8x256xf32>
    tpu.vector_store %arg28[%c0_36, %c2_37], %38 {strides = array<i32>} : memref<192x258xf32, #tpu.memory_space<vmem>>, vector<8x256xf32>,
    %c8_38 = arith.constant 8 : index
    %c1_39 = arith.constant 1 : index
    %40 = vector.load %arg28[%c8_38, %c1_39] : memref<192x258xf32, #tpu.memory_space<vmem>>, vector<8x256xf32>
    tpu.vector_store %arg28[%c8_38, %c1_39], %38 {strides = array<i32>} : memref<192x258xf32, #tpu.memory_space<vmem>>, vector<8x256xf32>,
    %c16_40 = arith.constant 16 : index
    %c0_41 = arith.constant 0 : index
    %41 = vector.load %arg28[%c16_40, %c0_41] : memref<192x258xf32, #tpu.memory_space<vmem>>, vector<8x256xf32>
    tpu.vector_store %arg28[%c16_40, %c0_41], %38 {strides = array<i32>} : memref<192x258xf32, #tpu.memory_space<vmem>>, vector<8x256xf32>,
    %cst_42 = arith.constant 0.000000e+00 : f32
    %42 = vector.broadcast %cst_42 : f32 to vector<8x1xf32>
    %c0_43 = arith.constant 0 : index
    %c1_44 = arith.constant 1 : index
    %43 = vector.load %arg28[%c0_43, %c1_44] : memref<192x258xf32, #tpu.memory_space<vmem>>, vector<8x1xf32>
    tpu.vector_store %arg28[%c0_43, %c1_44], %42 {strides = array<i32>} : memref<192x258xf32, #tpu.memory_space<vmem>>, vector<8x1xf32>,
    %c16_45 = arith.constant 16 : index
    %c256_46 = arith.constant 256 : index
    %44 = vector.load %arg28[%c16_45, %c256_46] : memref<192x258xf32, #tpu.memory_space<vmem>>, vector<8x1xf32>
    tpu.vector_store %arg28[%c16_45, %c256_46], %42 {strides = array<i32>} : memref<192x258xf32, #tpu.memory_space<vmem>>, vector<8x1xf32>,
    %c0_47 = arith.constant 0 : index
    %c1_48 = arith.constant 1 : index
    %45 = vector.load %arg28[%c0_47, %c1_48] : memref<192x258xf32, #tpu.memory_space<vmem>>, vector<24x256xf32>
    %46 = arith.truncf %45 : vector<24x256xf32> to vector<24x256xbf16>
    %c0_49 = arith.constant 0 : index
    %c0_50 = arith.constant 0 : index
    %47 = vector.load %arg6[%c0_49, %c0_50] : memref<8x24xbf16, #tpu.memory_space<vmem>>, vector<8x24xbf16>
    %cst_51 = arith.constant dense<0.000000e+00> : vector<8x256xf32>
    %48 = tpu.matmul %47, %46, %cst_51 {dimension_numbers = #tpu.dot_dimension_numbers<[1], [0], [0], [1], [0, 0, 1, 1], [], []>} : vector<8x24xbf16>, vector<24x256xbf16>, vector<8x256xf32> -> vector<8x256xf32>
    %c0_52 = arith.constant 0 : index
    %c0_53 = arith.constant 0 : index
    %49 = vector.load %arg7[%c0_52, %c0_53] : memref<8x1xf32, #tpu.memory_space<vmem>>, vector<8x1xf32>
    %50 = vector.broadcast %49 : vector<8x1xf32> to vector<8x256xf32>
    %51 = arith.addf %48, %50 : vector<8x256xf32>
    %cst_54 = arith.constant 0.000000e+00 : f32
    %52 = vector.broadcast %cst_54 : f32 to vector<8x256xf32>
    %53 = arith.maximumf %51, %52 : vector<8x256xf32>
    %c0_55 = arith.constant 0 : index
    %c0_56 = arith.constant 0 : index
    %54 = vector.load %arg28[%c0_55, %c0_56] : memref<192x258xf32, #tpu.memory_space<vmem>>, vector<8x256xf32>
    tpu.vector_store %arg28[%c0_55, %c0_56], %53 {strides = array<i32>} : memref<192x258xf32, #tpu.memory_space<vmem>>, vector<8x256xf32>,
    %c0_57 = arith.constant 0 : index
    %c0_58 = arith.constant 0 : index
    %55 = vector.load %arg28[%c0_57, %c0_58] : memref<192x258xf32, #tpu.memory_space<vmem>>, vector<8x253xf32>
    %c0_59 = arith.constant 0 : index
    %c1_60 = arith.constant 1 : index
    %56 = vector.load %arg28[%c0_59, %c1_60] : memref<192x258xf32, #tpu.memory_space<vmem>>, vector<8x253xf32>
    %57 = arith.maximumf %55, %56 : vector<8x253xf32>
    %c0_61 = arith.constant 0 : index
    %c2_62 = arith.constant 2 : index
    %58 = vector.load %arg28[%c0_61, %c2_62] : memref<192x258xf32, #tpu.memory_space<vmem>>, vector<8x253xf32>
    %59 = arith.maximumf %57, %58 : vector<8x253xf32>
    %c0_63 = arith.constant 0 : index
    %c3 = arith.constant 3 : index
    %60 = vector.load %arg28[%c0_63, %c3] : memref<192x258xf32, #tpu.memory_space<vmem>>, vector<8x253xf32>
    %61 = arith.maximumf %59, %60 : vector<8x253xf32>
    %62 = arith.truncf %61 : vector<8x253xf32> to vector<8x253xbf16>
    %c0_64 = arith.constant 0 : index
    %c0_65 = arith.constant 0 : index
    %63 = vector.load %arg24[%c0_64, %c0_65] : memref<253x64xbf16, #tpu.memory_space<vmem>>, vector<253x64xbf16>
    %cst_66 = arith.constant dense<0.000000e+00> : vector<8x64xf32>
    %64 = tpu.matmul %62, %63, %cst_66 {dimension_numbers = #tpu.dot_dimension_numbers<[1], [0], [0], [1], [0, 0, 1, 1], [], []>} : vector<8x253xbf16>, vector<253x64xbf16>, vector<8x64xf32> -> vector<8x64xf32>
    %c0_67 = arith.constant 0 : index
    %c2_68 = arith.constant 2 : index
    %65 = vector.load %arg28[%c0_67, %c2_68] : memref<192x258xf32, #tpu.memory_space<vmem>>, vector<8x64xf32>
    tpu.vector_store %arg28[%c0_67, %c2_68], %64 {strides = array<i32>} : memref<192x258xf32, #tpu.memory_space<vmem>>, vector<8x64xf32>,
    %c8_69 = arith.constant 8 : index
    %c1_70 = arith.constant 1 : index
    %66 = vector.load %arg28[%c8_69, %c1_70] : memref<192x258xf32, #tpu.memory_space<vmem>>, vector<8x64xf32>
    tpu.vector_store %arg28[%c8_69, %c1_70], %64 {strides = array<i32>} : memref<192x258xf32, #tpu.memory_space<vmem>>, vector<8x64xf32>,
    %c16_71 = arith.constant 16 : index
    %c0_72 = arith.constant 0 : index
    %67 = vector.load %arg28[%c16_71, %c0_72] : memref<192x258xf32, #tpu.memory_space<vmem>>, vector<8x64xf32>
    tpu.vector_store %arg28[%c16_71, %c0_72], %64 {strides = array<i32>} : memref<192x258xf32, #tpu.memory_space<vmem>>, vector<8x64xf32>,
    %cst_73 = arith.constant 0.000000e+00 : f32
    %68 = vector.broadcast %cst_73 : f32 to vector<8x1xf32>
    %c0_74 = arith.constant 0 : index
    %c1_75 = arith.constant 1 : index
    %69 = vector.load %arg28[%c0_74, %c1_75] : memref<192x258xf32, #tpu.memory_space<vmem>>, vector<8x1xf32>
    tpu.vector_store %arg28[%c0_74, %c1_75], %68 {strides = array<i32>} : memref<192x258xf32, #tpu.memory_space<vmem>>, vector<8x1xf32>,
    %c16_76 = arith.constant 16 : index
    %c64 = arith.constant 64 : index
    %70 = vector.load %arg28[%c16_76, %c64] : memref<192x258xf32, #tpu.memory_space<vmem>>, vector<8x1xf32>
    tpu.vector_store %arg28[%c16_76, %c64], %68 {strides = array<i32>} : memref<192x258xf32, #tpu.memory_space<vmem>>, vector<8x1xf32>,
    %c0_77 = arith.constant 0 : index
    %c1_78 = arith.constant 1 : index
    %71 = vector.load %arg28[%c0_77, %c1_78] : memref<192x258xf32, #tpu.memory_space<vmem>>, vector<24x64xf32>
    %72 = arith.truncf %71 : vector<24x64xf32> to vector<24x64xbf16>
    %c0_79 = arith.constant 0 : index
    %c0_80 = arith.constant 0 : index
    %73 = vector.load %arg8[%c0_79, %c0_80] : memref<16x24xbf16, #tpu.memory_space<vmem>>, vector<16x24xbf16>
    %cst_81 = arith.constant dense<0.000000e+00> : vector<16x64xf32>
    %74 = tpu.matmul %73, %72, %cst_81 {dimension_numbers = #tpu.dot_dimension_numbers<[1], [0], [0], [1], [0, 0, 1, 1], [], []>} : vector<16x24xbf16>, vector<24x64xbf16>, vector<16x64xf32> -> vector<16x64xf32>
    %c0_82 = arith.constant 0 : index
    %c0_83 = arith.constant 0 : index
    %75 = vector.load %arg9[%c0_82, %c0_83] : memref<16x1xf32, #tpu.memory_space<vmem>>, vector<16x1xf32>
    %76 = vector.broadcast %75 : vector<16x1xf32> to vector<16x64xf32>
    %77 = arith.addf %74, %76 : vector<16x64xf32>
    %cst_84 = arith.constant 0.000000e+00 : f32
    %78 = vector.broadcast %cst_84 : f32 to vector<16x64xf32>
    %79 = arith.maximumf %77, %78 : vector<16x64xf32>
    %c0_85 = arith.constant 0 : index
    %c2_86 = arith.constant 2 : index
    %80 = vector.load %arg28[%c0_85, %c2_86] : memref<192x258xf32, #tpu.memory_space<vmem>>, vector<16x64xf32>
    tpu.vector_store %arg28[%c0_85, %c2_86], %79 {strides = array<i32>} : memref<192x258xf32, #tpu.memory_space<vmem>>, vector<16x64xf32>,
    %c16_87 = arith.constant 16 : index
    %c1_88 = arith.constant 1 : index
    %81 = vector.load %arg28[%c16_87, %c1_88] : memref<192x258xf32, #tpu.memory_space<vmem>>, vector<16x64xf32>
    tpu.vector_store %arg28[%c16_87, %c1_88], %79 {strides = array<i32>} : memref<192x258xf32, #tpu.memory_space<vmem>>, vector<16x64xf32>,
    %c32 = arith.constant 32 : index
    %c0_89 = arith.constant 0 : index
    %82 = vector.load %arg28[%c32, %c0_89] : memref<192x258xf32, #tpu.memory_space<vmem>>, vector<16x64xf32>
    tpu.vector_store %arg28[%c32, %c0_89], %79 {strides = array<i32>} : memref<192x258xf32, #tpu.memory_space<vmem>>, vector<16x64xf32>,
    %cst_90 = arith.constant 0.000000e+00 : f32
    %83 = vector.broadcast %cst_90 : f32 to vector<16x1xf32>
    %c0_91 = arith.constant 0 : index
    %c1_92 = arith.constant 1 : index
    %84 = vector.load %arg28[%c0_91, %c1_92] : memref<192x258xf32, #tpu.memory_space<vmem>>, vector<16x1xf32>
    tpu.vector_store %arg28[%c0_91, %c1_92], %83 {strides = array<i32>} : memref<192x258xf32, #tpu.memory_space<vmem>>, vector<16x1xf32>,
    %c32_93 = arith.constant 32 : index
    %c64_94 = arith.constant 64 : index
    %85 = vector.load %arg28[%c32_93, %c64_94] : memref<192x258xf32, #tpu.memory_space<vmem>>, vector<16x1xf32>
    tpu.vector_store %arg28[%c32_93, %c64_94], %83 {strides = array<i32>} : memref<192x258xf32, #tpu.memory_space<vmem>>, vector<16x1xf32>,
    %c0_95 = arith.constant 0 : index
    %c1_96 = arith.constant 1 : index
    %86 = vector.load %arg28[%c0_95, %c1_96] : memref<192x258xf32, #tpu.memory_space<vmem>>, vector<48x64xf32>
    %87 = arith.truncf %86 : vector<48x64xf32> to vector<48x64xbf16>
    %c0_97 = arith.constant 0 : index
    %c0_98 = arith.constant 0 : index
    %88 = vector.load %arg10[%c0_97, %c0_98] : memref<16x48xbf16, #tpu.memory_space<vmem>>, vector<16x48xbf16>
    %cst_99 = arith.constant dense<0.000000e+00> : vector<16x64xf32>
    %89 = tpu.matmul %88, %87, %cst_99 {dimension_numbers = #tpu.dot_dimension_numbers<[1], [0], [0], [1], [0, 0, 1, 1], [], []>} : vector<16x48xbf16>, vector<48x64xbf16>, vector<16x64xf32> -> vector<16x64xf32>
    %c0_100 = arith.constant 0 : index
    %c0_101 = arith.constant 0 : index
    %90 = vector.load %arg11[%c0_100, %c0_101] : memref<16x1xf32, #tpu.memory_space<vmem>>, vector<16x1xf32>
    %91 = vector.broadcast %90 : vector<16x1xf32> to vector<16x64xf32>
    %92 = arith.addf %89, %91 : vector<16x64xf32>
    %cst_102 = arith.constant 0.000000e+00 : f32
    %93 = vector.broadcast %cst_102 : f32 to vector<16x64xf32>
    %94 = arith.maximumf %92, %93 : vector<16x64xf32>
    %c0_103 = arith.constant 0 : index
    %c0_104 = arith.constant 0 : index
    %95 = vector.load %arg28[%c0_103, %c0_104] : memref<192x258xf32, #tpu.memory_space<vmem>>, vector<16x64xf32>
    tpu.vector_store %arg28[%c0_103, %c0_104], %94 {strides = array<i32>} : memref<192x258xf32, #tpu.memory_space<vmem>>, vector<16x64xf32>,
    %c0_105 = arith.constant 0 : index
    %c0_106 = arith.constant 0 : index
    %96 = vector.load %arg28[%c0_105, %c0_106] : memref<192x258xf32, #tpu.memory_space<vmem>>, vector<16x61xf32>
    %c0_107 = arith.constant 0 : index
    %c1_108 = arith.constant 1 : index
    %97 = vector.load %arg28[%c0_107, %c1_108] : memref<192x258xf32, #tpu.memory_space<vmem>>, vector<16x61xf32>
    %98 = arith.maximumf %96, %97 : vector<16x61xf32>
    %c0_109 = arith.constant 0 : index
    %c2_110 = arith.constant 2 : index
    %99 = vector.load %arg28[%c0_109, %c2_110] : memref<192x258xf32, #tpu.memory_space<vmem>>, vector<16x61xf32>
    %100 = arith.maximumf %98, %99 : vector<16x61xf32>
    %c0_111 = arith.constant 0 : index
    %c3_112 = arith.constant 3 : index
    %101 = vector.load %arg28[%c0_111, %c3_112] : memref<192x258xf32, #tpu.memory_space<vmem>>, vector<16x61xf32>
    %102 = arith.maximumf %100, %101 : vector<16x61xf32>
    %103 = arith.truncf %102 : vector<16x61xf32> to vector<16x61xbf16>
    %c0_113 = arith.constant 0 : index
    %c0_114 = arith.constant 0 : index
    %104 = vector.load %arg25[%c0_113, %c0_114] : memref<61x16xbf16, #tpu.memory_space<vmem>>, vector<61x16xbf16>
    %cst_115 = arith.constant dense<0.000000e+00> : vector<16x16xf32>
    %105 = tpu.matmul %103, %104, %cst_115 {dimension_numbers = #tpu.dot_dimension_numbers<[1], [0], [0], [1], [0, 0, 1, 1], [], []>} : vector<16x61xbf16>, vector<61x16xbf16>, vector<16x16xf32> -> vector<16x16xf32>
    %c0_116 = arith.constant 0 : index
    %c2_117 = arith.constant 2 : index
    %106 = vector.load %arg28[%c0_116, %c2_117] : memref<192x258xf32, #tpu.memory_space<vmem>>, vector<16x16xf32>
    tpu.vector_store %arg28[%c0_116, %c2_117], %105 {strides = array<i32>} : memref<192x258xf32, #tpu.memory_space<vmem>>, vector<16x16xf32>,
    %c16_118 = arith.constant 16 : index
    %c1_119 = arith.constant 1 : index
    %107 = vector.load %arg28[%c16_118, %c1_119] : memref<192x258xf32, #tpu.memory_space<vmem>>, vector<16x16xf32>
    tpu.vector_store %arg28[%c16_118, %c1_119], %105 {strides = array<i32>} : memref<192x258xf32, #tpu.memory_space<vmem>>, vector<16x16xf32>,
    %c32_120 = arith.constant 32 : index
    %c0_121 = arith.constant 0 : index
    %108 = vector.load %arg28[%c32_120, %c0_121] : memref<192x258xf32, #tpu.memory_space<vmem>>, vector<16x16xf32>
    tpu.vector_store %arg28[%c32_120, %c0_121], %105 {strides = array<i32>} : memref<192x258xf32, #tpu.memory_space<vmem>>, vector<16x16xf32>,
    %cst_122 = arith.constant 0.000000e+00 : f32
    %109 = vector.broadcast %cst_122 : f32 to vector<16x1xf32>
    %c0_123 = arith.constant 0 : index
    %c1_124 = arith.constant 1 : index
    %110 = vector.load %arg28[%c0_123, %c1_124] : memref<192x258xf32, #tpu.memory_space<vmem>>, vector<16x1xf32>
    tpu.vector_store %arg28[%c0_123, %c1_124], %109 {strides = array<i32>} : memref<192x258xf32, #tpu.memory_space<vmem>>, vector<16x1xf32>,
    %c32_125 = arith.constant 32 : index
    %c16_126 = arith.constant 16 : index
    %111 = vector.load %arg28[%c32_125, %c16_126] : memref<192x258xf32, #tpu.memory_space<vmem>>, vector<16x1xf32>
    tpu.vector_store %arg28[%c32_125, %c16_126], %109 {strides = array<i32>} : memref<192x258xf32, #tpu.memory_space<vmem>>, vector<16x1xf32>,
    %c0_127 = arith.constant 0 : index
    %c1_128 = arith.constant 1 : index
    %112 = vector.load %arg28[%c0_127, %c1_128] : memref<192x258xf32, #tpu.memory_space<vmem>>, vector<48x16xf32>
    %113 = arith.truncf %112 : vector<48x16xf32> to vector<48x16xbf16>
    %c0_129 = arith.constant 0 : index
    %c0_130 = arith.constant 0 : index
    %114 = vector.load %arg12[%c0_129, %c0_130] : memref<32x48xbf16, #tpu.memory_space<vmem>>, vector<32x48xbf16>
    %cst_131 = arith.constant dense<0.000000e+00> : vector<32x16xf32>
    %115 = tpu.matmul %114, %113, %cst_131 {dimension_numbers = #tpu.dot_dimension_numbers<[1], [0], [0], [1], [0, 0, 1, 1], [], []>} : vector<32x48xbf16>, vector<48x16xbf16>, vector<32x16xf32> -> vector<32x16xf32>
    %c0_132 = arith.constant 0 : index
    %c0_133 = arith.constant 0 : index
    %116 = vector.load %arg13[%c0_132, %c0_133] : memref<32x1xf32, #tpu.memory_space<vmem>>, vector<32x1xf32>
    %117 = vector.broadcast %116 : vector<32x1xf32> to vector<32x16xf32>
    %118 = arith.addf %115, %117 : vector<32x16xf32>
    %cst_134 = arith.constant 0.000000e+00 : f32
    %119 = vector.broadcast %cst_134 : f32 to vector<32x16xf32>
    %120 = arith.maximumf %118, %119 : vector<32x16xf32>
    %c0_135 = arith.constant 0 : index
    %c2_136 = arith.constant 2 : index
    %121 = vector.load %arg28[%c0_135, %c2_136] : memref<192x258xf32, #tpu.memory_space<vmem>>, vector<32x16xf32>
    tpu.vector_store %arg28[%c0_135, %c2_136], %120 {strides = array<i32>} : memref<192x258xf32, #tpu.memory_space<vmem>>, vector<32x16xf32>,
    %c32_137 = arith.constant 32 : index
    %c1_138 = arith.constant 1 : index
    %122 = vector.load %arg28[%c32_137, %c1_138] : memref<192x258xf32, #tpu.memory_space<vmem>>, vector<32x16xf32>
    tpu.vector_store %arg28[%c32_137, %c1_138], %120 {strides = array<i32>} : memref<192x258xf32, #tpu.memory_space<vmem>>, vector<32x16xf32>,
    %c64_139 = arith.constant 64 : index
    %c0_140 = arith.constant 0 : index
    %123 = vector.load %arg28[%c64_139, %c0_140] : memref<192x258xf32, #tpu.memory_space<vmem>>, vector<32x16xf32>
    tpu.vector_store %arg28[%c64_139, %c0_140], %120 {strides = array<i32>} : memref<192x258xf32, #tpu.memory_space<vmem>>, vector<32x16xf32>,
    %cst_141 = arith.constant 0.000000e+00 : f32
    %124 = vector.broadcast %cst_141 : f32 to vector<32x1xf32>
    %c0_142 = arith.constant 0 : index
    %c1_143 = arith.constant 1 : index
    %125 = vector.load %arg28[%c0_142, %c1_143] : memref<192x258xf32, #tpu.memory_space<vmem>>, vector<32x1xf32>
    tpu.vector_store %arg28[%c0_142, %c1_143], %124 {strides = array<i32>} : memref<192x258xf32, #tpu.memory_space<vmem>>, vector<32x1xf32>,
    %c64_144 = arith.constant 64 : index
    %c16_145 = arith.constant 16 : index
    %126 = vector.load %arg28[%c64_144, %c16_145] : memref<192x258xf32, #tpu.memory_space<vmem>>, vector<32x1xf32>
    tpu.vector_store %arg28[%c64_144, %c16_145], %124 {strides = array<i32>} : memref<192x258xf32, #tpu.memory_space<vmem>>, vector<32x1xf32>,
    %c0_146 = arith.constant 0 : index
    %c1_147 = arith.constant 1 : index
    %127 = vector.load %arg28[%c0_146, %c1_147] : memref<192x258xf32, #tpu.memory_space<vmem>>, vector<96x16xf32>
    %128 = arith.truncf %127 : vector<96x16xf32> to vector<96x16xbf16>
    %c0_148 = arith.constant 0 : index
    %c0_149 = arith.constant 0 : index
    %129 = vector.load %arg14[%c0_148, %c0_149] : memref<32x96xbf16, #tpu.memory_space<vmem>>, vector<32x96xbf16>
    %cst_150 = arith.constant dense<0.000000e+00> : vector<32x16xf32>
    %130 = tpu.matmul %129, %128, %cst_150 {dimension_numbers = #tpu.dot_dimension_numbers<[1], [0], [0], [1], [0, 0, 1, 1], [], []>} : vector<32x96xbf16>, vector<96x16xbf16>, vector<32x16xf32> -> vector<32x16xf32>
    %c0_151 = arith.constant 0 : index
    %c0_152 = arith.constant 0 : index
    %131 = vector.load %arg15[%c0_151, %c0_152] : memref<32x1xf32, #tpu.memory_space<vmem>>, vector<32x1xf32>
    %132 = vector.broadcast %131 : vector<32x1xf32> to vector<32x16xf32>
    %133 = arith.addf %130, %132 : vector<32x16xf32>
    %cst_153 = arith.constant 0.000000e+00 : f32
    %134 = vector.broadcast %cst_153 : f32 to vector<32x16xf32>
    %135 = arith.maximumf %133, %134 : vector<32x16xf32>
    %c0_154 = arith.constant 0 : index
    %c2_155 = arith.constant 2 : index
    %136 = vector.load %arg28[%c0_154, %c2_155] : memref<192x258xf32, #tpu.memory_space<vmem>>, vector<32x16xf32>
    tpu.vector_store %arg28[%c0_154, %c2_155], %135 {strides = array<i32>} : memref<192x258xf32, #tpu.memory_space<vmem>>, vector<32x16xf32>,
    %c32_156 = arith.constant 32 : index
    %c1_157 = arith.constant 1 : index
    %137 = vector.load %arg28[%c32_156, %c1_157] : memref<192x258xf32, #tpu.memory_space<vmem>>, vector<32x16xf32>
    tpu.vector_store %arg28[%c32_156, %c1_157], %135 {strides = array<i32>} : memref<192x258xf32, #tpu.memory_space<vmem>>, vector<32x16xf32>,
    %c64_158 = arith.constant 64 : index
    %c0_159 = arith.constant 0 : index
    %138 = vector.load %arg28[%c64_158, %c0_159] : memref<192x258xf32, #tpu.memory_space<vmem>>, vector<32x16xf32>
    tpu.vector_store %arg28[%c64_158, %c0_159], %135 {strides = array<i32>} : memref<192x258xf32, #tpu.memory_space<vmem>>, vector<32x16xf32>,
    %cst_160 = arith.constant 0.000000e+00 : f32
    %139 = vector.broadcast %cst_160 : f32 to vector<32x1xf32>
    %c0_161 = arith.constant 0 : index
    %c1_162 = arith.constant 1 : index
    %140 = vector.load %arg28[%c0_161, %c1_162] : memref<192x258xf32, #tpu.memory_space<vmem>>, vector<32x1xf32>
    tpu.vector_store %arg28[%c0_161, %c1_162], %139 {strides = array<i32>} : memref<192x258xf32, #tpu.memory_space<vmem>>, vector<32x1xf32>,
    %c64_163 = arith.constant 64 : index
    %c16_164 = arith.constant 16 : index
    %141 = vector.load %arg28[%c64_163, %c16_164] : memref<192x258xf32, #tpu.memory_space<vmem>>, vector<32x1xf32>
    tpu.vector_store %arg28[%c64_163, %c16_164], %139 {strides = array<i32>} : memref<192x258xf32, #tpu.memory_space<vmem>>, vector<32x1xf32>,
    %c0_165 = arith.constant 0 : index
    %c1_166 = arith.constant 1 : index
    %142 = vector.load %arg28[%c0_165, %c1_166] : memref<192x258xf32, #tpu.memory_space<vmem>>, vector<96x16xf32>
    %143 = arith.truncf %142 : vector<96x16xf32> to vector<96x16xbf16>
    %c0_167 = arith.constant 0 : index
    %c0_168 = arith.constant 0 : index
    %144 = vector.load %arg16[%c0_167, %c0_168] : memref<32x96xbf16, #tpu.memory_space<vmem>>, vector<32x96xbf16>
    %cst_169 = arith.constant dense<0.000000e+00> : vector<32x16xf32>
    %145 = tpu.matmul %144, %143, %cst_169 {dimension_numbers = #tpu.dot_dimension_numbers<[1], [0], [0], [1], [0, 0, 1, 1], [], []>} : vector<32x96xbf16>, vector<96x16xbf16>, vector<32x16xf32> -> vector<32x16xf32>
    %c0_170 = arith.constant 0 : index
    %c0_171 = arith.constant 0 : index
    %146 = vector.load %arg17[%c0_170, %c0_171] : memref<32x1xf32, #tpu.memory_space<vmem>>, vector<32x1xf32>
    %147 = vector.broadcast %146 : vector<32x1xf32> to vector<32x16xf32>
    %148 = arith.addf %145, %147 : vector<32x16xf32>
    %cst_172 = arith.constant 0.000000e+00 : f32
    %149 = vector.broadcast %cst_172 : f32 to vector<32x16xf32>
    %150 = arith.maximumf %148, %149 : vector<32x16xf32>
    %c0_173 = arith.constant 0 : index
    %c0_174 = arith.constant 0 : index
    %151 = vector.load %arg28[%c0_173, %c0_174] : memref<192x258xf32, #tpu.memory_space<vmem>>, vector<32x16xf32>
    tpu.vector_store %arg28[%c0_173, %c0_174], %150 {strides = array<i32>} : memref<192x258xf32, #tpu.memory_space<vmem>>, vector<32x16xf32>,
    %c0_175 = arith.constant 0 : index
    %c0_176 = arith.constant 0 : index
    %152 = vector.load %arg28[%c0_175, %c0_176] : memref<192x258xf32, #tpu.memory_space<vmem>>, vector<32x13xf32>
    %c0_177 = arith.constant 0 : index
    %c1_178 = arith.constant 1 : index
    %153 = vector.load %arg28[%c0_177, %c1_178] : memref<192x258xf32, #tpu.memory_space<vmem>>, vector<32x13xf32>
    %154 = arith.maximumf %152, %153 : vector<32x13xf32>
    %c0_179 = arith.constant 0 : index
    %c2_180 = arith.constant 2 : index
    %155 = vector.load %arg28[%c0_179, %c2_180] : memref<192x258xf32, #tpu.memory_space<vmem>>, vector<32x13xf32>
    %156 = arith.maximumf %154, %155 : vector<32x13xf32>
    %c0_181 = arith.constant 0 : index
    %c3_182 = arith.constant 3 : index
    %157 = vector.load %arg28[%c0_181, %c3_182] : memref<192x258xf32, #tpu.memory_space<vmem>>, vector<32x13xf32>
    %158 = arith.maximumf %156, %157 : vector<32x13xf32>
    %159 = arith.truncf %158 : vector<32x13xf32> to vector<32x13xbf16>
    %c0_183 = arith.constant 0 : index
    %c0_184 = arith.constant 0 : index
    %160 = vector.load %arg26[%c0_183, %c0_184] : memref<13x4xbf16, #tpu.memory_space<vmem>>, vector<13x4xbf16>
    %cst_185 = arith.constant dense<0.000000e+00> : vector<32x4xf32>
    %161 = tpu.matmul %159, %160, %cst_185 {dimension_numbers = #tpu.dot_dimension_numbers<[1], [0], [0], [1], [0, 0, 1, 1], [], []>} : vector<32x13xbf16>, vector<13x4xbf16>, vector<32x4xf32> -> vector<32x4xf32>
    %c0_186 = arith.constant 0 : index
    %c2_187 = arith.constant 2 : index
    %162 = vector.load %arg28[%c0_186, %c2_187] : memref<192x258xf32, #tpu.memory_space<vmem>>, vector<32x4xf32>
    tpu.vector_store %arg28[%c0_186, %c2_187], %161 {strides = array<i32>} : memref<192x258xf32, #tpu.memory_space<vmem>>, vector<32x4xf32>,
    %c32_188 = arith.constant 32 : index
    %c1_189 = arith.constant 1 : index
    %163 = vector.load %arg28[%c32_188, %c1_189] : memref<192x258xf32, #tpu.memory_space<vmem>>, vector<32x4xf32>
    tpu.vector_store %arg28[%c32_188, %c1_189], %161 {strides = array<i32>} : memref<192x258xf32, #tpu.memory_space<vmem>>, vector<32x4xf32>,
    %c64_190 = arith.constant 64 : index
    %c0_191 = arith.constant 0 : index
    %164 = vector.load %arg28[%c64_190, %c0_191] : memref<192x258xf32, #tpu.memory_space<vmem>>, vector<32x4xf32>
    tpu.vector_store %arg28[%c64_190, %c0_191], %161 {strides = array<i32>} : memref<192x258xf32, #tpu.memory_space<vmem>>, vector<32x4xf32>,
    %cst_192 = arith.constant 0.000000e+00 : f32
    %165 = vector.broadcast %cst_192 : f32 to vector<32x1xf32>
    %c0_193 = arith.constant 0 : index
    %c1_194 = arith.constant 1 : index
    %166 = vector.load %arg28[%c0_193, %c1_194] : memref<192x258xf32, #tpu.memory_space<vmem>>, vector<32x1xf32>
    tpu.vector_store %arg28[%c0_193, %c1_194], %165 {strides = array<i32>} : memref<192x258xf32, #tpu.memory_space<vmem>>, vector<32x1xf32>,
    %c64_195 = arith.constant 64 : index
    %c4 = arith.constant 4 : index
    %167 = vector.load %arg28[%c64_195, %c4] : memref<192x258xf32, #tpu.memory_space<vmem>>, vector<32x1xf32>
    tpu.vector_store %arg28[%c64_195, %c4], %165 {strides = array<i32>} : memref<192x258xf32, #tpu.memory_space<vmem>>, vector<32x1xf32>,
    %c0_196 = arith.constant 0 : index
    %c1_197 = arith.constant 1 : index
    %168 = vector.load %arg28[%c0_196, %c1_197] : memref<192x258xf32, #tpu.memory_space<vmem>>, vector<96x4xf32>
    %169 = arith.truncf %168 : vector<96x4xf32> to vector<96x4xbf16>
    %c0_198 = arith.constant 0 : index
    %c0_199 = arith.constant 0 : index
    %170 = vector.load %arg18[%c0_198, %c0_199] : memref<64x96xbf16, #tpu.memory_space<vmem>>, vector<64x96xbf16>
    %cst_200 = arith.constant dense<0.000000e+00> : vector<64x4xf32>
    %171 = tpu.matmul %170, %169, %cst_200 {dimension_numbers = #tpu.dot_dimension_numbers<[1], [0], [0], [1], [0, 0, 1, 1], [], []>} : vector<64x96xbf16>, vector<96x4xbf16>, vector<64x4xf32> -> vector<64x4xf32>
    %c0_201 = arith.constant 0 : index
    %c0_202 = arith.constant 0 : index
    %172 = vector.load %arg19[%c0_201, %c0_202] : memref<64x1xf32, #tpu.memory_space<vmem>>, vector<64x1xf32>
    %173 = vector.broadcast %172 : vector<64x1xf32> to vector<64x4xf32>
    %174 = arith.addf %171, %173 : vector<64x4xf32>
    %cst_203 = arith.constant 0.000000e+00 : f32
    %175 = vector.broadcast %cst_203 : f32 to vector<64x4xf32>
    %176 = arith.maximumf %174, %175 : vector<64x4xf32>
    %c0_204 = arith.constant 0 : index
    %c2_205 = arith.constant 2 : index
    %177 = vector.load %arg28[%c0_204, %c2_205] : memref<192x258xf32, #tpu.memory_space<vmem>>, vector<64x4xf32>
    tpu.vector_store %arg28[%c0_204, %c2_205], %176 {strides = array<i32>} : memref<192x258xf32, #tpu.memory_space<vmem>>, vector<64x4xf32>,
    %c64_206 = arith.constant 64 : index
    %c1_207 = arith.constant 1 : index
    %178 = vector.load %arg28[%c64_206, %c1_207] : memref<192x258xf32, #tpu.memory_space<vmem>>, vector<64x4xf32>
    tpu.vector_store %arg28[%c64_206, %c1_207], %176 {strides = array<i32>} : memref<192x258xf32, #tpu.memory_space<vmem>>, vector<64x4xf32>,
    %c128 = arith.constant 128 : index
    %c0_208 = arith.constant 0 : index
    %179 = vector.load %arg28[%c128, %c0_208] : memref<192x258xf32, #tpu.memory_space<vmem>>, vector<64x4xf32>
    tpu.vector_store %arg28[%c128, %c0_208], %176 {strides = array<i32>} : memref<192x258xf32, #tpu.memory_space<vmem>>, vector<64x4xf32>,
    %cst_209 = arith.constant 0.000000e+00 : f32
    %180 = vector.broadcast %cst_209 : f32 to vector<64x1xf32>
    %c0_210 = arith.constant 0 : index
    %c1_211 = arith.constant 1 : index
    %181 = vector.load %arg28[%c0_210, %c1_211] : memref<192x258xf32, #tpu.memory_space<vmem>>, vector<64x1xf32>
    tpu.vector_store %arg28[%c0_210, %c1_211], %180 {strides = array<i32>} : memref<192x258xf32, #tpu.memory_space<vmem>>, vector<64x1xf32>,
    %c128_212 = arith.constant 128 : index
    %c4_213 = arith.constant 4 : index
    %182 = vector.load %arg28[%c128_212, %c4_213] : memref<192x258xf32, #tpu.memory_space<vmem>>, vector<64x1xf32>
    tpu.vector_store %arg28[%c128_212, %c4_213], %180 {strides = array<i32>} : memref<192x258xf32, #tpu.memory_space<vmem>>, vector<64x1xf32>,
    %c0_214 = arith.constant 0 : index
    %c1_215 = arith.constant 1 : index
    %183 = vector.load %arg28[%c0_214, %c1_215] : memref<192x258xf32, #tpu.memory_space<vmem>>, vector<192x4xf32>
    %184 = arith.truncf %183 : vector<192x4xf32> to vector<192x4xbf16>
    %c0_216 = arith.constant 0 : index
    %c0_217 = arith.constant 0 : index
    %185 = vector.load %arg20[%c0_216, %c0_217] : memref<64x192xbf16, #tpu.memory_space<vmem>>, vector<64x192xbf16>
    %cst_218 = arith.constant dense<0.000000e+00> : vector<64x4xf32>
    %186 = tpu.matmul %185, %184, %cst_218 {dimension_numbers = #tpu.dot_dimension_numbers<[1], [0], [0], [1], [0, 0, 1, 1], [], []>} : vector<64x192xbf16>, vector<192x4xbf16>, vector<64x4xf32> -> vector<64x4xf32>
    %c0_219 = arith.constant 0 : index
    %c0_220 = arith.constant 0 : index
    %187 = vector.load %arg21[%c0_219, %c0_220] : memref<64x1xf32, #tpu.memory_space<vmem>>, vector<64x1xf32>
    %188 = vector.broadcast %187 : vector<64x1xf32> to vector<64x4xf32>
    %189 = arith.addf %186, %188 : vector<64x4xf32>
    %cst_221 = arith.constant 0.000000e+00 : f32
    %190 = vector.broadcast %cst_221 : f32 to vector<64x4xf32>
    %191 = arith.maximumf %189, %190 : vector<64x4xf32>
    %c0_222 = arith.constant 0 : index
    %c0_223 = arith.constant 0 : index
    %192 = vector.load %arg28[%c0_222, %c0_223] : memref<192x258xf32, #tpu.memory_space<vmem>>, vector<64x4xf32>
    tpu.vector_store %arg28[%c0_222, %c0_223], %191 {strides = array<i32>} : memref<192x258xf32, #tpu.memory_space<vmem>>, vector<64x4xf32>,
    %c0_224 = arith.constant 0 : index
    %c0_225 = arith.constant 0 : index
    %193 = vector.load %arg28[%c0_224, %c0_225] : memref<192x258xf32, #tpu.memory_space<vmem>>, vector<64x1xf32>
    %c0_226 = arith.constant 0 : index
    %c1_227 = arith.constant 1 : index
    %194 = vector.load %arg28[%c0_226, %c1_227] : memref<192x258xf32, #tpu.memory_space<vmem>>, vector<64x1xf32>
    %195 = arith.maximumf %193, %194 : vector<64x1xf32>
    %c0_228 = arith.constant 0 : index
    %c2_229 = arith.constant 2 : index
    %196 = vector.load %arg28[%c0_228, %c2_229] : memref<192x258xf32, #tpu.memory_space<vmem>>, vector<64x1xf32>
    %197 = arith.maximumf %195, %196 : vector<64x1xf32>
    %c0_230 = arith.constant 0 : index
    %c3_231 = arith.constant 3 : index
    %198 = vector.load %arg28[%c0_230, %c3_231] : memref<192x258xf32, #tpu.memory_space<vmem>>, vector<64x1xf32>
    %199 = arith.maximumf %197, %198 : vector<64x1xf32>
    %c0_232 = arith.constant 0 : index
    %c0_233 = arith.constant 0 : index
    %200 = vector.load %arg22[%c0_232, %c0_233] : memref<35x64xf32, #tpu.memory_space<vmem>>, vector<35x64xf32>
    %cst_234 = arith.constant dense<0.000000e+00> : vector<35x1xf32>
    %201 = tpu.matmul %200, %199, %cst_234 {dimension_numbers = #tpu.dot_dimension_numbers<[1], [0], [0], [1], [0, 0, 1, 1], [], []>} : vector<35x64xf32>, vector<64x1xf32>, vector<35x1xf32> -> vector<35x1xf32>
    %cst_235 = arith.constant dense<0.000000e+00> : vector<35xf32>
    %202 = vector.multi_reduction <add>, %201, %cst_235 [1] : vector<35x1xf32> to vector<35xf32>
    %203 = vector.shape_cast %202 : vector<35xf32> to vector<35x1xf32>
    %cst_236 = arith.constant 1.000000e+00 : f32
    %204 = vector.broadcast %cst_236 : f32 to vector<35x1xf32>
    %205 = arith.mulf %203, %204 : vector<35x1xf32>
    %c0_237 = arith.constant 0 : index
    %c0_238 = arith.constant 0 : index
    %206 = vector.load %arg23[%c0_237, %c0_238] : memref<35x1xf32, #tpu.memory_space<vmem>>, vector<35x1xf32>
    %207 = arith.addf %205, %206 : vector<35x1xf32>
    %cst_239 = arith.constant dense<0xFF800000> : vector<1xf32>
    %208 = vector.multi_reduction <maximumf>, %207, %cst_239 [0] : vector<35x1xf32> to vector<1xf32>
    %209 = vector.shape_cast %208 : vector<1xf32> to vector<1x1xf32>
    %210 = vector.broadcast %209 : vector<1x1xf32> to vector<35x1xf32>
    %211 = arith.subf %207, %210 : vector<35x1xf32>
    %212 = math.exp %211 : vector<35x1xf32>
    %cst_240 = arith.constant dense<0.000000e+00> : vector<1xf32>
    %213 = vector.multi_reduction <add>, %212, %cst_240 [0] : vector<35x1xf32> to vector<1xf32>
    %214 = vector.shape_cast %213 : vector<1xf32> to vector<1x1xf32>
    %215 = math.log %214 : vector<1x1xf32>
    %216 = vector.broadcast %215 : vector<1x1xf32> to vector<35x1xf32>
    %217 = arith.subf %211, %216 : vector<35x1xf32>
    %c0_241 = arith.constant 0 : index
    %c0_242 = arith.constant 0 : index
    %c0_243 = arith.constant 0 : index
    %218 = vector.load %arg27[%c0_241, %c0_242, %c0_243] : memref<1x35x1xf32, #tpu.memory_space<vmem>>, vector<1x35x1xf32>
    %219 = vector.shape_cast %218 : vector<1x35x1xf32> to vector<35x1xf32>
    %220 = vector.shape_cast %217 : vector<35x1xf32> to vector<1x35x1xf32>
    tpu.vector_store %arg27[%c0_241, %c0_242, %c0_243], %220 {strides = array<i32>} : memref<1x35x1xf32, #tpu.memory_space<vmem>>, vector<1x35x1xf32>,
    return
  }
  func.func @transform_0(%arg0: i32) -> (i32, i32, i32) {
    %c0_i32 = arith.constant 0 : i32
    %c0_i32_0 = arith.constant 0 : i32
    %c0_i32_1 = arith.constant 0 : i32
    return %arg0, %c0_i32, %c0_i32_0 : i32, i32, i32
  }
  func.func @transform_1(%arg0: i32) -> (i32, i32) {
    %c0_i32 = arith.constant 0 : i32
    %c0_i32_0 = arith.constant 0 : i32
    %c0_i32_1 = arith.constant 0 : i32
    return %c0_i32, %c0_i32_0 : i32, i32
  }
  func.func @transform_2(%arg0: i32) -> (i32, i32) {
    %c0_i32 = arith.constant 0 : i32
    %c0_i32_0 = arith.constant 0 : i32
    %c0_i32_1 = arith.constant 0 : i32
    return %c0_i32, %c0_i32_0 : i32, i32
  }
  func.func @transform_3(%arg0: i32) -> (i32, i32) {
    %c0_i32 = arith.constant 0 : i32
    %c0_i32_0 = arith.constant 0 : i32
    %c0_i32_1 = arith.constant 0 : i32
    return %c0_i32, %c0_i32_0 : i32, i32
  }
  func.func @transform_4(%arg0: i32) -> (i32, i32) {
    %c0_i32 = arith.constant 0 : i32
    %c0_i32_0 = arith.constant 0 : i32
    %c0_i32_1 = arith.constant 0 : i32
    return %c0_i32, %c0_i32_0 : i32, i32
  }
  func.func @transform_5(%arg0: i32) -> (i32, i32) {
    %c0_i32 = arith.constant 0 : i32
    %c0_i32_0 = arith.constant 0 : i32
    %c0_i32_1 = arith.constant 0 : i32
    return %c0_i32, %c0_i32_0 : i32, i32
  }
  func.func @transform_6(%arg0: i32) -> (i32, i32) {
    %c0_i32 = arith.constant 0 : i32
    %c0_i32_0 = arith.constant 0 : i32
    %c0_i32_1 = arith.constant 0 : i32
    return %c0_i32, %c0_i32_0 : i32, i32
  }
  func.func @transform_7(%arg0: i32) -> (i32, i32) {
    %c0_i32 = arith.constant 0 : i32
    %c0_i32_0 = arith.constant 0 : i32
    %c0_i32_1 = arith.constant 0 : i32
    return %c0_i32, %c0_i32_0 : i32, i32
  }
  func.func @transform_8(%arg0: i32) -> (i32, i32) {
    %c0_i32 = arith.constant 0 : i32
    %c0_i32_0 = arith.constant 0 : i32
    %c0_i32_1 = arith.constant 0 : i32
    return %c0_i32, %c0_i32_0 : i32, i32
  }
  func.func @transform_9(%arg0: i32) -> (i32, i32) {
    %c0_i32 = arith.constant 0 : i32
    %c0_i32_0 = arith.constant 0 : i32
    %c0_i32_1 = arith.constant 0 : i32
    return %c0_i32, %c0_i32_0 : i32, i32
  }
  func.func @transform_10(%arg0: i32) -> (i32, i32) {
    %c0_i32 = arith.constant 0 : i32
    %c0_i32_0 = arith.constant 0 : i32
    %c0_i32_1 = arith.constant 0 : i32
    return %c0_i32, %c0_i32_0 : i32, i32
  }
  func.func @transform_11(%arg0: i32) -> (i32, i32) {
    %c0_i32 = arith.constant 0 : i32
    %c0_i32_0 = arith.constant 0 : i32
    %c0_i32_1 = arith.constant 0 : i32
    return %c0_i32, %c0_i32_0 : i32, i32
  }
  func.func @transform_12(%arg0: i32) -> (i32, i32) {
    %c0_i32 = arith.constant 0 : i32
    %c0_i32_0 = arith.constant 0 : i32
    %c0_i32_1 = arith.constant 0 : i32
    return %c0_i32, %c0_i32_0 : i32, i32
  }
  func.func @transform_13(%arg0: i32) -> (i32, i32) {
    %c0_i32 = arith.constant 0 : i32
    %c0_i32_0 = arith.constant 0 : i32
    %c0_i32_1 = arith.constant 0 : i32
    return %c0_i32, %c0_i32_0 : i32, i32
  }
  func.func @transform_14(%arg0: i32) -> (i32, i32) {
    %c0_i32 = arith.constant 0 : i32
    %c0_i32_0 = arith.constant 0 : i32
    %c0_i32_1 = arith.constant 0 : i32
    return %c0_i32, %c0_i32_0 : i32, i32
  }
  func.func @transform_15(%arg0: i32) -> (i32, i32) {
    %c0_i32 = arith.constant 0 : i32
    %c0_i32_0 = arith.constant 0 : i32
    %c0_i32_1 = arith.constant 0 : i32
    return %c0_i32, %c0_i32_0 : i32, i32
  }
  func.func @transform_16(%arg0: i32) -> (i32, i32) {
    %c0_i32 = arith.constant 0 : i32
    %c0_i32_0 = arith.constant 0 : i32
    %c0_i32_1 = arith.constant 0 : i32
    return %c0_i32, %c0_i32_0 : i32, i32
  }
  func.func @transform_17(%arg0: i32) -> (i32, i32) {
    %c0_i32 = arith.constant 0 : i32
    %c0_i32_0 = arith.constant 0 : i32
    %c0_i32_1 = arith.constant 0 : i32
    return %c0_i32, %c0_i32_0 : i32, i32
  }
  func.func @transform_18(%arg0: i32) -> (i32, i32) {
    %c0_i32 = arith.constant 0 : i32
    %c0_i32_0 = arith.constant 0 : i32
    %c0_i32_1 = arith.constant 0 : i32
    return %c0_i32, %c0_i32_0 : i32, i32
  }
  func.func @transform_19(%arg0: i32) -> (i32, i32) {
    %c0_i32 = arith.constant 0 : i32
    %c0_i32_0 = arith.constant 0 : i32
    %c0_i32_1 = arith.constant 0 : i32
    return %c0_i32, %c0_i32_0 : i32, i32
  }
  func.func @transform_20(%arg0: i32) -> (i32, i32) {
    %c0_i32 = arith.constant 0 : i32
    %c0_i32_0 = arith.constant 0 : i32
    %c0_i32_1 = arith.constant 0 : i32
    return %c0_i32, %c0_i32_0 : i32, i32
  }
  func.func @transform_21(%arg0: i32) -> (i32, i32) {
    %c0_i32 = arith.constant 0 : i32
    %c0_i32_0 = arith.constant 0 : i32
    %c0_i32_1 = arith.constant 0 : i32
    return %c0_i32, %c0_i32_0 : i32, i32
  }
  func.func @transform_22(%arg0: i32) -> (i32, i32) {
    %c0_i32 = arith.constant 0 : i32
    %c0_i32_0 = arith.constant 0 : i32
    %c0_i32_1 = arith.constant 0 : i32
    return %c0_i32, %c0_i32_0 : i32, i32
  }
  func.func @transform_23(%arg0: i32) -> (i32, i32) {
    %c0_i32 = arith.constant 0 : i32
    %c0_i32_0 = arith.constant 0 : i32
    %c0_i32_1 = arith.constant 0 : i32
    return %c0_i32, %c0_i32_0 : i32, i32
  }
  func.func @transform_24(%arg0: i32) -> (i32, i32) {
    %c0_i32 = arith.constant 0 : i32
    %c0_i32_0 = arith.constant 0 : i32
    %c0_i32_1 = arith.constant 0 : i32
    return %c0_i32, %c0_i32_0 : i32, i32
  }
  func.func @transform_25(%arg0: i32) -> (i32, i32) {
    %c0_i32 = arith.constant 0 : i32
    %c0_i32_0 = arith.constant 0 : i32
    %c0_i32_1 = arith.constant 0 : i32
    return %c0_i32, %c0_i32_0 : i32, i32
  }
  func.func @transform_26(%arg0: i32) -> (i32, i32, i32) {
    %c0_i32 = arith.constant 0 : i32
    %c0_i32_0 = arith.constant 0 : i32
    %c0_i32_1 = arith.constant 0 : i32
    return %arg0, %c0_i32, %c0_i32_0 : i32, i32, i32
  }
}

</mosaic_0001>

<llo_original>
// kernel: tpu_custom_call.1
$region0: #{tpu_custom_call.1}
  #allocation0 [shape = 'u32[]', space=smem, size = 0x4, offset = 0x4, fixed_abs, tag = 'smem constant byte address 0x4 - core index']
  #allocation1 [shape = 'u32[144,128]{1,0:T(1,128)}', space=vmem, size = 0x12000, scoped, tag = 'internal scratch']
  #allocation2 [shape = 'f32[192,258]{1,0:T(8,128)}', space=vmem, size = 0x48000, scoped, tag = 'scratch operand']
  %s0 = inlined_call_operand.hbm [shape: bf16[2,320,256], index: 0, kind: input, shape index: {}]
  %s1 = inlined_call_operand.vmem [shape: bf16[8,80], index: 1, kind: input, shape index: {}]
  %s2 = inlined_call_operand.vmem [shape: f32[8,1], index: 2, kind: input, shape index: {}]
  %s3 = inlined_call_operand.vmem [shape: bf16[8,24], index: 3, kind: input, shape index: {}]
  %s4 = inlined_call_operand.vmem [shape: f32[8,1], index: 4, kind: input, shape index: {}]
  %s5 = inlined_call_operand.vmem [shape: bf16[8,24], index: 5, kind: input, shape index: {}]
  %s6 = inlined_call_operand.vmem [shape: f32[8,1], index: 6, kind: input, shape index: {}]
  %s7 = inlined_call_operand.vmem [shape: bf16[16,24], index: 7, kind: input, shape index: {}]
  %s8 = inlined_call_operand.vmem [shape: f32[16,1], index: 8, kind: input, shape index: {}]
  %s9 = inlined_call_operand.vmem [shape: bf16[16,48], index: 9, kind: input, shape index: {}]
  %s10 = inlined_call_operand.vmem [shape: f32[16,1], index: 10, kind: input, shape index: {}]
  %s11 = inlined_call_operand.vmem [shape: bf16[32,48], index: 11, kind: input, shape index: {}]
  %s12 = inlined_call_operand.vmem [shape: f32[32,1], index: 12, kind: input, shape index: {}]
  %s13 = inlined_call_operand.vmem [shape: bf16[32,96], index: 13, kind: input, shape index: {}]
  %s14 = inlined_call_operand.vmem [shape: f32[32,1], index: 14, kind: input, shape index: {}]
  %s15 = inlined_call_operand.vmem [shape: bf16[32,96], index: 15, kind: input, shape index: {}]
  %s16 = inlined_call_operand.vmem [shape: f32[32,1], index: 16, kind: input, shape index: {}]
  %s17 = inlined_call_operand.vmem [shape: bf16[64,96], index: 17, kind: input, shape index: {}]
  %s18 = inlined_call_operand.vmem [shape: f32[64,1], index: 18, kind: input, shape index: {}]
  %s19 = inlined_call_operand.vmem [shape: bf16[64,192], index: 19, kind: input, shape index: {}]
  %s20 = inlined_call_operand.vmem [shape: f32[64,1], index: 20, kind: input, shape index: {}]
  %s21 = inlined_call_operand.vmem [shape: f32[35,64], index: 21, kind: input, shape index: {}]
  %s22 = inlined_call_operand.vmem [shape: f32[35,1], index: 22, kind: input, shape index: {}]
  %s23 = inlined_call_operand.vmem [shape: bf16[253,64], index: 23, kind: input, shape index: {}]
  %s24 = inlined_call_operand.vmem [shape: bf16[61,16], index: 24, kind: input, shape index: {}]
  %s25 = inlined_call_operand.vmem [shape: bf16[13,4], index: 25, kind: input, shape index: {}]
  %s26 = inlined_call_operand.vmem [shape: f32[2,35,1], index: 26, kind: output, shape index: {}]
  %s27 = sld [smem:[#allocation0]]
  $region141: #{tpu_custom_call.1} parent=0
    _
  %s29 = ssub.s32 1, %s27
  %s30 = scalar_select 0, %s29, %s27
  $region1: #{tpu_custom_call.1} parent=0
    #allocation3 [shape = 'u8[327680]{0}', space=vmem, size = 0x50000, scoped, tag = 'input window, operand 0']
    #allocation4 [shape = 's32[2]{0}', space=sflag, size = 0x8, scoped, tag = 'scoped memory for tpu_custom_call.1']
    %31 = vsyncpa [#allocation4], 0
    %s32 = scalar_lea.sflag [#allocation4], 1
    %33 = vsyncpa %s32, 0
    loop: start=0, step=1, limit=4
    $region2: #{tpu_custom_call.1} parent=1 // loop_pre_header
      _
    $region3: #{tpu_custom_call.1} parent=1 // loop_header
      %s35 = sphi 0, %s39
      %p36 = scmp.ge.s32.totalorder %s35, 4
      %s45 = sphi 0, %s47
      %s48 = sphi 0, %s45
      %s49 = sphi 0, %s48
      %s65 = sphi 0, %s49
      %s69 = sphi 0, %s69
      %s71 = sphi 0, %s69
      %s72 = sphi 0, %s71
      %s86 = sphi 0, %s72
      %s90 = sphi 0, %s90
      %s92 = sphi 0, %s90
      %s93 = sphi 0, %s92
      %s107 = sphi 0, %s93
      %s111 = sphi 0, %s111
      %s113 = sphi 0, %s111
      %s114 = sphi 0, %s113
      %s128 = sphi 0, %s114
      %s132 = sphi 0, %s132
      %s134 = sphi 0, %s132
      %s135 = sphi 0, %s134
      %s149 = sphi 0, %s135
      %s153 = sphi 0, %s153
      %s155 = sphi 0, %s153
      %s156 = sphi 0, %s155
      %s170 = sphi 0, %s156
      %s174 = sphi 0, %s174
      %s176 = sphi 0, %s174
      %s177 = sphi 0, %s176
      %s191 = sphi 0, %s177
      %s195 = sphi 0, %s195
      %s197 = sphi 0, %s195
      %s198 = sphi 0, %s197
      %s212 = sphi 0, %s198
      %s216 = sphi 0, %s216
      %s218 = sphi 0, %s216
      %s219 = sphi 0, %s218
      %s233 = sphi 0, %s219
      %s237 = sphi 0, %s237
      %s239 = sphi 0, %s237
      %s240 = sphi 0, %s239
      %s254 = sphi 0, %s240
      %s258 = sphi 0, %s258
      %s260 = sphi 0, %s258
      %s261 = sphi 0, %s260
      %s275 = sphi 0, %s261
      %s279 = sphi 0, %s279
      %s281 = sphi 0, %s279
      %s282 = sphi 0, %s281
      %s296 = sphi 0, %s282
      %s300 = sphi 0, %s300
      %s302 = sphi 0, %s300
      %s303 = sphi 0, %s302
      %s317 = sphi 0, %s303
      %s321 = sphi 0, %s321
      %s323 = sphi 0, %s321
      %s324 = sphi 0, %s323
      %s338 = sphi 0, %s324
      %s342 = sphi 0, %s342
      %s344 = sphi 0, %s342
      %s345 = sphi 0, %s344
      %s359 = sphi 0, %s345
      %s363 = sphi 0, %s363
      %s365 = sphi 0, %s363
      %s366 = sphi 0, %s365
      %s380 = sphi 0, %s366
      %s384 = sphi 0, %s384
      %s386 = sphi 0, %s384
      %s387 = sphi 0, %s386
      %s401 = sphi 0, %s387
      %s405 = sphi 0, %s405
      %s407 = sphi 0, %s405
      %s408 = sphi 0, %s407
      %s422 = sphi 0, %s408
      %s426 = sphi 0, %s426
      %s428 = sphi 0, %s426
      %s429 = sphi 0, %s428
      %s443 = sphi 0, %s429
      %s447 = sphi 0, %s447
      %s449 = sphi 0, %s447
      %s450 = sphi 0, %s449
      %s464 = sphi 0, %s450
      %s468 = sphi 0, %s468
      %s470 = sphi 0, %s468
      %s471 = sphi 0, %s470
      %s485 = sphi 0, %s471
      %s489 = sphi 0, %s489
      %s491 = sphi 0, %s489
      %s492 = sphi 0, %s491
      %s506 = sphi 0, %s492
      %s510 = sphi 0, %s510
      %s512 = sphi 0, %s510
      %s513 = sphi 0, %s512
      %s527 = sphi 0, %s513
      %s531 = sphi 0, %s531
      %s533 = sphi 0, %s531
      %s534 = sphi 0, %s533
      %s548 = sphi 0, %s534
      %s552 = sphi 0, %s552
      %s554 = sphi 0, %s552
      %s555 = sphi 0, %s554
      %s569 = sphi 0, %s555
      %s573 = sphi 0, %s573
      %s575 = sphi 0, %s573
      %s576 = sphi 0, %s575
      %s590 = sphi 0, %s576
      %s596 = sphi 0, %s598
      %s599 = sphi 0, %s596
      %s600 = sphi 0, %s599
      %s616 = sphi 0, %s600
    $region4: #{tpu_custom_call.1} parent=1 // loop_header_branch
      %38 = sbr.rel (%p36) target = $region8
    $region5: #{tpu_custom_call.1} parent=1 // loop_body
      %s40 = ssub.s32 %s35, 1
      %s41 = ssub.s32 %s35, 2
      %s42 = sadd.s32 %s35, 1
      %s43 = ssub.s32 %s35, %s42
      %p44 = scmp.eq.s32.totalorder %s43, 0
      %s46 = sadd.s32 %s45, 1
      %s47 = scalar_select %p44, %s45, %s46
      %p50 = pneg %p44
      %p51 = scmp.eq.s32.totalorder %s35, 1
      %p52 = por %p50, %p51
      %p53 = scmp.ne.s32.totalorder %s45, %s48
      %p54 = scmp.eq.s32.totalorder %s35, 0
      %p55 = por %p53, %p54
      %p56 = scmp.ne.s32.totalorder %s45, %s48
      %p57 = scmp.eq.s32.totalorder %s40, 1
      %p58 = por %p56, %p57
      %p59 = scmp.ne.s32.totalorder %s48, %s49
      %p60 = scmp.eq.s32.totalorder %s40, 0
      %p61 = por %p59, %p60
      %p62 = scmp.ne.s32.totalorder %s48, %s49
      %p63 = scmp.eq.s32.totalorder %s41, 1
      %p64 = por %p62, %p63
      %p66 = scmp.ne.s32.totalorder %s49, %s65
      %p67 = scmp.eq.s32.totalorder %s41, 0
      %p68 = por %p66, %p67
      %s70 = sadd.s32 %s69, 1
      %p73 = scmp.eq.s32.totalorder %s35, 1
      %p74 = scmp.ne.s32.totalorder %s69, %s71
      %p75 = scmp.eq.s32.totalorder %s35, 0
      %p76 = por %p74, %p75
      %p77 = scmp.ne.s32.totalorder %s69, %s71
      %p78 = scmp.eq.s32.totalorder %s40, 1
      %p79 = por %p77, %p78
      %p80 = scmp.ne.s32.totalorder %s71, %s72
      %p81 = scmp.eq.s32.totalorder %s40, 0
      %p82 = por %p80, %p81
      %p83 = scmp.ne.s32.totalorder %s71, %s72
      %p84 = scmp.eq.s32.totalorder %s41, 1
      %p85 = por %p83, %p84
      %p87 = scmp.ne.s32.totalorder %s72, %s86
      %p88 = scmp.eq.s32.totalorder %s41, 0
      %p89 = por %p87, %p88
      %s91 = sadd.s32 %s90, 1
      %p94 = scmp.eq.s32.totalorder %s35, 1
      %p95 = scmp.ne.s32.totalorder %s90, %s92
      %p96 = scmp.eq.s32.totalorder %s35, 0
      %p97 = por %p95, %p96
      %p98 = scmp.ne.s32.totalorder %s90, %s92
      %p99 = scmp.eq.s32.totalorder %s40, 1
      %p100 = por %p98, %p99
      %p101 = scmp.ne.s32.totalorder %s92, %s93
      %p102 = scmp.eq.s32.totalorder %s40, 0
      %p103 = por %p101, %p102
      %p104 = scmp.ne.s32.totalorder %s92, %s93
      %p105 = scmp.eq.s32.totalorder %s41, 1
      %p106 = por %p104, %p105
      %p108 = scmp.ne.s32.totalorder %s93, %s107
      %p109 = scmp.eq.s32.totalorder %s41, 0
      %p110 = por %p108, %p109
      %s112 = sadd.s32 %s111, 1
      %p115 = scmp.eq.s32.totalorder %s35, 1
      %p116 = scmp.ne.s32.totalorder %s111, %s113
      %p117 = scmp.eq.s32.totalorder %s35, 0
      %p118 = por %p116, %p117
      %p119 = scmp.ne.s32.totalorder %s111, %s113
      %p120 = scmp.eq.s32.totalorder %s40, 1
      %p121 = por %p119, %p120
      %p122 = scmp.ne.s32.totalorder %s113, %s114
      %p123 = scmp.eq.s32.totalorder %s40, 0
      %p124 = por %p122, %p123
      %p125 = scmp.ne.s32.totalorder %s113, %s114
      %p126 = scmp.eq.s32.totalorder %s41, 1
      %p127 = por %p125, %p126
      %p129 = scmp.ne.s32.totalorder %s114, %s128
      %p130 = scmp.eq.s32.totalorder %s41, 0
      %p131 = por %p129, %p130
      %s133 = sadd.s32 %s132, 1
      %p136 = scmp.eq.s32.totalorder %s35, 1
      %p137 = scmp.ne.s32.totalorder %s132, %s134
      %p138 = scmp.eq.s32.totalorder %s35, 0
      %p139 = por %p137, %p138
      %p140 = scmp.ne.s32.totalorder %s132, %s134
      %p141 = scmp.eq.s32.totalorder %s40, 1
      %p142 = por %p140, %p141
      %p143 = scmp.ne.s32.totalorder %s134, %s135
      %p144 = scmp.eq.s32.totalorder %s40, 0
      %p145 = por %p143, %p144
      %p146 = scmp.ne.s32.totalorder %s134, %s135
      %p147 = scmp.eq.s32.totalorder %s41, 1
      %p148 = por %p146, %p147
      %p150 = scmp.ne.s32.totalorder %s135, %s149
      %p151 = scmp.eq.s32.totalorder %s41, 0
      %p152 = por %p150, %p151
      %s154 = sadd.s32 %s153, 1
      %p157 = scmp.eq.s32.totalorder %s35, 1
      %p158 = scmp.ne.s32.totalorder %s153, %s155
      %p159 = scmp.eq.s32.totalorder %s35, 0
      %p160 = por %p158, %p159
      %p161 = scmp.ne.s32.totalorder %s153, %s155
      %p162 = scmp.eq.s32.totalorder %s40, 1
      %p163 = por %p161, %p162
      %p164 = scmp.ne.s32.totalorder %s155, %s156
      %p165 = scmp.eq.s32.totalorder %s40, 0
      %p166 = por %p164, %p165
      %p167 = scmp.ne.s32.totalorder %s155, %s156
      %p168 = scmp.eq.s32.totalorder %s41, 1
      %p169 = por %p167, %p168
      %p171 = scmp.ne.s32.totalorder %s156, %s170
      %p172 = scmp.eq.s32.totalorder %s41, 0
      %p173 = por %p171, %p172
      %s175 = sadd.s32 %s174, 1
      %p178 = scmp.eq.s32.totalorder %s35, 1
      %p179 = scmp.ne.s32.totalorder %s174, %s176
      %p180 = scmp.eq.s32.totalorder %s35, 0
      %p181 = por %p179, %p180
      %p182 = scmp.ne.s32.totalorder %s174, %s176
      %p183 = scmp.eq.s32.totalorder %s40, 1
      %p184 = por %p182, %p183
      %p185 = scmp.ne.s32.totalorder %s176, %s177
      %p186 = scmp.eq.s32.totalorder %s40, 0
      %p187 = por %p185, %p186
      %p188 = scmp.ne.s32.totalorder %s176, %s177
      %p189 = scmp.eq.s32.totalorder %s41, 1
      %p190 = por %p188, %p189
      %p192 = scmp.ne.s32.totalorder %s177, %s191
      %p193 = scmp.eq.s32.totalorder %s41, 0
      %p194 = por %p192, %p193
      %s196 = sadd.s32 %s195, 1
      %p199 = scmp.eq.s32.totalorder %s35, 1
      %p200 = scmp.ne.s32.totalorder %s195, %s197
      %p201 = scmp.eq.s32.totalorder %s35, 0
      %p202 = por %p200, %p201
      %p203 = scmp.ne.s32.totalorder %s195, %s197
      %p204 = scmp.eq.s32.totalorder %s40, 1
      %p205 = por %p203, %p204
      %p206 = scmp.ne.s32.totalorder %s197, %s198
      %p207 = scmp.eq.s32.totalorder %s40, 0
      %p208 = por %p206, %p207
      %p209 = scmp.ne.s32.totalorder %s197, %s198
      %p210 = scmp.eq.s32.totalorder %s41, 1
      %p211 = por %p209, %p210
      %p213 = scmp.ne.s32.totalorder %s198, %s212
      %p214 = scmp.eq.s32.totalorder %s41, 0
      %p215 = por %p213, %p214
      %s217 = sadd.s32 %s216, 1
      %p220 = scmp.eq.s32.totalorder %s35, 1
      %p221 = scmp.ne.s32.totalorder %s216, %s218
      %p222 = scmp.eq.s32.totalorder %s35, 0
      %p223 = por %p221, %p222
      %p224 = scmp.ne.s32.totalorder %s216, %s218
      %p225 = scmp.eq.s32.totalorder %s40, 1
      %p226 = por %p224, %p225
      %p227 = scmp.ne.s32.totalorder %s218, %s219
      %p228 = scmp.eq.s32.totalorder %s40, 0
      %p229 = por %p227, %p228
      %p230 = scmp.ne.s32.totalorder %s218, %s219
      %p231 = scmp.eq.s32.totalorder %s41, 1
      %p232 = por %p230, %p231
      %p234 = scmp.ne.s32.totalorder %s219, %s233
      %p235 = scmp.eq.s32.totalorder %s41, 0
      %p236 = por %p234, %p235
      %s238 = sadd.s32 %s237, 1
      %p241 = scmp.eq.s32.totalorder %s35, 1
      %p242 = scmp.ne.s32.totalorder %s237, %s239
      %p243 = scmp.eq.s32.totalorder %s35, 0
      %p244 = por %p242, %p243
      %p245 = scmp.ne.s32.totalorder %s237, %s239
      %p246 = scmp.eq.s32.totalorder %s40, 1
      %p247 = por %p245, %p246
      %p248 = scmp.ne.s32.totalorder %s239, %s240
      %p249 = scmp.eq.s32.totalorder %s40, 0
      %p250 = por %p248, %p249
      %p251 = scmp.ne.s32.totalorder %s239, %s240
      %p252 = scmp.eq.s32.totalorder %s41, 1
      %p253 = por %p251, %p252
      %p255 = scmp.ne.s32.totalorder %s240, %s254
      %p256 = scmp.eq.s32.totalorder %s41, 0
      %p257 = por %p255, %p256
      %s259 = sadd.s32 %s258, 1
      %p262 = scmp.eq.s32.totalorder %s35, 1
      %p263 = scmp.ne.s32.totalorder %s258, %s260
      %p264 = scmp.eq.s32.totalorder %s35, 0
      %p265 = por %p263, %p264
      %p266 = scmp.ne.s32.totalorder %s258, %s260
      %p267 = scmp.eq.s32.totalorder %s40, 1
      %p268 = por %p266, %p267
      %p269 = scmp.ne.s32.totalorder %s260, %s261
      %p270 = scmp.eq.s32.totalorder %s40, 0
      %p271 = por %p269, %p270
      %p272 = scmp.ne.s32.totalorder %s260, %s261
      %p273 = scmp.eq.s32.totalorder %s41, 1
      %p274 = por %p272, %p273
      %p276 = scmp.ne.s32.totalorder %s261, %s275
      %p277 = scmp.eq.s32.totalorder %s41, 0
      %p278 = por %p276, %p277
      %s280 = sadd.s32 %s279, 1
      %p283 = scmp.eq.s32.totalorder %s35, 1
      %p284 = scmp.ne.s32.totalorder %s279, %s281
      %p285 = scmp.eq.s32.totalorder %s35, 0
      %p286 = por %p284, %p285
      %p287 = scmp.ne.s32.totalorder %s279, %s281
      %p288 = scmp.eq.s32.totalorder %s40, 1
      %p289 = por %p287, %p288
      %p290 = scmp.ne.s32.totalorder %s281, %s282
      %p291 = scmp.eq.s32.totalorder %s40, 0
      %p292 = por %p290, %p291
      %p293 = scmp.ne.s32.totalorder %s281, %s282
      %p294 = scmp.eq.s32.totalorder %s41, 1
      %p295 = por %p293, %p294
      %p297 = scmp.ne.s32.totalorder %s282, %s296
      %p298 = scmp.eq.s32.totalorder %s41, 0
      %p299 = por %p297, %p298
      %s301 = sadd.s32 %s300, 1
      %p304 = scmp.eq.s32.totalorder %s35, 1
      %p305 = scmp.ne.s32.totalorder %s300, %s302
      %p306 = scmp.eq.s32.totalorder %s35, 0
      %p307 = por %p305, %p306
      %p308 = scmp.ne.s32.totalorder %s300, %s302
      %p309 = scmp.eq.s32.totalorder %s40, 1
      %p310 = por %p308, %p309
      %p311 = scmp.ne.s32.totalorder %s302, %s303
      %p312 = scmp.eq.s32.totalorder %s40, 0
      %p313 = por %p311, %p312
      %p314 = scmp.ne.s32.totalorder %s302, %s303
      %p315 = scmp.eq.s32.totalorder %s41, 1
      %p316 = por %p314, %p315
      %p318 = scmp.ne.s32.totalorder %s303, %s317
      %p319 = scmp.eq.s32.totalorder %s41, 0
      %p320 = por %p318, %p319
      %s322 = sadd.s32 %s321, 1
      %p325 = scmp.eq.s32.totalorder %s35, 1
      %p326 = scmp.ne.s32.totalorder %s321, %s323
      %p327 = scmp.eq.s32.totalorder %s35, 0
      %p328 = por %p326, %p327
      %p329 = scmp.ne.s32.totalorder %s321, %s323
      %p330 = scmp.eq.s32.totalorder %s40, 1
      %p331 = por %p329, %p330
      %p332 = scmp.ne.s32.totalorder %s323, %s324
      %p333 = scmp.eq.s32.totalorder %s40, 0
      %p334 = por %p332, %p333
      %p335 = scmp.ne.s32.totalorder %s323, %s324
      %p336 = scmp.eq.s32.totalorder %s41, 1
      %p337 = por %p335, %p336
      %p339 = scmp.ne.s32.totalorder %s324, %s338
      %p340 = scmp.eq.s32.totalorder %s41, 0
      %p341 = por %p339, %p340
      %s343 = sadd.s32 %s342, 1
      %p346 = scmp.eq.s32.totalorder %s35, 1
      %p347 = scmp.ne.s32.totalorder %s342, %s344
      %p348 = scmp.eq.s32.totalorder %s35, 0
      %p349 = por %p347, %p348
      %p350 = scmp.ne.s32.totalorder %s342, %s344
      %p351 = scmp.eq.s32.totalorder %s40, 1
      %p352 = por %p350, %p351
      %p353 = scmp.ne.s32.totalorder %s344, %s345
      %p354 = scmp.eq.s32.totalorder %s40, 0
      %p355 = por %p353, %p354
      %p356 = scmp.ne.s32.totalorder %s344, %s345
      %p357 = scmp.eq.s32.totalorder %s41, 1
      %p358 = por %p356, %p357
      %p360 = scmp.ne.s32.totalorder %s345, %s359
      %p361 = scmp.eq.s32.totalorder %s41, 0
      %p362 = por %p360, %p361
      %s364 = sadd.s32 %s363, 1
      %p367 = scmp.eq.s32.totalorder %s35, 1
      %p368 = scmp.ne.s32.totalorder %s363, %s365
      %p369 = scmp.eq.s32.totalorder %s35, 0
      %p370 = por %p368, %p369
      %p371 = scmp.ne.s32.totalorder %s363, %s365
      %p372 = scmp.eq.s32.totalorder %s40, 1
      %p373 = por %p371, %p372
      %p374 = scmp.ne.s32.totalorder %s365, %s366
      %p375 = scmp.eq.s32.totalorder %s40, 0
      %p376 = por %p374, %p375
      %p377 = scmp.ne.s32.totalorder %s365, %s366
      %p378 = scmp.eq.s32.totalorder %s41, 1
      %p379 = por %p377, %p378
      %p381 = scmp.ne.s32.totalorder %s366, %s380
      %p382 = scmp.eq.s32.totalorder %s41, 0
      %p383 = por %p381, %p382
      %s385 = sadd.s32 %s384, 1
      %p388 = scmp.eq.s32.totalorder %s35, 1
      %p389 = scmp.ne.s32.totalorder %s384, %s386
      %p390 = scmp.eq.s32.totalorder %s35, 0
      %p391 = por %p389, %p390
      %p392 = scmp.ne.s32.totalorder %s384, %s386
      %p393 = scmp.eq.s32.totalorder %s40, 1
      %p394 = por %p392, %p393
      %p395 = scmp.ne.s32.totalorder %s386, %s387
      %p396 = scmp.eq.s32.totalorder %s40, 0
      %p397 = por %p395, %p396
      %p398 = scmp.ne.s32.totalorder %s386, %s387
      %p399 = scmp.eq.s32.totalorder %s41, 1
      %p400 = por %p398, %p399
      %p402 = scmp.ne.s32.totalorder %s387, %s401
      %p403 = scmp.eq.s32.totalorder %s41, 0
      %p404 = por %p402, %p403
      %s406 = sadd.s32 %s405, 1
      %p409 = scmp.eq.s32.totalorder %s35, 1
      %p410 = scmp.ne.s32.totalorder %s405, %s407
      %p411 = scmp.eq.s32.totalorder %s35, 0
      %p412 = por %p410, %p411
      %p413 = scmp.ne.s32.totalorder %s405, %s407
      %p414 = scmp.eq.s32.totalorder %s40, 1
      %p415 = por %p413, %p414
      %p416 = scmp.ne.s32.totalorder %s407, %s408
      %p417 = scmp.eq.s32.totalorder %s40, 0
      %p418 = por %p416, %p417
      %p419 = scmp.ne.s32.totalorder %s407, %s408
      %p420 = scmp.eq.s32.totalorder %s41, 1
      %p421 = por %p419, %p420
      %p423 = scmp.ne.s32.totalorder %s408, %s422
      %p424 = scmp.eq.s32.totalorder %s41, 0
      %p425 = por %p423, %p424
      %s427 = sadd.s32 %s426, 1
      %p430 = scmp.eq.s32.totalorder %s35, 1
      %p431 = scmp.ne.s32.totalorder %s426, %s428
      %p432 = scmp.eq.s32.totalorder %s35, 0
      %p433 = por %p431, %p432
      %p434 = scmp.ne.s32.totalorder %s426, %s428
      %p435 = scmp.eq.s32.totalorder %s40, 1
      %p436 = por %p434, %p435
      %p437 = scmp.ne.s32.totalorder %s428, %s429
      %p438 = scmp.eq.s32.totalorder %s40, 0
      %p439 = por %p437, %p438
      %p440 = scmp.ne.s32.totalorder %s428, %s429
      %p441 = scmp.eq.s32.totalorder %s41, 1
      %p442 = por %p440, %p441
      %p444 = scmp.ne.s32.totalorder %s429, %s443
      %p445 = scmp.eq.s32.totalorder %s41, 0
      %p446 = por %p444, %p445
      %s448 = sadd.s32 %s447, 1
      %p451 = scmp.eq.s32.totalorder %s35, 1
      %p452 = scmp.ne.s32.totalorder %s447, %s449
      %p453 = scmp.eq.s32.totalorder %s35, 0
      %p454 = por %p452, %p453
      %p455 = scmp.ne.s32.totalorder %s447, %s449
      %p456 = scmp.eq.s32.totalorder %s40, 1
      %p457 = por %p455, %p456
      %p458 = scmp.ne.s32.totalorder %s449, %s450
      %p459 = scmp.eq.s32.totalorder %s40, 0
      %p460 = por %p458, %p459
      %p461 = scmp.ne.s32.totalorder %s449, %s450
      %p462 = scmp.eq.s32.totalorder %s41, 1
      %p463 = por %p461, %p462
      %p465 = scmp.ne.s32.totalorder %s450, %s464
      %p466 = scmp.eq.s32.totalorder %s41, 0
      %p467 = por %p465, %p466
      %s469 = sadd.s32 %s468, 1
      %p472 = scmp.eq.s32.totalorder %s35, 1
      %p473 = scmp.ne.s32.totalorder %s468, %s470
      %p474 = scmp.eq.s32.totalorder %s35, 0
      %p475 = por %p473, %p474
      %p476 = scmp.ne.s32.totalorder %s468, %s470
      %p477 = scmp.eq.s32.totalorder %s40, 1
      %p478 = por %p476, %p477
      %p479 = scmp.ne.s32.totalorder %s470, %s471
      %p480 = scmp.eq.s32.totalorder %s40, 0
      %p481 = por %p479, %p480
      %p482 = scmp.ne.s32.totalorder %s470, %s471
      %p483 = scmp.eq.s32.totalorder %s41, 1
      %p484 = por %p482, %p483
      %p486 = scmp.ne.s32.totalorder %s471, %s485
      %p487 = scmp.eq.s32.totalorder %s41, 0
      %p488 = por %p486, %p487
      %s490 = sadd.s32 %s489, 1
      %p493 = scmp.eq.s32.totalorder %s35, 1
      %p494 = scmp.ne.s32.totalorder %s489, %s491
      %p495 = scmp.eq.s32.totalorder %s35, 0
      %p496 = por %p494, %p495
      %p497 = scmp.ne.s32.totalorder %s489, %s491
      %p498 = scmp.eq.s32.totalorder %s40, 1
      %p499 = por %p497, %p498
      %p500 = scmp.ne.s32.totalorder %s491, %s492
      %p501 = scmp.eq.s32.totalorder %s40, 0
      %p502 = por %p500, %p501
      %p503 = scmp.ne.s32.totalorder %s491, %s492
      %p504 = scmp.eq.s32.totalorder %s41, 1
      %p505 = por %p503, %p504
      %p507 = scmp.ne.s32.totalorder %s492, %s506
      %p508 = scmp.eq.s32.totalorder %s41, 0
      %p509 = por %p507, %p508
      %s511 = sadd.s32 %s510, 1
      %p514 = scmp.eq.s32.totalorder %s35, 1
      %p515 = scmp.ne.s32.totalorder %s510, %s512
      %p516 = scmp.eq.s32.totalorder %s35, 0
      %p517 = por %p515, %p516
      %p518 = scmp.ne.s32.totalorder %s510, %s512
      %p519 = scmp.eq.s32.totalorder %s40, 1
      %p520 = por %p518, %p519
      %p521 = scmp.ne.s32.totalorder %s512, %s513
      %p522 = scmp.eq.s32.totalorder %s40, 0
      %p523 = por %p521, %p522
      %p524 = scmp.ne.s32.totalorder %s512, %s513
      %p525 = scmp.eq.s32.totalorder %s41, 1
      %p526 = por %p524, %p525
      %p528 = scmp.ne.s32.totalorder %s513, %s527
      %p529 = scmp.eq.s32.totalorder %s41, 0
      %p530 = por %p528, %p529
      %s532 = sadd.s32 %s531, 1
      %p535 = scmp.eq.s32.totalorder %s35, 1
      %p536 = scmp.ne.s32.totalorder %s531, %s533
      %p537 = scmp.eq.s32.totalorder %s35, 0
      %p538 = por %p536, %p537
      %p539 = scmp.ne.s32.totalorder %s531, %s533
      %p540 = scmp.eq.s32.totalorder %s40, 1
      %p541 = por %p539, %p540
      %p542 = scmp.ne.s32.totalorder %s533, %s534
      %p543 = scmp.eq.s32.totalorder %s40, 0
      %p544 = por %p542, %p543
      %p545 = scmp.ne.s32.totalorder %s533, %s534
      %p546 = scmp.eq.s32.totalorder %s41, 1
      %p547 = por %p545, %p546
      %p549 = scmp.ne.s32.totalorder %s534, %s548
      %p550 = scmp.eq.s32.totalorder %s41, 0
      %p551 = por %p549, %p550
      %s553 = sadd.s32 %s552, 1
      %p556 = scmp.eq.s32.totalorder %s35, 1
      %p557 = scmp.ne.s32.totalorder %s552, %s554
      %p558 = scmp.eq.s32.totalorder %s35, 0
      %p559 = por %p557, %p558
      %p560 = scmp.ne.s32.totalorder %s552, %s554
      %p561 = scmp.eq.s32.totalorder %s40, 1
      %p562 = por %p560, %p561
      %p563 = scmp.ne.s32.totalorder %s554, %s555
      %p564 = scmp.eq.s32.totalorder %s40, 0
      %p565 = por %p563, %p564
      %p566 = scmp.ne.s32.totalorder %s554, %s555
      %p567 = scmp.eq.s32.totalorder %s41, 1
      %p568 = por %p566, %p567
      %p570 = scmp.ne.s32.totalorder %s555, %s569
      %p571 = scmp.eq.s32.totalorder %s41, 0
      %p572 = por %p570, %p571
      %s574 = sadd.s32 %s573, 1
      %p577 = scmp.eq.s32.totalorder %s35, 1
      %p578 = scmp.ne.s32.totalorder %s573, %s575
      %p579 = scmp.eq.s32.totalorder %s35, 0
      %p580 = por %p578, %p579
      %p581 = scmp.ne.s32.totalorder %s573, %s575
      %p582 = scmp.eq.s32.totalorder %s40, 1
      %p583 = por %p581, %p582
      %p584 = scmp.ne.s32.totalorder %s575, %s576
      %p585 = scmp.eq.s32.totalorder %s40, 0
      %p586 = por %p584, %p585
      %p587 = scmp.ne.s32.totalorder %s575, %s576
      %p588 = scmp.eq.s32.totalorder %s41, 1
      %p589 = por %p587, %p588
      %p591 = scmp.ne.s32.totalorder %s576, %s590
      %p592 = scmp.eq.s32.totalorder %s41, 0
      %p593 = por %p591, %p592
      %s594 = ssub.s32 %s35, %s42
      %p595 = scmp.eq.s32.totalorder %s594, 0
      %s597 = sadd.s32 %s596, 1
      %s598 = scalar_select %p595, %s596, %s597
      %p601 = pneg %p595
      %p602 = scmp.eq.s32.totalorder %s35, 1
      %p603 = por %p601, %p602
      %p604 = scmp.ne.s32.totalorder %s596, %s599
      %p605 = scmp.eq.s32.totalorder %s35, 0
      %p606 = por %p604, %p605
      %p607 = scmp.ne.s32.totalorder %s596, %s599
      %p608 = scmp.eq.s32.totalorder %s40, 1
      %p609 = por %p607, %p608
      %p610 = scmp.ne.s32.totalorder %s599, %s600
      %p611 = scmp.eq.s32.totalorder %s40, 0
      %p612 = por %p610, %p611
      %p613 = scmp.ne.s32.totalorder %s599, %s600
      %p614 = scmp.eq.s32.totalorder %s41, 1
      %p615 = por %p613, %p614
      %p617 = scmp.ne.s32.totalorder %s600, %s616
      %p618 = scmp.eq.s32.totalorder %s41, 0
      %p619 = por %p617, %p618
      %p620 = scmp.le.s32.totalorder 1, %s35
      %p621 = scmp.lt.s32.totalorder %s35, 3
      %p622 = pnand %p620, %p621
      %p623 = pneg %p622
      // Predicated region
      $region9: #{tpu_custom_call.1} parent=5 // pred_check
        _
      $region10: #{tpu_custom_call.1} parent=5 // pred_check_branch
        %625 = sbr.rel (%p622) target = $region12
      $region11: #{tpu_custom_call.1} parent=5 // pred_region
        %s626 = ssub.s32 %s35, 1
        // Predicated region
        $region13: #{tpu_custom_call.1} parent=11 // pred_check
          %p627 = pneg %p82
        $region14: #{tpu_custom_call.1} parent=11 // pred_check_branch
          %629 = sbr.rel (%p627) target = $region16
        $region15: #{tpu_custom_call.1} parent=11 // pred_region
          _
        $region16: #{tpu_custom_call.1} parent=11 // pred_fallthru
          _
        // Predicated region
        $region17: #{tpu_custom_call.1} parent=11 // pred_check
          %p630 = pneg %p103
        $region18: #{tpu_custom_call.1} parent=11 // pred_check_branch
          %632 = sbr.rel (%p630) target = $region20
        $region19: #{tpu_custom_call.1} parent=11 // pred_region
          _
        $region20: #{tpu_custom_call.1} parent=11 // pred_fallthru
          _
        // Predicated region
        $region21: #{tpu_custom_call.1} parent=11 // pred_check
          %p633 = pneg %p124
        $region22: #{tpu_custom_call.1} parent=11 // pred_check_branch
          %635 = sbr.rel (%p633) target = $region24
        $region23: #{tpu_custom_call.1} parent=11 // pred_region
          _
        $region24: #{tpu_custom_call.1} parent=11 // pred_fallthru
          _
        // Predicated region
        $region25: #{tpu_custom_call.1} parent=11 // pred_check
          %p636 = pneg %p145
        $region26: #{tpu_custom_call.1} parent=11 // pred_check_branch
          %638 = sbr.rel (%p636) target = $region28
        $region27: #{tpu_custom_call.1} parent=11 // pred_region
          _
        $region28: #{tpu_custom_call.1} parent=11 // pred_fallthru
          _
        // Predicated region
        $region29: #{tpu_custom_call.1} parent=11 // pred_check
          %p639 = pneg %p166
        $region30: #{tpu_custom_call.1} parent=11 // pred_check_branch
          %641 = sbr.rel (%p639) target = $region32
        $region31: #{tpu_custom_call.1} parent=11 // pred_region
          _
        $region32: #{tpu_custom_call.1} parent=11 // pred_fallthru
          _
        // Predicated region
        $region33: #{tpu_custom_call.1} parent=11 // pred_check
          %p642 = pneg %p187
        $region34: #{tpu_custom_call.1} parent=11 // pred_check_branch
          %644 = sbr.rel (%p642) target = $region36
        $region35: #{tpu_custom_call.1} parent=11 // pred_region
          _
        $region36: #{tpu_custom_call.1} parent=11 // pred_fallthru
          _
        // Predicated region
        $region37: #{tpu_custom_call.1} parent=11 // pred_check
          %p645 = pneg %p208
        $region38: #{tpu_custom_call.1} parent=11 // pred_check_branch
          %647 = sbr.rel (%p645) target = $region40
        $region39: #{tpu_custom_call.1} parent=11 // pred_region
          _
        $region40: #{tpu_custom_call.1} parent=11 // pred_fallthru
          _
        // Predicated region
        $region41: #{tpu_custom_call.1} parent=11 // pred_check
          %p648 = pneg %p229
        $region42: #{tpu_custom_call.1} parent=11 // pred_check_branch
          %650 = sbr.rel (%p648) target = $region44
        $region43: #{tpu_custom_call.1} parent=11 // pred_region
          _
        $region44: #{tpu_custom_call.1} parent=11 // pred_fallthru
          _
        // Predicated region
        $region45: #{tpu_custom_call.1} parent=11 // pred_check
          %p651 = pneg %p250
        $region46: #{tpu_custom_call.1} parent=11 // pred_check_branch
          %653 = sbr.rel (%p651) target = $region48
        $region47: #{tpu_custom_call.1} parent=11 // pred_region
          _
        $region48: #{tpu_custom_call.1} parent=11 // pred_fallthru
          _
        // Predicated region
        $region49: #{tpu_custom_call.1} parent=11 // pred_check
          %p654 = pneg %p271
        $region50: #{tpu_custom_call.1} parent=11 // pred_check_branch
          %656 = sbr.rel (%p654) target = $region52
        $region51: #{tpu_custom_call.1} parent=11 // pred_region
          _
        $region52: #{tpu_custom_call.1} parent=11 // pred_fallthru
          _
        // Predicated region
        $region53: #{tpu_custom_call.1} parent=11 // pred_check
          %p657 = pneg %p292
        $region54: #{tpu_custom_call.1} parent=11 // pred_check_branch
          %659 = sbr.rel (%p657) target = $region56
        $region55: #{tpu_custom_call.1} parent=11 // pred_region
          _
        $region56: #{tpu_custom_call.1} parent=11 // pred_fallthru
          _
        // Predicated region
        $region57: #{tpu_custom_call.1} parent=11 // pred_check
          %p660 = pneg %p313
        $region58: #{tpu_custom_call.1} parent=11 // pred_check_branch
          %662 = sbr.rel (%p660) target = $region60
        $region59: #{tpu_custom_call.1} parent=11 // pred_region
          _
        $region60: #{tpu_custom_call.1} parent=11 // pred_fallthru
          _
        // Predicated region
        $region61: #{tpu_custom_call.1} parent=11 // pred_check
          %p663 = pneg %p334
        $region62: #{tpu_custom_call.1} parent=11 // pred_check_branch
          %665 = sbr.rel (%p663) target = $region64
        $region63: #{tpu_custom_call.1} parent=11 // pred_region
          _
        $region64: #{tpu_custom_call.1} parent=11 // pred_fallthru
          _
        // Predicated region
        $region65: #{tpu_custom_call.1} parent=11 // pred_check
          %p666 = pneg %p355
        $region66: #{tpu_custom_call.1} parent=11 // pred_check_branch
          %668 = sbr.rel (%p666) target = $region68
        $region67: #{tpu_custom_call.1} parent=11 // pred_region
          _
        $region68: #{tpu_custom_call.1} parent=11 // pred_fallthru
          _
        // Predicated region
        $region69: #{tpu_custom_call.1} parent=11 // pred_check
          %p669 = pneg %p376
        $region70: #{tpu_custom_call.1} parent=11 // pred_check_branch
          %671 = sbr.rel (%p669) target = $region72
        $region71: #{tpu_custom_call.1} parent=11 // pred_region
          _
        $region72: #{tpu_custom_call.1} parent=11 // pred_fallthru
          _
        // Predicated region
        $region73: #{tpu_custom_call.1} parent=11 // pred_check
          %p672 = pneg %p397
        $region74: #{tpu_custom_call.1} parent=11 // pred_check_branch
          %674 = sbr.rel (%p672) target = $region76
        $region75: #{tpu_custom_call.1} parent=11 // pred_region
          _
        $region76: #{tpu_custom_call.1} parent=11 // pred_fallthru
          _
        // Predicated region
        $region77: #{tpu_custom_call.1} parent=11 // pred_check
          %p675 = pneg %p418
        $region78: #{tpu_custom_call.1} parent=11 // pred_check_branch
          %677 = sbr.rel (%p675) target = $region80
        $region79: #{tpu_custom_call.1} parent=11 // pred_region
          _
        $region80: #{tpu_custom_call.1} parent=11 // pred_fallthru
          _
        // Predicated region
        $region81: #{tpu_custom_call.1} parent=11 // pred_check
          %p678 = pneg %p439
        $region82: #{tpu_custom_call.1} parent=11 // pred_check_branch
          %680 = sbr.rel (%p678) target = $region84
        $region83: #{tpu_custom_call.1} parent=11 // pred_region
          _
        $region84: #{tpu_custom_call.1} parent=11 // pred_fallthru
          _
        // Predicated region
        $region85: #{tpu_custom_call.1} parent=11 // pred_check
          %p681 = pneg %p460
        $region86: #{tpu_custom_call.1} parent=11 // pred_check_branch
          %683 = sbr.rel (%p681) target = $region88
        $region87: #{tpu_custom_call.1} parent=11 // pred_region
          _
        $region88: #{tpu_custom_call.1} parent=11 // pred_fallthru
          _
        // Predicated region
        $region89: #{tpu_custom_call.1} parent=11 // pred_check
          %p684 = pneg %p481
        $region90: #{tpu_custom_call.1} parent=11 // pred_check_branch
          %686 = sbr.rel (%p684) target = $region92
        $region91: #{tpu_custom_call.1} parent=11 // pred_region
          _
        $region92: #{tpu_custom_call.1} parent=11 // pred_fallthru
          _
        // Predicated region
        $region93: #{tpu_custom_call.1} parent=11 // pred_check
          %p687 = pneg %p502
        $region94: #{tpu_custom_call.1} parent=11 // pred_check_branch
          %689 = sbr.rel (%p687) target = $region96
        $region95: #{tpu_custom_call.1} parent=11 // pred_region
          _
        $region96: #{tpu_custom_call.1} parent=11 // pred_fallthru
          _
        // Predicated region
        $region97: #{tpu_custom_call.1} parent=11 // pred_check
          %p690 = pneg %p523
        $region98: #{tpu_custom_call.1} parent=11 // pred_check_branch
          %692 = sbr.rel (%p690) target = $region100
        $region99: #{tpu_custom_call.1} parent=11 // pred_region
          _
        $region100: #{tpu_custom_call.1} parent=11 // pred_fallthru
          _
        // Predicated region
        $region101: #{tpu_custom_call.1} parent=11 // pred_check
          %p693 = pneg %p544
        $region102: #{tpu_custom_call.1} parent=11 // pred_check_branch
          %695 = sbr.rel (%p693) target = $region104
        $region103: #{tpu_custom_call.1} parent=11 // pred_region
          _
        $region104: #{tpu_custom_call.1} parent=11 // pred_fallthru
          _
        // Predicated region
        $region105: #{tpu_custom_call.1} parent=11 // pred_check
          %p696 = pneg %p565
        $region106: #{tpu_custom_call.1} parent=11 // pred_check_branch
          %698 = sbr.rel (%p696) target = $region108
        $region107: #{tpu_custom_call.1} parent=11 // pred_region
          _
        $region108: #{tpu_custom_call.1} parent=11 // pred_fallthru
          _
        // Predicated region
        $region109: #{tpu_custom_call.1} parent=11 // pred_check
          %p699 = pneg %p586
        $region110: #{tpu_custom_call.1} parent=11 // pred_check_branch
          %701 = sbr.rel (%p699) target = $region112
        $region111: #{tpu_custom_call.1} parent=11 // pred_region
          _
        $region112: #{tpu_custom_call.1} parent=11 // pred_fallthru
          _
      $region12: #{tpu_custom_call.1} parent=5 // pred_fallthru
        _
      %p702 = scmp.lt.s32.totalorder %s35, 2
      // Predicated region
      $region113: #{tpu_custom_call.1} parent=5 // pred_check
        %p703 = pneg %p702
      $region114: #{tpu_custom_call.1} parent=5 // pred_check_branch
        %705 = sbr.rel (%p703) target = $region116
      $region115: #{tpu_custom_call.1} parent=5 // pred_region
        // Predicated region
        $region117: #{tpu_custom_call.1} parent=115 // pred_check
          %p706 = pneg %p55
        $region118: #{tpu_custom_call.1} parent=115 // pred_check_branch
          %708 = sbr.rel (%p706) target = $region120
        $region119: #{tpu_custom_call.1} parent=115 // pred_region
          %s709 = sand.u32 %s45, 1
          %s710 = scalar_lea.sflag [#allocation4], %s709
          %s711 = sand.u32 %s45, 1
          %s712 = smul.addr %s711, 320
          %s713 = scalar_lea.vmem [#allocation3], %s712
          %s715 = ssub.s32 5120, 5120
          %716 = vsyncadd %s710, %s715
          %s717 = smul.addr %s35, 80
          %s718 = smul.addr %s717, 64
          %s719 = scalar_lea.hbm %s0, %s718
          %s720 = sshll.u32 %s713, 4
          %s721 = int_to_ptr.vmem [resolvable:$true] %s720
          %726 = dma.hbm_to_vmem [thread:$0]  %s719, 5120, %s721, %s710, 128, 128, 8
        $region120: #{tpu_custom_call.1} parent=115 // pred_fallthru
          _
      $region116: #{tpu_custom_call.1} parent=5 // pred_fallthru
        _
      %p727 = scmp.le.s32.totalorder 1, %s35
      %p728 = scmp.lt.s32.totalorder %s35, 3
      %p729 = pnand %p727, %p728
      %p730 = pneg %p729
      // Predicated region
      $region121: #{tpu_custom_call.1} parent=5 // pred_check
        _
      $region122: #{tpu_custom_call.1} parent=5 // pred_check_branch
        %732 = sbr.rel (%p729) target = $region124
      $region123: #{tpu_custom_call.1} parent=5 // pred_region
        %s733 = ssub.s32 %s35, 1
        %s734 = sand.u32 %s48, 1
        %s735 = scalar_lea.sflag [#allocation4], %s734
        %s736 = sand.u32 %s48, 1
        %s737 = smul.addr %s736, 320
        %s738 = scalar_lea.vmem [#allocation3], %s737
        // Predicated region
        $region125: #{tpu_custom_call.1} parent=123 // pred_check
          %p739 = pneg %p61
        $region126: #{tpu_custom_call.1} parent=123 // pred_check_branch
          %741 = sbr.rel (%p739) target = $region128
        $region127: #{tpu_custom_call.1} parent=123 // pred_region
          %742 = dma.done %s735, 5120
        $region128: #{tpu_custom_call.1} parent=123 // pred_fallthru
          _
        %s743 = sand.u32 %s48, 1
        %s744 = scalar_lea.sflag [#allocation4], %s743
        %s745 = sand.u32 %s48, 1
        %s746 = smul.addr %s745, 320
        %s747 = scalar_lea.vmem [#allocation3], %s746
        %p748 = pneg %p61
        %p749 = pneg %p58
        %p750 = pneg %p82
        %p751 = pneg %p79
        %p752 = pneg %p103
        %p753 = pneg %p100
        %p754 = pneg %p124
        %p755 = pneg %p121
        %p756 = pneg %p145
        %p757 = pneg %p142
        %p758 = pneg %p166
        %p759 = pneg %p163
        %p760 = pneg %p187
        %p761 = pneg %p184
        %p762 = pneg %p208
        %p763 = pneg %p205
        %p764 = pneg %p229
        %p765 = pneg %p226
        %p766 = pneg %p250
        %p767 = pneg %p247
        %p768 = pneg %p271
        %p769 = pneg %p268
        %p770 = pneg %p292
        %p771 = pneg %p289
        %p772 = pneg %p313
        %p773 = pneg %p310
        %p774 = pneg %p334
        %p775 = pneg %p331
        %p776 = pneg %p355
        %p777 = pneg %p352
        %p778 = pneg %p376
        %p779 = pneg %p373
        %p780 = pneg %p397
        %p781 = pneg %p394
        %p782 = pneg %p418
        %p783 = pneg %p415
        %p784 = pneg %p439
        %p785 = pneg %p436
        %p786 = pneg %p460
        %p787 = pneg %p457
        %p788 = pneg %p481
        %p789 = pneg %p478
        %p790 = pneg %p502
        %p791 = pneg %p499
        %p792 = pneg %p523
        %p793 = pneg %p520
        %p794 = pneg %p544
        %p795 = pneg %p541
        %p796 = pneg %p565
        %p797 = pneg %p562
        %p798 = pneg %p586
        %p799 = pneg %p583
        %p800 = pneg %p612
        %p801 = pneg %p609
        %p802 = scmp.lt.s32.totalorder %s40, 1
        %s803 = scalar_select %p802, %s40, 1
        %s804 = smul.addr %s803, 5
        %s805 = smul.addr %s804, 8
        %s806 = scalar_lea.vmem %s26, %s805
        %p807 = scmp.lt.s32.totalorder %s40, 1
        %s808 = scalar_select %p807, %s40, 1
        %s809 = smul.addr %s808, 5
        %s810 = smul.addr %s809, 8
        %s811 = scalar_lea.vmem %s26, %s810
        %v813 = vld [vmem:[%s738] sm:$0xff]
        %v814 = vld [vmem:[%s738 + $0x8] sm:$0xff]
        %v815 = vld [vmem:[%s738 + $0x10] sm:$0xff]
        %v816 = vld [vmem:[%s738 + $0x18] sm:$0xff]
        %v817 = vld [vmem:[%s738 + $0x20] sm:$0xff]
        %v818 = vld [vmem:[%s738 + $0x28] sm:$0xff]
        %v819 = vld [vmem:[%s738 + $0x30] sm:$0xff]
        %v820 = vld [vmem:[%s738 + $0x38] sm:$0xff]
        %v821 = vld [vmem:[%s738 + $0x40] sm:$0xff]
        %v822 = vld [vmem:[%s738 + $0x48] sm:$0xff]
        %v823 = vld [vmem:[%s1] sm:$0xf]
        %v834 = vunpack.c.l.b16 %v813
        %v835 = vunpack.c.h.b16 %v813
        %v836 = vunpack.c.l.b16 %v814
        %v837 = vunpack.c.h.b16 %v814
        %v838 = vunpack.c.l.b16 %v815
        %v839 = vunpack.c.h.b16 %v815
        %v840 = vunpack.c.l.b16 %v816
        %v841 = vunpack.c.h.b16 %v816
        %v842 = vunpack.c.l.b16 %v817
        %v843 = vunpack.c.h.b16 %v817
        %v844 = vunpack.c.l.b16 %v818
        %v845 = vunpack.c.h.b16 %v818
        %v846 = vunpack.c.l.b16 %v819
        %v847 = vunpack.c.h.b16 %v819
        %v848 = vunpack.c.l.b16 %v820
        %v849 = vunpack.c.h.b16 %v820
        %v850 = vunpack.c.l.b16 %v821
        %v851 = vunpack.c.h.b16 %v821
        %v852 = vunpack.c.l.b16 %v822
        %v853 = vunpack.c.h.b16 %v822
        %v854 = vpack.c.b16 %v836, %v834
        %v855 = vpack.c.b16 %v837, %v835
        %v856 = vpack.c.b16 %v840, %v838
        %v857 = vpack.c.b16 %v841, %v839
        %v858 = vpack.c.b16 %v844, %v842
        %v859 = vpack.c.b16 %v845, %v843
        %v860 = vpack.c.b16 %v848, %v846
        %v861 = vpack.c.b16 %v849, %v847
        %v862 = vpack.c.b16 %v852, %v850
        %v863 = vpack.c.b16 %v853, %v851
        %vm874 = vcmask 654336
        %v876 = vsel %vm874, %v823, 0
        %878 = vmatprep.subr.bf16.mxu0 0
        %879 = vmatpush1.bf16.msra.mxu0 0
        %880 = vmatprep.subr.bf16.mxu0 0
        %881 = vmatpush1.bf16.msra.mxu0 0
        %882 = vmatprep.subr.bf16.mxu0 0
        %883 = vmatpush1.bf16.msra.mxu0 0
        %884 = vmatprep.subr.bf16.mxu0 %v863
        %885 = vmatpush1.bf16.msra.mxu0 %v862
        %886 = vmatprep.subr.bf16.mxu0 %v861
        %887 = vmatpush1.bf16.msra.mxu0 %v860
        %888 = vmatprep.subr.bf16.mxu0 %v859
        %889 = vmatpush1.bf16.msra.mxu0 %v858
        %890 = vmatprep.subr.bf16.mxu0 %v857
        %891 = vmatpush1.bf16.msra.mxu0 %v856
        %892 = vmatprep.subr.bf16.mxu0 %v855
        %893 = vmatpush1.bf16.msra.mxu0 %v854
        %894 = vmatprep.subr.bf16.mxu0 0
        %895 = vmatpush2.bf16.msra.mxu0 0
        %896 = vmatprep.subr.bf16.mxu0 0
        %897 = vmatpush2.bf16.msra.mxu0 0
        %898 = vmatprep.subr.bf16.mxu0 0
        %899 = vmatpush2.bf16.msra.mxu0 0
        %900 = vmatprep.subr.bf16.mxu0 0
        %901 = vmatpush2.bf16.msra.mxu0 0
        %902 = vmatprep.subr.bf16.mxu0 0
        %903 = vmatpush2.bf16.msra.mxu0 0
        %904 = vmatprep.subr.bf16.mxu0 0
        %905 = vmatpush2.bf16.msra.mxu0 0
        %906 = vmatprep.subr.bf16.mxu0 0
        %907 = vmatpush2.bf16.msra.mxu0 0
        %908 = vmatprep.subr.bf16.mxu0 0
        %909 = vmatpush2.bf16.msra.mxu0 0
        %910 = vmatprep.mubr.bf16.mxu0 0
        %911 = vmatmul.mubr.bf16.gmra.mxu0 %v876
        %v912 = vpop.f32.mrf.mxu0
        %v913 = vadd.f32 0.0, %v912
        %v914 = vpop.f32.mrf.mxu0
        %v915 = vadd.f32 0.0, %v914
        %v916 = vpop.f32.mrf.mxu0
        %v917 = vpop.f32.mrf.mxu0
        %918 = vdwg.mxu0
        %v919 = vld [vmem:[%s738 + $0x50] sm:$0xff]
        %v920 = vld [vmem:[%s738 + $0x58] sm:$0xff]
        %v921 = vld [vmem:[%s738 + $0x60] sm:$0xff]
        %v922 = vld [vmem:[%s738 + $0x68] sm:$0xff]
        %v923 = vld [vmem:[%s738 + $0x70] sm:$0xff]
        %v924 = vld [vmem:[%s738 + $0x78] sm:$0xff]
        %v925 = vld [vmem:[%s738 + $0x80] sm:$0xff]
        %v926 = vld [vmem:[%s738 + $0x88] sm:$0xff]
        %v927 = vld [vmem:[%s738 + $0x90] sm:$0xff]
        %v928 = vld [vmem:[%s738 + $0x98] sm:$0xff]
        %v939 = vunpack.c.l.b16 %v919
        %v940 = vunpack.c.h.b16 %v919
        %v941 = vunpack.c.l.b16 %v920
        %v942 = vunpack.c.h.b16 %v920
        %v943 = vunpack.c.l.b16 %v921
        %v944 = vunpack.c.h.b16 %v921
        %v945 = vunpack.c.l.b16 %v922
        %v946 = vunpack.c.h.b16 %v922
        %v947 = vunpack.c.l.b16 %v923
        %v948 = vunpack.c.h.b16 %v923
        %v949 = vunpack.c.l.b16 %v924
        %v950 = vunpack.c.h.b16 %v924
        %v951 = vunpack.c.l.b16 %v925
        %v952 = vunpack.c.h.b16 %v925
        %v953 = vunpack.c.l.b16 %v926
        %v954 = vunpack.c.h.b16 %v926
        %v955 = vunpack.c.l.b16 %v927
        %v956 = vunpack.c.h.b16 %v927
        %v957 = vunpack.c.l.b16 %v928
        %v958 = vunpack.c.h.b16 %v928
        %v959 = vpack.c.b16 %v941, %v939
        %v960 = vpack.c.b16 %v942, %v940
        %v961 = vpack.c.b16 %v945, %v943
        %v962 = vpack.c.b16 %v946, %v944
        %v963 = vpack.c.b16 %v949, %v947
        %v964 = vpack.c.b16 %v950, %v948
        %v965 = vpack.c.b16 %v953, %v951
        %v966 = vpack.c.b16 %v954, %v952
        %v967 = vpack.c.b16 %v957, %v955
        %v968 = vpack.c.b16 %v958, %v956
        %979 = vmatprep.subr.bf16.mxu0 0
        %980 = vmatpush1.bf16.msra.mxu0 0
        %981 = vmatprep.subr.bf16.mxu0 0
        %982 = vmatpush1.bf16.msra.mxu0 0
        %983 = vmatprep.subr.bf16.mxu0 0
        %984 = vmatpush1.bf16.msra.mxu0 0
        %985 = vmatprep.subr.bf16.mxu0 %v968
        %986 = vmatpush1.bf16.msra.mxu0 %v967
        %987 = vmatprep.subr.bf16.mxu0 %v966
        %988 = vmatpush1.bf16.msra.mxu0 %v965
        %989 = vmatprep.subr.bf16.mxu0 %v964
        %990 = vmatpush1.bf16.msra.mxu0 %v963
        %991 = vmatprep.subr.bf16.mxu0 %v962
        %992 = vmatpush1.bf16.msra.mxu0 %v961
        %993 = vmatprep.subr.bf16.mxu0 %v960
        %994 = vmatpush1.bf16.msra.mxu0 %v959
        %995 = vmatprep.subr.bf16.mxu0 0
        %996 = vmatpush2.bf16.msra.mxu0 0
        %997 = vmatprep.subr.bf16.mxu0 0
        %998 = vmatpush2.bf16.msra.mxu0 0
        %999 = vmatprep.subr.bf16.mxu0 0
        %1000 = vmatpush2.bf16.msra.mxu0 0
        %1001 = vmatprep.subr.bf16.mxu0 0
        %1002 = vmatpush2.bf16.msra.mxu0 0
        %1003 = vmatprep.subr.bf16.mxu0 0
        %1004 = vmatpush2.bf16.msra.mxu0 0
        %1005 = vmatprep.subr.bf16.mxu0 0
        %1006 = vmatpush2.bf16.msra.mxu0 0
        %1007 = vmatprep.subr.bf16.mxu0 0
        %1008 = vmatpush2.bf16.msra.mxu0 0
        %1009 = vmatprep.subr.bf16.mxu0 0
        %1010 = vmatpush2.bf16.msra.mxu0 0
        %1011 = vmatprep.mubr.bf16.mxu0 0
        %1012 = vmatmul.mubr.bf16.gmra.mxu0 %v876
        %v1013 = vpop.f32.mrf.mxu0
        %v1014 = vadd.f32 0.0, %v1013
        %v1015 = vpop.f32.mrf.mxu0
        %v1016 = vadd.f32 0.0, %v1015
        %v1017 = vpop.f32.mrf.mxu0
        %v1018 = vpop.f32.mrf.mxu0
        %1019 = vdwg.mxu0
        %v1020 = vmax.f32 %v913, %v1014
        %v1021 = vmax.f32 %v915, %v1016
        %v1022 = vld [vmem:[%s738 + $0xa0] sm:$0xff]
        %v1023 = vld [vmem:[%s738 + $0xa8] sm:$0xff]
        %v1024 = vld [vmem:[%s738 + $0xb0] sm:$0xff]
        %v1025 = vld [vmem:[%s738 + $0xb8] sm:$0xff]
        %v1026 = vld [vmem:[%s738 + $0xc0] sm:$0xff]
        %v1027 = vld [vmem:[%s738 + $0xc8] sm:$0xff]
        %v1028 = vld [vmem:[%s738 + $0xd0] sm:$0xff]
        %v1029 = vld [vmem:[%s738 + $0xd8] sm:$0xff]
        %v1030 = vld [vmem:[%s738 + $0xe0] sm:$0xff]
        %v1031 = vld [vmem:[%s738 + $0xe8] sm:$0xff]
        %v1042 = vunpack.c.l.b16 %v1022
        %v1043 = vunpack.c.h.b16 %v1022
        %v1044 = vunpack.c.l.b16 %v1023
        %v1045 = vunpack.c.h.b16 %v1023
        %v1046 = vunpack.c.l.b16 %v1024
        %v1047 = vunpack.c.h.b16 %v1024
        %v1048 = vunpack.c.l.b16 %v1025
        %v1049 = vunpack.c.h.b16 %v1025
        %v1050 = vunpack.c.l.b16 %v1026
        %v1051 = vunpack.c.h.b16 %v1026
        %v1052 = vunpack.c.l.b16 %v1027
        %v1053 = vunpack.c.h.b16 %v1027
        %v1054 = vunpack.c.l.b16 %v1028
        %v1055 = vunpack.c.h.b16 %v1028
        %v1056 = vunpack.c.l.b16 %v1029
        %v1057 = vunpack.c.h.b16 %v1029
        %v1058 = vunpack.c.l.b16 %v1030
        %v1059 = vunpack.c.h.b16 %v1030
        %v1060 = vunpack.c.l.b16 %v1031
        %v1061 = vunpack.c.h.b16 %v1031
        %v1062 = vpack.c.b16 %v1044, %v1042
        %v1063 = vpack.c.b16 %v1045, %v1043
        %v1064 = vpack.c.b16 %v1048, %v1046
        %v1065 = vpack.c.b16 %v1049, %v1047
        %v1066 = vpack.c.b16 %v1052, %v1050
        %v1067 = vpack.c.b16 %v1053, %v1051
        %v1068 = vpack.c.b16 %v1056, %v1054
        %v1069 = vpack.c.b16 %v1057, %v1055
        %v1070 = vpack.c.b16 %v1060, %v1058
        %v1071 = vpack.c.b16 %v1061, %v1059
        %1082 = vmatprep.subr.bf16.mxu0 0
        %1083 = vmatpush1.bf16.msra.mxu0 0
        %1084 = vmatprep.subr.bf16.mxu0 0
        %1085 = vmatpush1.bf16.msra.mxu0 0
        %1086 = vmatprep.subr.bf16.mxu0 0
        %1087 = vmatpush1.bf16.msra.mxu0 0
        %1088 = vmatprep.subr.bf16.mxu0 %v1071
        %1089 = vmatpush1.bf16.msra.mxu0 %v1070
        %1090 = vmatprep.subr.bf16.mxu0 %v1069
        %1091 = vmatpush1.bf16.msra.mxu0 %v1068
        %1092 = vmatprep.subr.bf16.mxu0 %v1067
        %1093 = vmatpush1.bf16.msra.mxu0 %v1066
        %1094 = vmatprep.subr.bf16.mxu0 %v1065
        %1095 = vmatpush1.bf16.msra.mxu0 %v1064
        %1096 = vmatprep.subr.bf16.mxu0 %v1063
        %1097 = vmatpush1.bf16.msra.mxu0 %v1062
        %1098 = vmatprep.subr.bf16.mxu0 0
        %1099 = vmatpush2.bf16.msra.mxu0 0
        %1100 = vmatprep.subr.bf16.mxu0 0
        %1101 = vmatpush2.bf16.msra.mxu0 0
        %1102 = vmatprep.subr.bf16.mxu0 0
        %1103 = vmatpush2.bf16.msra.mxu0 0
        %1104 = vmatprep.subr.bf16.mxu0 0
        %1105 = vmatpush2.bf16.msra.mxu0 0
        %1106 = vmatprep.subr.bf16.mxu0 0
        %1107 = vmatpush2.bf16.msra.mxu0 0
        %1108 = vmatprep.subr.bf16.mxu0 0
        %1109 = vmatpush2.bf16.msra.mxu0 0
        %1110 = vmatprep.subr.bf16.mxu0 0
        %1111 = vmatpush2.bf16.msra.mxu0 0
        %1112 = vmatprep.subr.bf16.mxu0 0
        %1113 = vmatpush2.bf16.msra.mxu0 0
        %1114 = vmatprep.mubr.bf16.mxu0 0
        %1115 = vmatmul.mubr.bf16.gmra.mxu0 %v876
        %v1116 = vpop.f32.mrf.mxu0
        %v1117 = vadd.f32 0.0, %v1116
        %v1118 = vpop.f32.mrf.mxu0
        %v1119 = vadd.f32 0.0, %v1118
        %v1120 = vpop.f32.mrf.mxu0
        %v1121 = vpop.f32.mrf.mxu0
        %1122 = vdwg.mxu0
        %v1123 = vmax.f32 %v1020, %v1117
        %v1124 = vmax.f32 %v1021, %v1119
        %v1125 = vld [vmem:[%s738 + $0xf0] sm:$0xff]
        %v1126 = vld [vmem:[%s738 + $0xf8] sm:$0xff]
        %v1127 = vld [vmem:[%s738 + $0x100] sm:$0xff]
        %v1128 = vld [vmem:[%s738 + $0x108] sm:$0xff]
        %v1129 = vld [vmem:[%s738 + $0x110] sm:$0xff]
        %v1130 = vld [vmem:[%s738 + $0x118] sm:$0xff]
        %v1131 = vld [vmem:[%s738 + $0x120] sm:$0xff]
        %v1132 = vld [vmem:[%s738 + $0x128] sm:$0xff]
        %v1133 = vld [vmem:[%s738 + $0x130] sm:$0xff]
        %v1134 = vld [vmem:[%s738 + $0x138] sm:$0xff]
        %v1145 = vunpack.c.l.b16 %v1125
        %v1146 = vunpack.c.h.b16 %v1125
        %v1147 = vunpack.c.l.b16 %v1126
        %v1148 = vunpack.c.h.b16 %v1126
        %v1149 = vunpack.c.l.b16 %v1127
        %v1150 = vunpack.c.h.b16 %v1127
        %v1151 = vunpack.c.l.b16 %v1128
        %v1152 = vunpack.c.h.b16 %v1128
        %v1153 = vunpack.c.l.b16 %v1129
        %v1154 = vunpack.c.h.b16 %v1129
        %v1155 = vunpack.c.l.b16 %v1130
        %v1156 = vunpack.c.h.b16 %v1130
        %v1157 = vunpack.c.l.b16 %v1131
        %v1158 = vunpack.c.h.b16 %v1131
        %v1159 = vunpack.c.l.b16 %v1132
        %v1160 = vunpack.c.h.b16 %v1132
        %v1161 = vunpack.c.l.b16 %v1133
        %v1162 = vunpack.c.h.b16 %v1133
        %v1163 = vunpack.c.l.b16 %v1134
        %v1164 = vunpack.c.h.b16 %v1134
        %v1165 = vpack.c.b16 %v1147, %v1145
        %v1166 = vpack.c.b16 %v1148, %v1146
        %v1167 = vpack.c.b16 %v1151, %v1149
        %v1168 = vpack.c.b16 %v1152, %v1150
        %v1169 = vpack.c.b16 %v1155, %v1153
        %v1170 = vpack.c.b16 %v1156, %v1154
        %v1171 = vpack.c.b16 %v1159, %v1157
        %v1172 = vpack.c.b16 %v1160, %v1158
        %v1173 = vpack.c.b16 %v1163, %v1161
        %v1174 = vpack.c.b16 %v1164, %v1162
        %1185 = vmatprep.subr.bf16.mxu0 0
        %1186 = vmatpush1.bf16.msra.mxu0 0
        %1187 = vmatprep.subr.bf16.mxu0 0
        %1188 = vmatpush1.bf16.msra.mxu0 0
        %1189 = vmatprep.subr.bf16.mxu0 0
        %1190 = vmatpush1.bf16.msra.mxu0 0
        %1191 = vmatprep.subr.bf16.mxu0 %v1174
        %1192 = vmatpush1.bf16.msra.mxu0 %v1173
        %1193 = vmatprep.subr.bf16.mxu0 %v1172
        %1194 = vmatpush1.bf16.msra.mxu0 %v1171
        %1195 = vmatprep.subr.bf16.mxu0 %v1170
        %1196 = vmatpush1.bf16.msra.mxu0 %v1169
        %1197 = vmatprep.subr.bf16.mxu0 %v1168
        %1198 = vmatpush1.bf16.msra.mxu0 %v1167
        %1199 = vmatprep.subr.bf16.mxu0 %v1166
        %1200 = vmatpush1.bf16.msra.mxu0 %v1165
        %1201 = vmatprep.subr.bf16.mxu0 0
        %1202 = vmatpush2.bf16.msra.mxu0 0
        %1203 = vmatprep.subr.bf16.mxu0 0
        %1204 = vmatpush2.bf16.msra.mxu0 0
        %1205 = vmatprep.subr.bf16.mxu0 0
        %1206 = vmatpush2.bf16.msra.mxu0 0
        %1207 = vmatprep.subr.bf16.mxu0 0
        %1208 = vmatpush2.bf16.msra.mxu0 0
        %1209 = vmatprep.subr.bf16.mxu0 0
        %1210 = vmatpush2.bf16.msra.mxu0 0
        %1211 = vmatprep.subr.bf16.mxu0 0
        %1212 = vmatpush2.bf16.msra.mxu0 0
        %1213 = vmatprep.subr.bf16.mxu0 0
        %1214 = vmatpush2.bf16.msra.mxu0 0
        %1215 = vmatprep.subr.bf16.mxu0 0
        %1216 = vmatpush2.bf16.msra.mxu0 0
        %1217 = vmatprep.mubr.bf16.mxu0 0
        %1218 = vmatmul.mubr.bf16.gmra.mxu0 %v876
        %v1219 = vpop.f32.mrf.mxu0
        %v1220 = vadd.f32 0.0, %v1219
        %v1221 = vpop.f32.mrf.mxu0
        %v1222 = vadd.f32 0.0, %v1221
        %v1223 = vpop.f32.mrf.mxu0
        %v1224 = vpop.f32.mrf.mxu0
        %1225 = vdwg.mxu0
        %v1226 = vmax.f32 %v1123, %v1220
        %v1227 = vmax.f32 %v1124, %v1222
        %v1228 = vld [vmem:[%s2] sm:$0xff]
        %1230 = vset.pattern.permute.xlu0 0
        %1231 = vperm.xlu0 %1230, %v1228
        %v1232 = vpop.permute.xlu0 %1231
        %v1234 = vadd.f32 %v1226, %v1232
        %v1235 = vadd.f32 %v1227, %v1232
        %v1236 = vmax.f32 %v1234, 0.0
        %v1237 = vmax.f32 %v1235, 0.0
        %1240 = vrot.lane.b32.xlu0 %v1236, 2
        %v1241 = vpop.permute.xlu0 %1240
        %1242 = vrot.lane.b32.xlu0 %v1237, 2
        %v1243 = vpop.permute.xlu0 %1242
        %vm1244 = vcmask 15360
        %v1245 = vsel %vm1244, %v1241, %v1243
        %vm1249 = vcmask 1047568
        %1250 = vst.msk [vmem:[#allocation2] sm:$0xff] %vm1249, %v1241
        %1251 = vst [vmem:[#allocation2 + $0x8] sm:$0xff] %v1245
        %1252 = vst.msk [vmem:[#allocation2 + $0x10] sm:$0xff] %vm1244, %v1243
        %1253 = vrot.lane.b32.xlu0 %v1236, 1
        %v1254 = vpop.permute.xlu0 %1253
        %1255 = vrot.lane.b32.xlu0 %v1237, 1
        %v1256 = vpop.permute.xlu0 %1255
        %vm1257 = vcmask 7168
        %v1258 = vsel %vm1257, %v1254, %v1256
        %vm1262 = vcmask 1047560
        %1263 = vst.msk [vmem:[#allocation2 + $0x18] sm:$0xff] %vm1262, %v1254
        %1264 = vst [vmem:[#allocation2 + $0x20] sm:$0xff] %v1258
        %1265 = vst.msk [vmem:[#allocation2 + $0x28] sm:$0xff] %vm1257, %v1256
        %1266 = vst [vmem:[#allocation2 + $0x30] sm:$0xff] %v1236
        %1267 = vst [vmem:[#allocation2 + $0x38] sm:$0xff] %v1237
        %vm1268 = vcmask 15368
        %1269 = vst.msk [vmem:[#allocation2] sm:$0xff] %vm1268, 0.0
        %1270 = vst.msk [vmem:[#allocation2 + $0x40] sm:$0xff] %vm1257, 0.0
        %v1271 = vld [vmem:[#allocation2] sm:$0xff]
        %v1272 = vld [vmem:[#allocation2 + $0x8] sm:$0xff]
        %v1273 = vld [vmem:[#allocation2 + $0x10] sm:$0xff]
        %v1274 = vld [vmem:[#allocation2 + $0x18] sm:$0xff]
        %v1275 = vld [vmem:[#allocation2 + $0x20] sm:$0xff]
        %v1276 = vld [vmem:[#allocation2 + $0x28] sm:$0xff]
        %v1277 = vld [vmem:[#allocation2 + $0x30] sm:$0xff]
        %v1278 = vld [vmem:[#allocation2 + $0x38] sm:$0xff]
        %v1279 = vld [vmem:[#allocation2 + $0x40] sm:$0xff]
        %v1280 = vpack.c.bf16 %v1274, %v1271
        %v1281 = vpack.c.bf16 %v1275, %v1272
        %v1282 = vpack.c.bf16 %v1276, %v1273
        %v1283 = vpack.c.bf16 %v1277, %v1277
        %v1284 = vpack.c.bf16 %v1278, %v1278
        %v1285 = vpack.c.bf16 %v1279, %v1279
        %v1286 = vld [vmem:[%s3] sm:$0xf]
        %v1287 = vld [vmem:[%s4] sm:$0xff]
        %1289 = vset.pattern.permute.xlu0 0
        %1290 = vperm.xlu0 %1289, %v1287
        %v1291 = vpop.permute.xlu0 %1290
        %1299 = vrot.lane.b32.xlu0 %v1280, 127
        %v1300 = vpop.permute.xlu0 %1299
        %1301 = vrot.lane.b32.xlu0 %v1281, 127
        %v1302 = vpop.permute.xlu0 %1301
        %1303 = vrot.lane.b32.xlu0 %v1282, 127
        %v1304 = vpop.permute.xlu0 %1303
        %1305 = vrot.lane.b32.xlu0 %v1283, 127
        %v1306 = vpop.permute.xlu0 %1305
        %1307 = vrot.lane.b32.xlu0 %v1284, 127
        %v1308 = vpop.permute.xlu0 %1307
        %1309 = vrot.lane.b32.xlu0 %v1285, 127
        %v1310 = vpop.permute.xlu0 %1309
        %vm1311 = vcmask 1039360
        %v1312 = vsel %vm1311, %v1300, %v1302
        %v1313 = vsel %vm1311, %v1302, %v1304
        %v1314 = vsel %vm1311, %v1306, %v1308
        %v1315 = vsel %vm1311, %v1308, %v1310
        %vm1318 = vcmask 195584
        %v1320 = vsel %vm1318, %v1286, 0
        %vm1322 = vcmask 1043456
        %v1324 = vsel %vm1322, %v1314, 0
        %v1327 = vsel %vm1322, %v1315, 0
        %1329 = vmatprep.subr.bf16.mxu0 0
        %1330 = vmatpush1.bf16.msra.mxu0 0
        %1331 = vmatprep.subr.bf16.mxu0 0
        %1332 = vmatpush1.bf16.msra.mxu0 0
        %1333 = vmatprep.subr.bf16.mxu0 0
        %1334 = vmatpush1.bf16.msra.mxu0 0
        %1335 = vmatprep.subr.bf16.mxu0 0
        %1336 = vmatpush1.bf16.msra.mxu0 0
        %1337 = vmatprep.subr.bf16.mxu0 0
        %1338 = vmatpush1.bf16.msra.mxu0 0
        %1339 = vmatprep.subr.bf16.mxu0 0
        %1340 = vmatpush1.bf16.msra.mxu0 0
        %1341 = vmatprep.subr.bf16.mxu0 %v1327
        %1342 = vmatpush1.bf16.msra.mxu0 %v1324
        %1343 = vmatprep.subr.bf16.mxu0 %v1313
        %1344 = vmatpush1.bf16.msra.mxu0 %v1312
        %1345 = vmatprep.subr.bf16.mxu0 0
        %1346 = vmatpush2.bf16.msra.mxu0 0
        %1347 = vmatprep.subr.bf16.mxu0 0
        %1348 = vmatpush2.bf16.msra.mxu0 0
        %1349 = vmatprep.subr.bf16.mxu0 0
        %1350 = vmatpush2.bf16.msra.mxu0 0
        %1351 = vmatprep.subr.bf16.mxu0 0
        %1352 = vmatpush2.bf16.msra.mxu0 0
        %1353 = vmatprep.subr.bf16.mxu0 0
        %1354 = vmatpush2.bf16.msra.mxu0 0
        %1355 = vmatprep.subr.bf16.mxu0 0
        %1356 = vmatpush2.bf16.msra.mxu0 0
        %1357 = vmatprep.subr.bf16.mxu0 0
        %1358 = vmatpush2.bf16.msra.mxu0 0
        %1359 = vmatprep.subr.bf16.mxu0 0
        %1360 = vmatpush2.bf16.msra.mxu0 0
        %1361 = vmatprep.mubr.bf16.mxu0 0
        %1362 = vmatmul.mubr.bf16.gmra.mxu0 %v1320
        %v1363 = vpop.f32.mrf.mxu0
        %v1364 = vadd.f32 %v1291, %v1363
        %v1365 = vpop.f32.mrf.mxu0
        %v1366 = vadd.f32 %v1291, %v1365
        %v1367 = vpop.f32.mrf.mxu0
        %v1368 = vpop.f32.mrf.mxu0
        %1369 = vdwg.mxu0
        %v1370 = vmax.f32 %v1364, 0.0
        %v1371 = vmax.f32 %v1366, 0.0
        %1374 = vrot.lane.b32.xlu0 %v1370, 2
        %v1375 = vpop.permute.xlu0 %1374
        %1376 = vrot.lane.b32.xlu0 %v1371, 2
        %v1377 = vpop.permute.xlu0 %1376
        %v1378 = vsel %vm1244, %v1375, %v1377
        %1382 = vst.msk [vmem:[#allocation2] sm:$0xff] %vm1249, %v1375
        %1383 = vst [vmem:[#allocation2 + $0x8] sm:$0xff] %v1378
        %1384 = vst.msk [vmem:[#allocation2 + $0x10] sm:$0xff] %vm1244, %v1377
        %1385 = vrot.lane.b32.xlu0 %v1370, 1
        %v1386 = vpop.permute.xlu0 %1385
        %1387 = vrot.lane.b32.xlu0 %v1371, 1
        %v1388 = vpop.permute.xlu0 %1387
        %v1389 = vsel %vm1257, %v1386, %v1388
        %1393 = vst.msk [vmem:[#allocation2 + $0x18] sm:$0xff] %vm1262, %v1386
        %1394 = vst [vmem:[#allocation2 + $0x20] sm:$0xff] %v1389
        %1395 = vst.msk [vmem:[#allocation2 + $0x28] sm:$0xff] %vm1257, %v1388
        %1396 = vst [vmem:[#allocation2 + $0x30] sm:$0xff] %v1370
        %1397 = vst [vmem:[#allocation2 + $0x38] sm:$0xff] %v1371
        %1398 = vst.msk [vmem:[#allocation2] sm:$0xff] %vm1268, 0.0
        %1399 = vst.msk [vmem:[#allocation2 + $0x40] sm:$0xff] %vm1257, 0.0
        %v1400 = vld [vmem:[#allocation2] sm:$0xff]
        %v1401 = vld [vmem:[#allocation2 + $0x8] sm:$0xff]
        %v1402 = vld [vmem:[#allocation2 + $0x10] sm:$0xff]
        %v1403 = vld [vmem:[#allocation2 + $0x18] sm:$0xff]
        %v1404 = vld [vmem:[#allocation2 + $0x20] sm:$0xff]
        %v1405 = vld [vmem:[#allocation2 + $0x28] sm:$0xff]
        %v1406 = vld [vmem:[#allocation2 + $0x30] sm:$0xff]
        %v1407 = vld [vmem:[#allocation2 + $0x38] sm:$0xff]
        %v1408 = vld [vmem:[#allocation2 + $0x40] sm:$0xff]
        %v1409 = vpack.c.bf16 %v1403, %v1400
        %v1410 = vpack.c.bf16 %v1404, %v1401
        %v1411 = vpack.c.bf16 %v1405, %v1402
        %v1412 = vpack.c.bf16 %v1406, %v1406
        %v1413 = vpack.c.bf16 %v1407, %v1407
        %v1414 = vpack.c.bf16 %v1408, %v1408
        %v1415 = vld [vmem:[%s5] sm:$0xf]
        %v1416 = vld [vmem:[%s6] sm:$0xff]
        %1418 = vset.pattern.permute.xlu0 0
        %1419 = vperm.xlu0 %1418, %v1416
        %v1420 = vpop.permute.xlu0 %1419
        %1428 = vrot.lane.b32.xlu0 %v1409, 127
        %v1429 = vpop.permute.xlu0 %1428
        %1430 = vrot.lane.b32.xlu0 %v1410, 127
        %v1431 = vpop.permute.xlu0 %1430
        %1432 = vrot.lane.b32.xlu0 %v1411, 127
        %v1433 = vpop.permute.xlu0 %1432
        %1434 = vrot.lane.b32.xlu0 %v1412, 127
        %v1435 = vpop.permute.xlu0 %1434
        %1436 = vrot.lane.b32.xlu0 %v1413, 127
        %v1437 = vpop.permute.xlu0 %1436
        %1438 = vrot.lane.b32.xlu0 %v1414, 127
        %v1439 = vpop.permute.xlu0 %1438
        %v1440 = vsel %vm1311, %v1429, %v1431
        %v1441 = vsel %vm1311, %v1431, %v1433
        %v1442 = vsel %vm1311, %v1435, %v1437
        %v1443 = vsel %vm1311, %v1437, %v1439
        %v1447 = vsel %vm1318, %v1415, 0
        %v1450 = vsel %vm1322, %v1442, 0
        %v1453 = vsel %vm1322, %v1443, 0
        %1455 = vmatprep.subr.bf16.mxu0 0
        %1456 = vmatpush1.bf16.msra.mxu0 0
        %1457 = vmatprep.subr.bf16.mxu0 0
        %1458 = vmatpush1.bf16.msra.mxu0 0
        %1459 = vmatprep.subr.bf16.mxu0 0
        %1460 = vmatpush1.bf16.msra.mxu0 0
        %1461 = vmatprep.subr.bf16.mxu0 0
        %1462 = vmatpush1.bf16.msra.mxu0 0
        %1463 = vmatprep.subr.bf16.mxu0 0
        %1464 = vmatpush1.bf16.msra.mxu0 0
        %1465 = vmatprep.subr.bf16.mxu0 0
        %1466 = vmatpush1.bf16.msra.mxu0 0
        %1467 = vmatprep.subr.bf16.mxu0 %v1453
        %1468 = vmatpush1.bf16.msra.mxu0 %v1450
        %1469 = vmatprep.subr.bf16.mxu0 %v1441
        %1470 = vmatpush1.bf16.msra.mxu0 %v1440
        %1471 = vmatprep.subr.bf16.mxu0 0
        %1472 = vmatpush2.bf16.msra.mxu0 0
        %1473 = vmatprep.subr.bf16.mxu0 0
        %1474 = vmatpush2.bf16.msra.mxu0 0
        %1475 = vmatprep.subr.bf16.mxu0 0
        %1476 = vmatpush2.bf16.msra.mxu0 0
        %1477 = vmatprep.subr.bf16.mxu0 0
        %1478 = vmatpush2.bf16.msra.mxu0 0
        %1479 = vmatprep.subr.bf16.mxu0 0
        %1480 = vmatpush2.bf16.msra.mxu0 0
        %1481 = vmatprep.subr.bf16.mxu0 0
        %1482 = vmatpush2.bf16.msra.mxu0 0
        %1483 = vmatprep.subr.bf16.mxu0 0
        %1484 = vmatpush2.bf16.msra.mxu0 0
        %1485 = vmatprep.subr.bf16.mxu0 0
        %1486 = vmatpush2.bf16.msra.mxu0 0
        %1487 = vmatprep.mubr.bf16.mxu0 0
        %1488 = vmatmul.mubr.bf16.gmra.mxu0 %v1447
        %v1489 = vpop.f32.mrf.mxu0
        %v1490 = vadd.f32 %v1420, %v1489
        %v1491 = vpop.f32.mrf.mxu0
        %v1492 = vadd.f32 %v1420, %v1491
        %v1493 = vpop.f32.mrf.mxu0
        %v1494 = vpop.f32.mrf.mxu0
        %1495 = vdwg.mxu0
        %v1496 = vmax.f32 %v1490, 0.0
        %v1497 = vmax.f32 %v1492, 0.0
        %1498 = vst [vmem:[#allocation2] sm:$0xff] %v1496
        %1499 = vst [vmem:[#allocation2 + $0x8] sm:$0xff] %v1497
        %v1500 = vld [vmem:[#allocation2] sm:$0xff]
        %v1501 = vld [vmem:[#allocation2 + $0x8] sm:$0xff]
        %1504 = vrot.lane.b32.xlu0 %v1500, 127
        %v1505 = vpop.permute.xlu0 %1504
        %1506 = vrot.lane.b32.xlu0 %v1501, 127
        %v1507 = vpop.permute.xlu0 %1506
        %vm1508 = vcmask 1039360
        %v1509 = vsel %vm1508, %v1505, %v1507
        %v1512 = vmax.f32 %v1500, %v1509
        %v1513 = vmax.f32 %v1501, %v1507
        %1514 = vrot.lane.b32.xlu0 %v1500, 126
        %v1515 = vpop.permute.xlu0 %1514
        %1516 = vrot.lane.b32.xlu0 %v1501, 126
        %v1517 = vpop.permute.xlu0 %1516
        %vm1518 = vcmask 1031168
        %v1519 = vsel %vm1518, %v1515, %v1517
        %v1522 = vmax.f32 %v1512, %v1519
        %v1523 = vmax.f32 %v1513, %v1517
        %1524 = vrot.lane.b32.xlu0 %v1500, 125
        %v1525 = vpop.permute.xlu0 %1524
        %1526 = vrot.lane.b32.xlu0 %v1501, 125
        %v1527 = vpop.permute.xlu0 %1526
        %vm1528 = vcmask 1022976
        %v1529 = vsel %vm1528, %v1525, %v1527
        %v1532 = vmax.f32 %v1522, %v1529
        %v1533 = vmax.f32 %v1523, %v1527
        %v1534 = vpack.c.bf16 %v1532, %v1532
        %v1535 = vpack.c.bf16 %v1533, %v1533
        %v1536 = vld [vmem:[%s23] sm:$0xf]
        %v1537 = vld [vmem:[%s23 + $0x4] sm:$0xf]
        %v1538 = vld [vmem:[%s23 + $0x8] sm:$0xf]
        %v1539 = vld [vmem:[%s23 + $0xc] sm:$0xf]
        %v1540 = vld [vmem:[%s23 + $0x10] sm:$0xf]
        %v1541 = vld [vmem:[%s23 + $0x14] sm:$0xf]
        %v1542 = vld [vmem:[%s23 + $0x18] sm:$0xf]
        %v1543 = vld [vmem:[%s23 + $0x1c] sm:$0xf]
        %v1544 = vld [vmem:[%s23 + $0x20] sm:$0xf]
        %v1545 = vld [vmem:[%s23 + $0x24] sm:$0xf]
        %v1546 = vld [vmem:[%s23 + $0x28] sm:$0xf]
        %v1547 = vld [vmem:[%s23 + $0x2c] sm:$0xf]
        %v1548 = vld [vmem:[%s23 + $0x30] sm:$0xf]
        %v1549 = vld [vmem:[%s23 + $0x34] sm:$0xf]
        %v1550 = vld [vmem:[%s23 + $0x38] sm:$0xf]
        %v1551 = vld [vmem:[%s23 + $0x3c] sm:$0xf]
        %v1552 = vld [vmem:[%s23 + $0x40] sm:$0xf]
        %v1553 = vld [vmem:[%s23 + $0x44] sm:$0xf]
        %v1554 = vld [vmem:[%s23 + $0x48] sm:$0xf]
        %v1555 = vld [vmem:[%s23 + $0x4c] sm:$0xf]
        %v1556 = vld [vmem:[%s23 + $0x50] sm:$0xf]
        %v1557 = vld [vmem:[%s23 + $0x54] sm:$0xf]
        %v1558 = vld [vmem:[%s23 + $0x58] sm:$0xf]
        %v1559 = vld [vmem:[%s23 + $0x5c] sm:$0xf]
        %v1560 = vld [vmem:[%s23 + $0x60] sm:$0xf]
        %v1561 = vld [vmem:[%s23 + $0x64] sm:$0xf]
        %v1562 = vld [vmem:[%s23 + $0x68] sm:$0xf]
        %v1563 = vld [vmem:[%s23 + $0x6c] sm:$0xf]
        %v1564 = vld [vmem:[%s23 + $0x70] sm:$0xf]
        %v1565 = vld [vmem:[%s23 + $0x74] sm:$0xf]
        %v1566 = vld [vmem:[%s23 + $0x78] sm:$0xf]
        %v1567 = vld [vmem:[%s23 + $0x7c] sm:$0x7]
        %v1600 = vunpack.c.l.b16 %v1536
        %v1601 = vunpack.c.l.b16 %v1537
        %v1602 = vunpack.c.l.b16 %v1538
        %v1603 = vunpack.c.l.b16 %v1539
        %v1604 = vunpack.c.l.b16 %v1540
        %v1605 = vunpack.c.l.b16 %v1541
        %v1606 = vunpack.c.l.b16 %v1542
        %v1607 = vunpack.c.l.b16 %v1543
        %v1608 = vunpack.c.l.b16 %v1544
        %v1609 = vunpack.c.l.b16 %v1545
        %v1610 = vunpack.c.l.b16 %v1546
        %v1611 = vunpack.c.l.b16 %v1547
        %v1612 = vunpack.c.l.b16 %v1548
        %v1613 = vunpack.c.l.b16 %v1549
        %v1614 = vunpack.c.l.b16 %v1550
        %v1615 = vunpack.c.l.b16 %v1551
        %v1616 = vunpack.c.l.b16 %v1552
        %v1617 = vunpack.c.l.b16 %v1553
        %v1618 = vunpack.c.l.b16 %v1554
        %v1619 = vunpack.c.l.b16 %v1555
        %v1620 = vunpack.c.l.b16 %v1556
        %v1621 = vunpack.c.l.b16 %v1557
        %v1622 = vunpack.c.l.b16 %v1558
        %v1623 = vunpack.c.l.b16 %v1559
        %v1624 = vunpack.c.l.b16 %v1560
        %v1625 = vunpack.c.l.b16 %v1561
        %v1626 = vunpack.c.l.b16 %v1562
        %v1627 = vunpack.c.l.b16 %v1563
        %v1628 = vunpack.c.l.b16 %v1564
        %v1629 = vunpack.c.l.b16 %v1565
        %v1630 = vunpack.c.l.b16 %v1566
        %v1631 = vunpack.c.l.b16 %v1567
        %v1632 = vpack.c.b16 %v1601, %v1600
        %v1633 = vpack.c.b16 %v1603, %v1602
        %v1634 = vpack.c.b16 %v1605, %v1604
        %v1635 = vpack.c.b16 %v1607, %v1606
        %v1636 = vpack.c.b16 %v1609, %v1608
        %v1637 = vpack.c.b16 %v1611, %v1610
        %v1638 = vpack.c.b16 %v1613, %v1612
        %v1639 = vpack.c.b16 %v1615, %v1614
        %v1640 = vpack.c.b16 %v1617, %v1616
        %v1641 = vpack.c.b16 %v1619, %v1618
        %v1642 = vpack.c.b16 %v1621, %v1620
        %v1643 = vpack.c.b16 %v1623, %v1622
        %v1644 = vpack.c.b16 %v1625, %v1624
        %v1645 = vpack.c.b16 %v1627, %v1626
        %v1646 = vpack.c.b16 %v1629, %v1628
        %v1647 = vpack.c.b16 %v1631, %v1630
        %v1664 = vsel %vm1528, %v1535, 0
        %vm1666 = vcmask 1045504
        %vm1667 = vcmask 1046528
        %v1668 = vsel %vm1666, 4294967295, 65535
        %v1669 = vsel %vm1667, %v1668, 0
        %v1671 = vand.u32 %v1647, %v1669
        %1673 = vmatprep.subr.bf16.mxu0 0
        %1674 = vmatpush1.bf16.msra.mxu0 %v1639
        %1675 = vmatprep.subr.bf16.mxu0 0
        %1676 = vmatpush1.bf16.msra.mxu0 %v1638
        %1677 = vmatprep.subr.bf16.mxu0 0
        %1678 = vmatpush1.bf16.msra.mxu0 %v1637
        %1679 = vmatprep.subr.bf16.mxu0 0
        %1680 = vmatpush1.bf16.msra.mxu0 %v1636
        %1681 = vmatprep.subr.bf16.mxu0 0
        %1682 = vmatpush1.bf16.msra.mxu0 %v1635
        %1683 = vmatprep.subr.bf16.mxu0 0
        %1684 = vmatpush1.bf16.msra.mxu0 %v1634
        %1685 = vmatprep.subr.bf16.mxu0 0
        %1686 = vmatpush1.bf16.msra.mxu0 %v1633
        %1687 = vmatprep.subr.bf16.mxu0 0
        %1688 = vmatpush1.bf16.msra.mxu0 %v1632
        %1689 = vmatprep.subr.bf16.mxu0 0
        %1690 = vmatpush2.bf16.msra.mxu0 %v1671
        %1691 = vmatprep.subr.bf16.mxu0 0
        %1692 = vmatpush2.bf16.msra.mxu0 %v1646
        %1693 = vmatprep.subr.bf16.mxu0 0
        %1694 = vmatpush2.bf16.msra.mxu0 %v1645
        %1695 = vmatprep.subr.bf16.mxu0 0
        %1696 = vmatpush2.bf16.msra.mxu0 %v1644
        %1697 = vmatprep.subr.bf16.mxu0 0
        %1698 = vmatpush2.bf16.msra.mxu0 %v1643
        %1699 = vmatprep.subr.bf16.mxu0 0
        %1700 = vmatpush2.bf16.msra.mxu0 %v1642
        %1701 = vmatprep.subr.bf16.mxu0 0
        %1702 = vmatpush2.bf16.msra.mxu0 %v1641
        %1703 = vmatprep.subr.bf16.mxu0 0
        %1704 = vmatpush2.bf16.msra.mxu0 %v1640
        %1705 = vmatprep.mubr.bf16.mxu0 %v1664
        %1706 = vmatmul.mubr.bf16.gmra.mxu0 %v1534
        %v1707 = vpop.f32.mrf.mxu0
        %v1708 = vadd.f32 0.0, %v1707
        %v1709 = vpop.f32.mrf.mxu0
        %v1710 = vpop.f32.mrf.mxu0
        %v1711 = vpop.f32.mrf.mxu0
        %1712 = vdwg.mxu0
        %1714 = vrot.lane.b32.xlu0 %v1708, 2
        %v1715 = vpop.permute.xlu0 %1714
        %vm1717 = vcmask 539664
        %1718 = vst.msk [vmem:[#allocation2] sm:$0xff] %vm1717, %v1715
        %1719 = vrot.lane.b32.xlu0 %v1708, 1
        %v1720 = vpop.permute.xlu0 %1719
        %vm1722 = vcmask 531464
        %1723 = vst.msk [vmem:[#allocation2 + $0x18] sm:$0xff] %vm1722, %v1720
        %vm1724 = vcmask 523264
        %1725 = vst.msk [vmem:[#allocation2 + $0x30] sm:$0xff] %vm1724, %v1708
        %1726 = vst.msk [vmem:[#allocation2] sm:$0xff] %vm1268, 0.0
        %vm1727 = vcmask 531968
        %1728 = vst.msk [vmem:[#allocation2 + $0x30] sm:$0xff] %vm1727, 0.0
        %v1729 = vld [vmem:[#allocation2] sm:$0xff]
        %v1730 = vld [vmem:[#allocation2 + $0x18] sm:$0xff]
        %v1731 = vld [vmem:[#allocation2 + $0x30] sm:$0xff]
        %v1732 = vpack.c.bf16 %v1730, %v1729
        %v1733 = vpack.c.bf16 %v1731, %v1731
        %v1734 = vld [vmem:[%s7] sm:$0xf]
        %v1735 = vld [vmem:[%s7 + $0x4] sm:$0xf]
        %v1736 = vld [vmem:[%s8] sm:$0xff]
        %v1737 = vld [vmem:[%s8 + $0x8] sm:$0xff]
        %1739 = vset.pattern.permute.xlu0 0
        %1740 = vperm.xlu0 %1739, %v1736
        %v1741 = vpop.permute.xlu0 %1740
        %1744 = vset.pattern.permute.xlu0 0
        %1745 = vperm.xlu0 %1744, %v1737
        %v1746 = vpop.permute.xlu0 %1745
        %v1750 = vunpack.c.l.b16 %v1734
        %v1751 = vunpack.c.l.b16 %v1735
        %v1752 = vpack.c.b16 %v1751, %v1750
        %1755 = vrot.lane.b32.xlu0 %v1732, 127
        %v1756 = vpop.permute.xlu0 %1755
        %1757 = vrot.lane.b32.xlu0 %v1733, 127
        %v1758 = vpop.permute.xlu0 %1757
        %v1761 = vsel %vm1318, %v1752, 0
        %v1764 = vsel %vm1322, %v1758, 0
        %1766 = vmatprep.subr.bf16.mxu0 0
        %1767 = vmatpush1.bf16.msra.mxu0 0
        %1768 = vmatprep.subr.bf16.mxu0 0
        %1769 = vmatpush1.bf16.msra.mxu0 0
        %1770 = vmatprep.subr.bf16.mxu0 0
        %1771 = vmatpush1.bf16.msra.mxu0 0
        %1772 = vmatprep.subr.bf16.mxu0 0
        %1773 = vmatpush1.bf16.msra.mxu0 0
        %1774 = vmatprep.subr.bf16.mxu0 0
        %1775 = vmatpush1.bf16.msra.mxu0 0
        %1776 = vmatprep.subr.bf16.mxu0 0
        %1777 = vmatpush1.bf16.msra.mxu0 0
        %1778 = vmatprep.subr.bf16.mxu0 0
        %1779 = vmatpush1.bf16.msra.mxu0 %v1764
        %1780 = vmatprep.subr.bf16.mxu0 0
        %1781 = vmatpush1.bf16.msra.mxu0 %v1756
        %1782 = vmatprep.subr.bf16.mxu0 0
        %1783 = vmatpush2.bf16.msra.mxu0 0
        %1784 = vmatprep.subr.bf16.mxu0 0
        %1785 = vmatpush2.bf16.msra.mxu0 0
        %1786 = vmatprep.subr.bf16.mxu0 0
        %1787 = vmatpush2.bf16.msra.mxu0 0
        %1788 = vmatprep.subr.bf16.mxu0 0
        %1789 = vmatpush2.bf16.msra.mxu0 0
        %1790 = vmatprep.subr.bf16.mxu0 0
        %1791 = vmatpush2.bf16.msra.mxu0 0
        %1792 = vmatprep.subr.bf16.mxu0 0
        %1793 = vmatpush2.bf16.msra.mxu0 0
        %1794 = vmatprep.subr.bf16.mxu0 0
        %1795 = vmatpush2.bf16.msra.mxu0 0
        %1796 = vmatprep.subr.bf16.mxu0 0
        %1797 = vmatpush2.bf16.msra.mxu0 0
        %1798 = vmatprep.mubr.bf16.mxu0 0
        %1799 = vmatmul.mubr.bf16.gmra.mxu0 %v1761
        %v1800 = vpop.f32.mrf.mxu0
        %v1801 = vadd.f32 %v1741, %v1800
        %v1802 = vpop.f32.mrf.mxu0
        %v1803 = vpop.f32.mrf.mxu0
        %v1804 = vadd.f32 %v1746, %v1803
        %v1805 = vpop.f32.mrf.mxu0
        %1806 = vdwg.mxu0
        %v1807 = vmax.f32 %v1801, 0.0
        %v1808 = vmax.f32 %v1804, 0.0
        %1811 = vrot.lane.b32.xlu0 %v1807, 2
        %v1812 = vpop.permute.xlu0 %1811
        %1813 = vrot.lane.b32.xlu0 %v1808, 2
        %v1814 = vpop.permute.xlu0 %1813
        %1817 = vst.msk [vmem:[#allocation2] sm:$0xff] %vm1717, %v1812
        %1818 = vst.msk [vmem:[#allocation2 + $0x18] sm:$0xff] %vm1717, %v1814
        %1819 = vrot.lane.b32.xlu0 %v1807, 1
        %v1820 = vpop.permute.xlu0 %1819
        %1821 = vrot.lane.b32.xlu0 %v1808, 1
        %v1822 = vpop.permute.xlu0 %1821
        %1825 = vst.msk [vmem:[#allocation2 + $0x30] sm:$0xff] %vm1722, %v1820
        %1826 = vst.msk [vmem:[#allocation2 + $0x48] sm:$0xff] %vm1722, %v1822
        %1827 = vst.msk [vmem:[#allocation2 + $0x60] sm:$0xff] %vm1724, %v1807
        %1828 = vst.msk [vmem:[#allocation2 + $0x78] sm:$0xff] %vm1724, %v1808
        %1829 = vst.msk [vmem:[#allocation2] sm:$0xff] %vm1268, 0.0
        %1830 = vst.msk [vmem:[#allocation2 + $0x18] sm:$0xff] %vm1268, 0.0
        %1831 = vst.msk [vmem:[#allocation2 + $0x60] sm:$0xff] %vm1727, 0.0
        %1832 = vst.msk [vmem:[#allocation2 + $0x78] sm:$0xff] %vm1727, 0.0
        %v1833 = vld [vmem:[#allocation2] sm:$0xff]
        %v1834 = vld [vmem:[#allocation2 + $0x18] sm:$0xff]
        %v1835 = vld [vmem:[#allocation2 + $0x30] sm:$0xff]
        %v1836 = vld [vmem:[#allocation2 + $0x48] sm:$0xff]
        %v1837 = vld [vmem:[#allocation2 + $0x60] sm:$0xff]
        %v1838 = vld [vmem:[#allocation2 + $0x78] sm:$0xff]
        %v1839 = vpack.c.bf16 %v1834, %v1833
        %v1840 = vpack.c.bf16 %v1836, %v1835
        %v1841 = vpack.c.bf16 %v1838, %v1837
        %v1842 = vld [vmem:[%s9] sm:$0xf]
        %v1843 = vld [vmem:[%s9 + $0x4] sm:$0xf]
        %v1844 = vld [vmem:[%s10] sm:$0xff]
        %v1845 = vld [vmem:[%s10 + $0x8] sm:$0xff]
        %1847 = vset.pattern.permute.xlu0 0
        %1848 = vperm.xlu0 %1847, %v1844
        %v1849 = vpop.permute.xlu0 %1848
        %1852 = vset.pattern.permute.xlu0 0
        %1853 = vperm.xlu0 %1852, %v1845
        %v1854 = vpop.permute.xlu0 %1853
        %v1858 = vunpack.c.l.b16 %v1842
        %v1859 = vunpack.c.l.b16 %v1843
        %v1860 = vpack.c.b16 %v1859, %v1858
        %1864 = vrot.lane.b32.xlu0 %v1839, 127
        %v1865 = vpop.permute.xlu0 %1864
        %1866 = vrot.lane.b32.xlu0 %v1840, 127
        %v1867 = vpop.permute.xlu0 %1866
        %1868 = vrot.lane.b32.xlu0 %v1841, 127
        %v1869 = vpop.permute.xlu0 %1868
        %vm1873 = vcmask 392192
        %v1875 = vsel %vm1873, %v1860, 0
        %1877 = vmatprep.subr.bf16.mxu0 0
        %1878 = vmatpush1.bf16.msra.mxu0 0
        %1879 = vmatprep.subr.bf16.mxu0 0
        %1880 = vmatpush1.bf16.msra.mxu0 0
        %1881 = vmatprep.subr.bf16.mxu0 0
        %1882 = vmatpush1.bf16.msra.mxu0 0
        %1883 = vmatprep.subr.bf16.mxu0 0
        %1884 = vmatpush1.bf16.msra.mxu0 0
        %1885 = vmatprep.subr.bf16.mxu0 0
        %1886 = vmatpush1.bf16.msra.mxu0 0
        %1887 = vmatprep.subr.bf16.mxu0 0
        %1888 = vmatpush1.bf16.msra.mxu0 %v1869
        %1889 = vmatprep.subr.bf16.mxu0 0
        %1890 = vmatpush1.bf16.msra.mxu0 %v1867
        %1891 = vmatprep.subr.bf16.mxu0 0
        %1892 = vmatpush1.bf16.msra.mxu0 %v1865
        %1893 = vmatprep.subr.bf16.mxu0 0
        %1894 = vmatpush2.bf16.msra.mxu0 0
        %1895 = vmatprep.subr.bf16.mxu0 0
        %1896 = vmatpush2.bf16.msra.mxu0 0
        %1897 = vmatprep.subr.bf16.mxu0 0
        %1898 = vmatpush2.bf16.msra.mxu0 0
        %1899 = vmatprep.subr.bf16.mxu0 0
        %1900 = vmatpush2.bf16.msra.mxu0 0
        %1901 = vmatprep.subr.bf16.mxu0 0
        %1902 = vmatpush2.bf16.msra.mxu0 0
        %1903 = vmatprep.subr.bf16.mxu0 0
        %1904 = vmatpush2.bf16.msra.mxu0 0
        %1905 = vmatprep.subr.bf16.mxu0 0
        %1906 = vmatpush2.bf16.msra.mxu0 0
        %1907 = vmatprep.subr.bf16.mxu0 0
        %1908 = vmatpush2.bf16.msra.mxu0 0
        %1909 = vmatprep.mubr.bf16.mxu0 0
        %1910 = vmatmul.mubr.bf16.gmra.mxu0 %v1875
        %v1911 = vpop.f32.mrf.mxu0
        %v1912 = vadd.f32 %v1849, %v1911
        %v1913 = vpop.f32.mrf.mxu0
        %v1914 = vpop.f32.mrf.mxu0
        %v1915 = vadd.f32 %v1854, %v1914
        %v1916 = vpop.f32.mrf.mxu0
        %1917 = vdwg.mxu0
        %v1918 = vmax.f32 %v1912, 0.0
        %v1919 = vmax.f32 %v1915, 0.0
        %1920 = vst.msk [vmem:[#allocation2] sm:$0xff] %vm1724, %v1918
        %1921 = vst.msk [vmem:[#allocation2 + $0x18] sm:$0xff] %vm1724, %v1919
        %v1922 = vld [vmem:[#allocation2] sm:$0xff]
        %v1923 = vld [vmem:[#allocation2 + $0x18] sm:$0xff]
        %1926 = vrot.lane.b32.xlu0 %v1922, 127
        %v1927 = vpop.permute.xlu0 %1926
        %1928 = vrot.lane.b32.xlu0 %v1923, 127
        %v1929 = vpop.permute.xlu0 %1928
        %v1932 = vmax.f32 %v1922, %v1927
        %v1933 = vmax.f32 %v1923, %v1929
        %1934 = vrot.lane.b32.xlu0 %v1922, 126
        %v1935 = vpop.permute.xlu0 %1934
        %1936 = vrot.lane.b32.xlu0 %v1923, 126
        %v1937 = vpop.permute.xlu0 %1936
        %v1940 = vmax.f32 %v1932, %v1935
        %v1941 = vmax.f32 %v1933, %v1937
        %1942 = vrot.lane.b32.xlu0 %v1922, 125
        %v1943 = vpop.permute.xlu0 %1942
        %1944 = vrot.lane.b32.xlu0 %v1923, 125
        %v1945 = vpop.permute.xlu0 %1944
        %v1948 = vmax.f32 %v1940, %v1943
        %v1949 = vmax.f32 %v1941, %v1945
        %v1950 = vpack.c.bf16 %v1949, %v1948
        %v1951 = vld [vmem:[%s24] sm:$0xf]
        %v1952 = vld [vmem:[%s24 + $0x4] sm:$0xf]
        %v1953 = vld [vmem:[%s24 + $0x8] sm:$0xf]
        %v1954 = vld [vmem:[%s24 + $0xc] sm:$0xf]
        %v1955 = vld [vmem:[%s24 + $0x10] sm:$0xf]
        %v1956 = vld [vmem:[%s24 + $0x14] sm:$0xf]
        %v1957 = vld [vmem:[%s24 + $0x18] sm:$0xf]
        %v1958 = vld [vmem:[%s24 + $0x1c] sm:$0x7]
        %v1967 = vunpack.c.l.b16 %v1951
        %v1968 = vunpack.c.l.b16 %v1952
        %v1969 = vunpack.c.l.b16 %v1953
        %v1970 = vunpack.c.l.b16 %v1954
        %v1971 = vunpack.c.l.b16 %v1955
        %v1972 = vunpack.c.l.b16 %v1956
        %v1973 = vunpack.c.l.b16 %v1957
        %v1974 = vunpack.c.l.b16 %v1958
        %v1975 = vpack.c.b16 %v1968, %v1967
        %v1976 = vpack.c.b16 %v1970, %v1969
        %v1977 = vpack.c.b16 %v1972, %v1971
        %v1978 = vpack.c.b16 %v1974, %v1973
        %vm1982 = vcmask 498688
        %v1984 = vsel %vm1982, %v1950, 0
        %v1987 = vand.u32 %v1978, %v1669
        %1989 = vmatprep.subr.bf16.mxu0 0
        %1990 = vmatpush1.bf16.msra.mxu0 0
        %1991 = vmatprep.subr.bf16.mxu0 0
        %1992 = vmatpush1.bf16.msra.mxu0 0
        %1993 = vmatprep.subr.bf16.mxu0 0
        %1994 = vmatpush1.bf16.msra.mxu0 0
        %1995 = vmatprep.subr.bf16.mxu0 0
        %1996 = vmatpush1.bf16.msra.mxu0 0
        %1997 = vmatprep.subr.bf16.mxu0 0
        %1998 = vmatpush1.bf16.msra.mxu0 %v1987
        %1999 = vmatprep.subr.bf16.mxu0 0
        %2000 = vmatpush1.bf16.msra.mxu0 %v1977
        %2001 = vmatprep.subr.bf16.mxu0 0
        %2002 = vmatpush1.bf16.msra.mxu0 %v1976
        %2003 = vmatprep.subr.bf16.mxu0 0
        %2004 = vmatpush1.bf16.msra.mxu0 %v1975
        %2005 = vmatprep.subr.bf16.mxu0 0
        %2006 = vmatpush2.bf16.msra.mxu0 0
        %2007 = vmatprep.subr.bf16.mxu0 0
        %2008 = vmatpush2.bf16.msra.mxu0 0
        %2009 = vmatprep.subr.bf16.mxu0 0
        %2010 = vmatpush2.bf16.msra.mxu0 0
        %2011 = vmatprep.subr.bf16.mxu0 0
        %2012 = vmatpush2.bf16.msra.mxu0 0
        %2013 = vmatprep.subr.bf16.mxu0 0
        %2014 = vmatpush2.bf16.msra.mxu0 0
        %2015 = vmatprep.subr.bf16.mxu0 0
        %2016 = vmatpush2.bf16.msra.mxu0 0
        %2017 = vmatprep.subr.bf16.mxu0 0
        %2018 = vmatpush2.bf16.msra.mxu0 0
        %2019 = vmatprep.subr.bf16.mxu0 0
        %2020 = vmatpush2.bf16.msra.mxu0 0
        %2021 = vmatprep.mubr.bf16.mxu0 0
        %2022 = vmatmul.mubr.bf16.gmra.mxu0 %v1984
        %v2023 = vpop.f32.mrf.mxu0
        %v2024 = vadd.f32 0.0, %v2023
        %v2025 = vpop.f32.mrf.mxu0
        %v2026 = vpop.f32.mrf.mxu0
        %v2027 = vadd.f32 0.0, %v2026
        %v2028 = vpop.f32.mrf.mxu0
        %2029 = vdwg.mxu0
        %2032 = vrot.lane.b32.xlu0 %v2024, 2
        %v2033 = vpop.permute.xlu0 %2032
        %2034 = vrot.lane.b32.xlu0 %v2027, 2
        %v2035 = vpop.permute.xlu0 %2034
        %vm2038 = vcmask 146448
        %2039 = vst.msk [vmem:[#allocation2] sm:$0xff] %vm2038, %v2033
        %2040 = vst.msk [vmem:[#allocation2 + $0x18] sm:$0xff] %vm2038, %v2035
        %2041 = vrot.lane.b32.xlu0 %v2024, 1
        %v2042 = vpop.permute.xlu0 %2041
        %2043 = vrot.lane.b32.xlu0 %v2027, 1
        %v2044 = vpop.permute.xlu0 %2043
        %vm2047 = vcmask 138248
        %2048 = vst.msk [vmem:[#allocation2 + $0x30] sm:$0xff] %vm2047, %v2042
        %2049 = vst.msk [vmem:[#allocation2 + $0x48] sm:$0xff] %vm2047, %v2044
        %vm2050 = vcmask 130048
        %2051 = vst.msk [vmem:[#allocation2 + $0x60] sm:$0xff] %vm2050, %v2024
        %2052 = vst.msk [vmem:[#allocation2 + $0x78] sm:$0xff] %vm2050, %v2027
        %2053 = vst.msk [vmem:[#allocation2] sm:$0xff] %vm1268, 0.0
        %2054 = vst.msk [vmem:[#allocation2 + $0x18] sm:$0xff] %vm1268, 0.0
        %vm2055 = vcmask 138368
        %2056 = vst.msk [vmem:[#allocation2 + $0x60] sm:$0xff] %vm2055, 0.0
        %2057 = vst.msk [vmem:[#allocation2 + $0x78] sm:$0xff] %vm2055, 0.0
        %v2058 = vld [vmem:[#allocation2] sm:$0xff]
        %v2059 = vld [vmem:[#allocation2 + $0x18] sm:$0xff]
        %v2060 = vld [vmem:[#allocation2 + $0x30] sm:$0xff]
        %v2061 = vld [vmem:[#allocation2 + $0x48] sm:$0xff]
        %v2062 = vld [vmem:[#allocation2 + $0x60] sm:$0xff]
        %v2063 = vld [vmem:[#allocation2 + $0x78] sm:$0xff]
        %v2064 = vpack.c.bf16 %v2059, %v2058
        %v2065 = vpack.c.bf16 %v2061, %v2060
        %v2066 = vpack.c.bf16 %v2063, %v2062
        %v2067 = vld [vmem:[%s11] sm:$0xf]
        %v2068 = vld [vmem:[%s11 + $0x4] sm:$0xf]
        %v2069 = vld [vmem:[%s11 + $0x8] sm:$0xf]
        %v2070 = vld [vmem:[%s11 + $0xc] sm:$0xf]
        %v2071 = vld [vmem:[%s12] sm:$0xff]
        %v2072 = vld [vmem:[%s12 + $0x8] sm:$0xff]
        %v2073 = vld [vmem:[%s12 + $0x10] sm:$0xff]
        %v2074 = vld [vmem:[%s12 + $0x18] sm:$0xff]
        %2076 = vset.pattern.permute.xlu0 0
        %2077 = vperm.xlu0 %2076, %v2071
        %v2078 = vpop.permute.xlu0 %2077
        %2081 = vset.pattern.permute.xlu0 0
        %2082 = vperm.xlu0 %2081, %v2072
        %v2083 = vpop.permute.xlu0 %2082
        %2086 = vset.pattern.permute.xlu0 0
        %2087 = vperm.xlu0 %2086, %v2073
        %v2088 = vpop.permute.xlu0 %2087
        %2091 = vset.pattern.permute.xlu0 0
        %2092 = vperm.xlu0 %2091, %v2074
        %v2093 = vpop.permute.xlu0 %2092
        %v2099 = vunpack.c.l.b16 %v2067
        %v2100 = vunpack.c.l.b16 %v2068
        %v2101 = vunpack.c.l.b16 %v2069
        %v2102 = vunpack.c.l.b16 %v2070
        %v2103 = vpack.c.b16 %v2100, %v2099
        %v2104 = vpack.c.b16 %v2102, %v2101
        %2108 = vrot.lane.b32.xlu0 %v2064, 127
        %v2109 = vpop.permute.xlu0 %2108
        %2110 = vrot.lane.b32.xlu0 %v2065, 127
        %v2111 = vpop.permute.xlu0 %2110
        %2112 = vrot.lane.b32.xlu0 %v2066, 127
        %v2113 = vpop.permute.xlu0 %2112
        %v2118 = vsel %vm1873, %v2103, 0
        %v2121 = vsel %vm1873, %v2104, 0
        %2123 = vmatprep.subr.bf16.mxu0 0
        %2124 = vmatpush1.bf16.msra.mxu0 0
        %2125 = vmatprep.subr.bf16.mxu0 0
        %2126 = vmatpush1.bf16.msra.mxu0 0
        %2127 = vmatprep.subr.bf16.mxu0 0
        %2128 = vmatpush1.bf16.msra.mxu0 0
        %2129 = vmatprep.subr.bf16.mxu0 0
        %2130 = vmatpush1.bf16.msra.mxu0 0
        %2131 = vmatprep.subr.bf16.mxu0 0
        %2132 = vmatpush1.bf16.msra.mxu0 0
        %2133 = vmatprep.subr.bf16.mxu0 0
        %2134 = vmatpush1.bf16.msra.mxu0 %v2113
        %2135 = vmatprep.subr.bf16.mxu0 0
        %2136 = vmatpush1.bf16.msra.mxu0 %v2111
        %2137 = vmatprep.subr.bf16.mxu0 0
        %2138 = vmatpush1.bf16.msra.mxu0 %v2109
        %2139 = vmatprep.subr.bf16.mxu0 0
        %2140 = vmatpush2.bf16.msra.mxu0 0
        %2141 = vmatprep.subr.bf16.mxu0 0
        %2142 = vmatpush2.bf16.msra.mxu0 0
        %2143 = vmatprep.subr.bf16.mxu0 0
        %2144 = vmatpush2.bf16.msra.mxu0 0
        %2145 = vmatprep.subr.bf16.mxu0 0
        %2146 = vmatpush2.bf16.msra.mxu0 0
        %2147 = vmatprep.subr.bf16.mxu0 0
        %2148 = vmatpush2.bf16.msra.mxu0 0
        %2149 = vmatprep.subr.bf16.mxu0 0
        %2150 = vmatpush2.bf16.msra.mxu0 0
        %2151 = vmatprep.subr.bf16.mxu0 0
        %2152 = vmatpush2.bf16.msra.mxu0 0
        %2153 = vmatprep.subr.bf16.mxu0 0
        %2154 = vmatpush2.bf16.msra.mxu0 0
        %2155 = vmatprep.mubr.bf16.mxu0 0
        %2156 = vmatmul.mubr.bf16.gmra.mxu0 %v2118
        %v2157 = vpop.f32.mrf.mxu0
        %v2158 = vadd.f32 %v2078, %v2157
        %v2159 = vpop.f32.mrf.mxu0
        %v2160 = vpop.f32.mrf.mxu0
        %v2161 = vadd.f32 %v2083, %v2160
        %v2162 = vpop.f32.mrf.mxu0
        %2163 = vmatprep.mubr.bf16.mxu0 0
        %2164 = vmatmul.mubr.bf16.gmra.mxu0 %v2121
        %v2165 = vpop.f32.mrf.mxu0
        %v2166 = vadd.f32 %v2088, %v2165
        %v2167 = vpop.f32.mrf.mxu0
        %v2168 = vpop.f32.mrf.mxu0
        %v2169 = vadd.f32 %v2093, %v2168
        %v2170 = vpop.f32.mrf.mxu0
        %2171 = vdwg.mxu0
        %v2172 = vmax.f32 %v2158, 0.0
        %v2173 = vmax.f32 %v2161, 0.0
        %v2174 = vmax.f32 %v2166, 0.0
        %v2175 = vmax.f32 %v2169, 0.0
        %2180 = vrot.lane.b32.xlu0 %v2172, 2
        %v2181 = vpop.permute.xlu0 %2180
        %2182 = vrot.lane.b32.xlu0 %v2173, 2
        %v2183 = vpop.permute.xlu0 %2182
        %2184 = vrot.lane.b32.xlu0 %v2174, 2
        %v2185 = vpop.permute.xlu0 %2184
        %2186 = vrot.lane.b32.xlu0 %v2175, 2
        %v2187 = vpop.permute.xlu0 %2186
        %2192 = vst.msk [vmem:[#allocation2] sm:$0xff] %vm2038, %v2181
        %2193 = vst.msk [vmem:[#allocation2 + $0x18] sm:$0xff] %vm2038, %v2183
        %2194 = vst.msk [vmem:[#allocation2 + $0x30] sm:$0xff] %vm2038, %v2185
        %2195 = vst.msk [vmem:[#allocation2 + $0x48] sm:$0xff] %vm2038, %v2187
        %2196 = vrot.lane.b32.xlu0 %v2172, 1
        %v2197 = vpop.permute.xlu0 %2196
        %2198 = vrot.lane.b32.xlu0 %v2173, 1
        %v2199 = vpop.permute.xlu0 %2198
        %2200 = vrot.lane.b32.xlu0 %v2174, 1
        %v2201 = vpop.permute.xlu0 %2200
        %2202 = vrot.lane.b32.xlu0 %v2175, 1
        %v2203 = vpop.permute.xlu0 %2202
        %2208 = vst.msk [vmem:[#allocation2 + $0x60] sm:$0xff] %vm2047, %v2197
        %2209 = vst.msk [vmem:[#allocation2 + $0x78] sm:$0xff] %vm2047, %v2199
        %2210 = vst.msk [vmem:[#allocation2 + $0x90] sm:$0xff] %vm2047, %v2201
        %2211 = vst.msk [vmem:[#allocation2 + $0xa8] sm:$0xff] %vm2047, %v2203
        %2212 = vst.msk [vmem:[#allocation2 + $0xc0] sm:$0xff] %vm2050, %v2172
        %2213 = vst.msk [vmem:[#allocation2 + $0xd8] sm:$0xff] %vm2050, %v2173
        %2214 = vst.msk [vmem:[#allocation2 + $0xf0] sm:$0xff] %vm2050, %v2174
        %2215 = vst.msk [vmem:[#allocation2 + $0x108] sm:$0xff] %vm2050, %v2175
        %2216 = vst.msk [vmem:[#allocation2] sm:$0xff] %vm1268, 0.0
        %2217 = vst.msk [vmem:[#allocation2 + $0x18] sm:$0xff] %vm1268, 0.0
        %2218 = vst.msk [vmem:[#allocation2 + $0x30] sm:$0xff] %vm1268, 0.0
        %2219 = vst.msk [vmem:[#allocation2 + $0x48] sm:$0xff] %vm1268, 0.0
        %2220 = vst.msk [vmem:[#allocation2 + $0xc0] sm:$0xff] %vm2055, 0.0
        %2221 = vst.msk [vmem:[#allocation2 + $0xd8] sm:$0xff] %vm2055, 0.0
        %2222 = vst.msk [vmem:[#allocation2 + $0xf0] sm:$0xff] %vm2055, 0.0
        %2223 = vst.msk [vmem:[#allocation2 + $0x108] sm:$0xff] %vm2055, 0.0
        %v2224 = vld [vmem:[#allocation2] sm:$0xff]
        %v2225 = vld [vmem:[#allocation2 + $0x18] sm:$0xff]
        %v2226 = vld [vmem:[#allocation2 + $0x30] sm:$0xff]
        %v2227 = vld [vmem:[#allocation2 + $0x48] sm:$0xff]
        %v2228 = vld [vmem:[#allocation2 + $0x60] sm:$0xff]
        %v2229 = vld [vmem:[#allocation2 + $0x78] sm:$0xff]
        %v2230 = vld [vmem:[#allocation2 + $0x90] sm:$0xff]
        %v2231 = vld [vmem:[#allocation2 + $0xa8] sm:$0xff]
        %v2232 = vld [vmem:[#allocation2 + $0xc0] sm:$0xff]
        %v2233 = vld [vmem:[#allocation2 + $0xd8] sm:$0xff]
        %v2234 = vld [vmem:[#allocation2 + $0xf0] sm:$0xff]
        %v2235 = vld [vmem:[#allocation2 + $0x108] sm:$0xff]
        %v2236 = vpack.c.bf16 %v2225, %v2224
        %v2237 = vpack.c.bf16 %v2227, %v2226
        %v2238 = vpack.c.bf16 %v2229, %v2228
        %v2239 = vpack.c.bf16 %v2231, %v2230
        %v2240 = vpack.c.bf16 %v2233, %v2232
        %v2241 = vpack.c.bf16 %v2235, %v2234
        %v2242 = vld [vmem:[%s13] sm:$0xf]
        %v2243 = vld [vmem:[%s13 + $0x4] sm:$0xf]
        %v2244 = vld [vmem:[%s13 + $0x8] sm:$0xf]
        %v2245 = vld [vmem:[%s13 + $0xc] sm:$0xf]
        %v2246 = vld [vmem:[%s14] sm:$0xff]
        %v2247 = vld [vmem:[%s14 + $0x8] sm:$0xff]
        %v2248 = vld [vmem:[%s14 + $0x10] sm:$0xff]
        %v2249 = vld [vmem:[%s14 + $0x18] sm:$0xff]
        %2251 = vset.pattern.permute.xlu0 0
        %2252 = vperm.xlu0 %2251, %v2246
        %v2253 = vpop.permute.xlu0 %2252
        %2256 = vset.pattern.permute.xlu0 0
        %2257 = vperm.xlu0 %2256, %v2247
        %v2258 = vpop.permute.xlu0 %2257
        %2261 = vset.pattern.permute.xlu0 0
        %2262 = vperm.xlu0 %2261, %v2248
        %v2263 = vpop.permute.xlu0 %2262
        %2266 = vset.pattern.permute.xlu0 0
        %2267 = vperm.xlu0 %2266, %v2249
        %v2268 = vpop.permute.xlu0 %2267
        %v2274 = vunpack.c.l.b16 %v2242
        %v2275 = vunpack.c.l.b16 %v2243
        %v2276 = vunpack.c.l.b16 %v2244
        %v2277 = vunpack.c.l.b16 %v2245
        %v2278 = vpack.c.b16 %v2275, %v2274
        %v2279 = vpack.c.b16 %v2277, %v2276
        %2286 = vrot.lane.b32.xlu0 %v2236, 127
        %v2287 = vpop.permute.xlu0 %2286
        %2288 = vrot.lane.b32.xlu0 %v2237, 127
        %v2289 = vpop.permute.xlu0 %2288
        %2290 = vrot.lane.b32.xlu0 %v2238, 127
        %v2291 = vpop.permute.xlu0 %2290
        %2292 = vrot.lane.b32.xlu0 %v2239, 127
        %v2293 = vpop.permute.xlu0 %2292
        %2294 = vrot.lane.b32.xlu0 %v2240, 127
        %v2295 = vpop.permute.xlu0 %2294
        %2296 = vrot.lane.b32.xlu0 %v2241, 127
        %v2297 = vpop.permute.xlu0 %2296
        %vm2304 = vcmask 785408
        %v2306 = vsel %vm2304, %v2278, 0
        %v2309 = vsel %vm2304, %v2279, 0
        %2311 = vmatprep.subr.bf16.mxu0 0
        %2312 = vmatpush1.bf16.msra.mxu0 0
        %2313 = vmatprep.subr.bf16.mxu0 0
        %2314 = vmatpush1.bf16.msra.mxu0 0
        %2315 = vmatprep.subr.bf16.mxu0 0
        %2316 = vmatpush1.bf16.msra.mxu0 %v2297
        %2317 = vmatprep.subr.bf16.mxu0 0
        %2318 = vmatpush1.bf16.msra.mxu0 %v2295
        %2319 = vmatprep.subr.bf16.mxu0 0
        %2320 = vmatpush1.bf16.msra.mxu0 %v2293
        %2321 = vmatprep.subr.bf16.mxu0 0
        %2322 = vmatpush1.bf16.msra.mxu0 %v2291
        %2323 = vmatprep.subr.bf16.mxu0 0
        %2324 = vmatpush1.bf16.msra.mxu0 %v2289
        %2325 = vmatprep.subr.bf16.mxu0 0
        %2326 = vmatpush1.bf16.msra.mxu0 %v2287
        %2327 = vmatprep.subr.bf16.mxu0 0
        %2328 = vmatpush2.bf16.msra.mxu0 0
        %2329 = vmatprep.subr.bf16.mxu0 0
        %2330 = vmatpush2.bf16.msra.mxu0 0
        %2331 = vmatprep.subr.bf16.mxu0 0
        %2332 = vmatpush2.bf16.msra.mxu0 0
        %2333 = vmatprep.subr.bf16.mxu0 0
        %2334 = vmatpush2.bf16.msra.mxu0 0
        %2335 = vmatprep.subr.bf16.mxu0 0
        %2336 = vmatpush2.bf16.msra.mxu0 0
        %2337 = vmatprep.subr.bf16.mxu0 0
        %2338 = vmatpush2.bf16.msra.mxu0 0
        %2339 = vmatprep.subr.bf16.mxu0 0
        %2340 = vmatpush2.bf16.msra.mxu0 0
        %2341 = vmatprep.subr.bf16.mxu0 0
        %2342 = vmatpush2.bf16.msra.mxu0 0
        %2343 = vmatprep.mubr.bf16.mxu0 0
        %2344 = vmatmul.mubr.bf16.gmra.mxu0 %v2306
        %v2345 = vpop.f32.mrf.mxu0
        %v2346 = vadd.f32 %v2253, %v2345
        %v2347 = vpop.f32.mrf.mxu0
        %v2348 = vpop.f32.mrf.mxu0
        %v2349 = vadd.f32 %v2258, %v2348
        %v2350 = vpop.f32.mrf.mxu0
        %2351 = vmatprep.mubr.bf16.mxu0 0
        %2352 = vmatmul.mubr.bf16.gmra.mxu0 %v2309
        %v2353 = vpop.f32.mrf.mxu0
        %v2354 = vadd.f32 %v2263, %v2353
        %v2355 = vpop.f32.mrf.mxu0
        %v2356 = vpop.f32.mrf.mxu0
        %v2357 = vadd.f32 %v2268, %v2356
        %v2358 = vpop.f32.mrf.mxu0
        %2359 = vdwg.mxu0
        %v2360 = vmax.f32 %v2346, 0.0
        %v2361 = vmax.f32 %v2349, 0.0
        %v2362 = vmax.f32 %v2354, 0.0
        %v2363 = vmax.f32 %v2357, 0.0
        %2368 = vrot.lane.b32.xlu0 %v2360, 2
        %v2369 = vpop.permute.xlu0 %2368
        %2370 = vrot.lane.b32.xlu0 %v2361, 2
        %v2371 = vpop.permute.xlu0 %2370
        %2372 = vrot.lane.b32.xlu0 %v2362, 2
        %v2373 = vpop.permute.xlu0 %2372
        %2374 = vrot.lane.b32.xlu0 %v2363, 2
        %v2375 = vpop.permute.xlu0 %2374
        %2380 = vst.msk [vmem:[#allocation2] sm:$0xff] %vm2038, %v2369
        %2381 = vst.msk [vmem:[#allocation2 + $0x18] sm:$0xff] %vm2038, %v2371
        %2382 = vst.msk [vmem:[#allocation2 + $0x30] sm:$0xff] %vm2038, %v2373
        %2383 = vst.msk [vmem:[#allocation2 + $0x48] sm:$0xff] %vm2038, %v2375
        %2384 = vrot.lane.b32.xlu0 %v2360, 1
        %v2385 = vpop.permute.xlu0 %2384
        %2386 = vrot.lane.b32.xlu0 %v2361, 1
        %v2387 = vpop.permute.xlu0 %2386
        %2388 = vrot.lane.b32.xlu0 %v2362, 1
        %v2389 = vpop.permute.xlu0 %2388
        %2390 = vrot.lane.b32.xlu0 %v2363, 1
        %v2391 = vpop.permute.xlu0 %2390
        %2396 = vst.msk [vmem:[#allocation2 + $0x60] sm:$0xff] %vm2047, %v2385
        %2397 = vst.msk [vmem:[#allocation2 + $0x78] sm:$0xff] %vm2047, %v2387
        %2398 = vst.msk [vmem:[#allocation2 + $0x90] sm:$0xff] %vm2047, %v2389
        %2399 = vst.msk [vmem:[#allocation2 + $0xa8] sm:$0xff] %vm2047, %v2391
        %2400 = vst.msk [vmem:[#allocation2 + $0xc0] sm:$0xff] %vm2050, %v2360
        %2401 = vst.msk [vmem:[#allocation2 + $0xd8] sm:$0xff] %vm2050, %v2361
        %2402 = vst.msk [vmem:[#allocation2 + $0xf0] sm:$0xff] %vm2050, %v2362
        %2403 = vst.msk [vmem:[#allocation2 + $0x108] sm:$0xff] %vm2050, %v2363
        %2404 = vst.msk [vmem:[#allocation2] sm:$0xff] %vm1268, 0.0
        %2405 = vst.msk [vmem:[#allocation2 + $0x18] sm:$0xff] %vm1268, 0.0
        %2406 = vst.msk [vmem:[#allocation2 + $0x30] sm:$0xff] %vm1268, 0.0
        %2407 = vst.msk [vmem:[#allocation2 + $0x48] sm:$0xff] %vm1268, 0.0
        %2408 = vst.msk [vmem:[#allocation2 + $0xc0] sm:$0xff] %vm2055, 0.0
        %2409 = vst.msk [vmem:[#allocation2 + $0xd8] sm:$0xff] %vm2055, 0.0
        %2410 = vst.msk [vmem:[#allocation2 + $0xf0] sm:$0xff] %vm2055, 0.0
        %2411 = vst.msk [vmem:[#allocation2 + $0x108] sm:$0xff] %vm2055, 0.0
        %v2412 = vld [vmem:[#allocation2] sm:$0xff]
        %v2413 = vld [vmem:[#allocation2 + $0x18] sm:$0xff]
        %v2414 = vld [vmem:[#allocation2 + $0x30] sm:$0xff]
        %v2415 = vld [vmem:[#allocation2 + $0x48] sm:$0xff]
        %v2416 = vld [vmem:[#allocation2 + $0x60] sm:$0xff]
        %v2417 = vld [vmem:[#allocation2 + $0x78] sm:$0xff]
        %v2418 = vld [vmem:[#allocation2 + $0x90] sm:$0xff]
        %v2419 = vld [vmem:[#allocation2 + $0xa8] sm:$0xff]
        %v2420 = vld [vmem:[#allocation2 + $0xc0] sm:$0xff]
        %v2421 = vld [vmem:[#allocation2 + $0xd8] sm:$0xff]
        %v2422 = vld [vmem:[#allocation2 + $0xf0] sm:$0xff]
        %v2423 = vld [vmem:[#allocation2 + $0x108] sm:$0xff]
        %v2424 = vpack.c.bf16 %v2413, %v2412
        %v2425 = vpack.c.bf16 %v2415, %v2414
        %v2426 = vpack.c.bf16 %v2417, %v2416
        %v2427 = vpack.c.bf16 %v2419, %v2418
        %v2428 = vpack.c.bf16 %v2421, %v2420
        %v2429 = vpack.c.bf16 %v2423, %v2422
        %v2430 = vld [vmem:[%s15] sm:$0xf]
        %v2431 = vld [vmem:[%s15 + $0x4] sm:$0xf]
        %v2432 = vld [vmem:[%s15 + $0x8] sm:$0xf]
        %v2433 = vld [vmem:[%s15 + $0xc] sm:$0xf]
        %v2434 = vld [vmem:[%s16] sm:$0xff]
        %v2435 = vld [vmem:[%s16 + $0x8] sm:$0xff]
        %v2436 = vld [vmem:[%s16 + $0x10] sm:$0xff]
        %v2437 = vld [vmem:[%s16 + $0x18] sm:$0xff]
        %2439 = vset.pattern.permute.xlu0 0
        %2440 = vperm.xlu0 %2439, %v2434
        %v2441 = vpop.permute.xlu0 %2440
        %2444 = vset.pattern.permute.xlu0 0
        %2445 = vperm.xlu0 %2444, %v2435
        %v2446 = vpop.permute.xlu0 %2445
        %2449 = vset.pattern.permute.xlu0 0
        %2450 = vperm.xlu0 %2449, %v2436
        %v2451 = vpop.permute.xlu0 %2450
        %2454 = vset.pattern.permute.xlu0 0
        %2455 = vperm.xlu0 %2454, %v2437
        %v2456 = vpop.permute.xlu0 %2455
        %v2462 = vunpack.c.l.b16 %v2430
        %v2463 = vunpack.c.l.b16 %v2431
        %v2464 = vunpack.c.l.b16 %v2432
        %v2465 = vunpack.c.l.b16 %v2433
        %v2466 = vpack.c.b16 %v2463, %v2462
        %v2467 = vpack.c.b16 %v2465, %v2464
        %2474 = vrot.lane.b32.xlu0 %v2424, 127
        %v2475 = vpop.permute.xlu0 %2474
        %2476 = vrot.lane.b32.xlu0 %v2425, 127
        %v2477 = vpop.permute.xlu0 %2476
        %2478 = vrot.lane.b32.xlu0 %v2426, 127
        %v2479 = vpop.permute.xlu0 %2478
        %2480 = vrot.lane.b32.xlu0 %v2427, 127
        %v2481 = vpop.permute.xlu0 %2480
        %2482 = vrot.lane.b32.xlu0 %v2428, 127
        %v2483 = vpop.permute.xlu0 %2482
        %2484 = vrot.lane.b32.xlu0 %v2429, 127
        %v2485 = vpop.permute.xlu0 %2484
        %v2493 = vsel %vm2304, %v2466, 0
        %v2496 = vsel %vm2304, %v2467, 0
        %2498 = vmatprep.subr.bf16.mxu0 0
        %2499 = vmatpush1.bf16.msra.mxu0 0
        %2500 = vmatprep.subr.bf16.mxu0 0
        %2501 = vmatpush1.bf16.msra.mxu0 0
        %2502 = vmatprep.subr.bf16.mxu0 0
        %2503 = vmatpush1.bf16.msra.mxu0 %v2485
        %2504 = vmatprep.subr.bf16.mxu0 0
        %2505 = vmatpush1.bf16.msra.mxu0 %v2483
        %2506 = vmatprep.subr.bf16.mxu0 0
        %2507 = vmatpush1.bf16.msra.mxu0 %v2481
        %2508 = vmatprep.subr.bf16.mxu0 0
        %2509 = vmatpush1.bf16.msra.mxu0 %v2479
        %2510 = vmatprep.subr.bf16.mxu0 0
        %2511 = vmatpush1.bf16.msra.mxu0 %v2477
        %2512 = vmatprep.subr.bf16.mxu0 0
        %2513 = vmatpush1.bf16.msra.mxu0 %v2475
        %2514 = vmatprep.subr.bf16.mxu0 0
        %2515 = vmatpush2.bf16.msra.mxu0 0
        %2516 = vmatprep.subr.bf16.mxu0 0
        %2517 = vmatpush2.bf16.msra.mxu0 0
        %2518 = vmatprep.subr.bf16.mxu0 0
        %2519 = vmatpush2.bf16.msra.mxu0 0
        %2520 = vmatprep.subr.bf16.mxu0 0
        %2521 = vmatpush2.bf16.msra.mxu0 0
        %2522 = vmatprep.subr.bf16.mxu0 0
        %2523 = vmatpush2.bf16.msra.mxu0 0
        %2524 = vmatprep.subr.bf16.mxu0 0
        %2525 = vmatpush2.bf16.msra.mxu0 0
        %2526 = vmatprep.subr.bf16.mxu0 0
        %2527 = vmatpush2.bf16.msra.mxu0 0
        %2528 = vmatprep.subr.bf16.mxu0 0
        %2529 = vmatpush2.bf16.msra.mxu0 0
        %2530 = vmatprep.mubr.bf16.mxu0 0
        %2531 = vmatmul.mubr.bf16.gmra.mxu0 %v2493
        %v2532 = vpop.f32.mrf.mxu0
        %v2533 = vadd.f32 %v2441, %v2532
        %v2534 = vpop.f32.mrf.mxu0
        %v2535 = vpop.f32.mrf.mxu0
        %v2536 = vadd.f32 %v2446, %v2535
        %v2537 = vpop.f32.mrf.mxu0
        %2538 = vmatprep.mubr.bf16.mxu0 0
        %2539 = vmatmul.mubr.bf16.gmra.mxu0 %v2496
        %v2540 = vpop.f32.mrf.mxu0
        %v2541 = vadd.f32 %v2451, %v2540
        %v2542 = vpop.f32.mrf.mxu0
        %v2543 = vpop.f32.mrf.mxu0
        %v2544 = vadd.f32 %v2456, %v2543
        %v2545 = vpop.f32.mrf.mxu0
        %2546 = vdwg.mxu0
        %v2547 = vmax.f32 %v2533, 0.0
        %v2548 = vmax.f32 %v2536, 0.0
        %v2549 = vmax.f32 %v2541, 0.0
        %v2550 = vmax.f32 %v2544, 0.0
        %2551 = vst.msk [vmem:[#allocation2] sm:$0xff] %vm2050, %v2547
        %2552 = vst.msk [vmem:[#allocation2 + $0x18] sm:$0xff] %vm2050, %v2548
        %2553 = vst.msk [vmem:[#allocation2 + $0x30] sm:$0xff] %vm2050, %v2549
        %2554 = vst.msk [vmem:[#allocation2 + $0x48] sm:$0xff] %vm2050, %v2550
        %v2555 = vld [vmem:[#allocation2] sm:$0xff]
        %v2556 = vld [vmem:[#allocation2 + $0x18] sm:$0xff]
        %v2557 = vld [vmem:[#allocation2 + $0x30] sm:$0xff]
        %v2558 = vld [vmem:[#allocation2 + $0x48] sm:$0xff]
        %2563 = vrot.lane.b32.xlu0 %v2555, 127
        %v2564 = vpop.permute.xlu0 %2563
        %2565 = vrot.lane.b32.xlu0 %v2556, 127
        %v2566 = vpop.permute.xlu0 %2565
        %2567 = vrot.lane.b32.xlu0 %v2557, 127
        %v2568 = vpop.permute.xlu0 %2567
        %2569 = vrot.lane.b32.xlu0 %v2558, 127
        %v2570 = vpop.permute.xlu0 %2569
        %v2575 = vmax.f32 %v2555, %v2564
        %v2576 = vmax.f32 %v2556, %v2566
        %v2577 = vmax.f32 %v2557, %v2568
        %v2578 = vmax.f32 %v2558, %v2570
        %2579 = vrot.lane.b32.xlu0 %v2555, 126
        %v2580 = vpop.permute.xlu0 %2579
        %2581 = vrot.lane.b32.xlu0 %v2556, 126
        %v2582 = vpop.permute.xlu0 %2581
        %2583 = vrot.lane.b32.xlu0 %v2557, 126
        %v2584 = vpop.permute.xlu0 %2583
        %2585 = vrot.lane.b32.xlu0 %v2558, 126
        %v2586 = vpop.permute.xlu0 %2585
        %v2591 = vmax.f32 %v2575, %v2580
        %v2592 = vmax.f32 %v2576, %v2582
        %v2593 = vmax.f32 %v2577, %v2584
        %v2594 = vmax.f32 %v2578, %v2586
        %2595 = vrot.lane.b32.xlu0 %v2555, 125
        %v2596 = vpop.permute.xlu0 %2595
        %2597 = vrot.lane.b32.xlu0 %v2556, 125
        %v2598 = vpop.permute.xlu0 %2597
        %2599 = vrot.lane.b32.xlu0 %v2557, 125
        %v2600 = vpop.permute.xlu0 %2599
        %2601 = vrot.lane.b32.xlu0 %v2558, 125
        %v2602 = vpop.permute.xlu0 %2601
        %v2607 = vmax.f32 %v2591, %v2596
        %v2608 = vmax.f32 %v2592, %v2598
        %v2609 = vmax.f32 %v2593, %v2600
        %v2610 = vmax.f32 %v2594, %v2602
        %v2611 = vpack.c.bf16 %v2608, %v2607
        %v2612 = vpack.c.bf16 %v2610, %v2609
        %v2613 = vld [vmem:[%s25] sm:$0xf]
        %v2614 = vld [vmem:[%s25 + $0x4] sm:$0x7]
        %v2617 = vunpack.c.l.b16 %v2613
        %v2618 = vunpack.c.l.b16 %v2614
        %v2619 = vpack.c.b16 %v2618, %v2617
        %vm2620 = vcmask 105472
        %v2622 = vsel %vm2620, %v2611, 0
        %v2625 = vsel %vm2620, %v2612, 0
        %v2628 = vand.u32 %v2619, %v1669
        %2630 = vmatprep.subr.bf16.mxu0 0
        %2631 = vmatpush1.bf16.msra.mxu0 0
        %2632 = vmatprep.subr.bf16.mxu0 0
        %2633 = vmatpush1.bf16.msra.mxu0 0
        %2634 = vmatprep.subr.bf16.mxu0 0
        %2635 = vmatpush1.bf16.msra.mxu0 0
        %2636 = vmatprep.subr.bf16.mxu0 0
        %2637 = vmatpush1.bf16.msra.mxu0 0
        %2638 = vmatprep.subr.bf16.mxu0 0
        %2639 = vmatpush1.bf16.msra.mxu0 0
        %2640 = vmatprep.subr.bf16.mxu0 0
        %2641 = vmatpush1.bf16.msra.mxu0 0
        %2642 = vmatprep.subr.bf16.mxu0 0
        %2643 = vmatpush1.bf16.msra.mxu0 0
        %2644 = vmatprep.subr.bf16.mxu0 0
        %2645 = vmatpush1.bf16.msra.mxu0 %v2628
        %2646 = vmatprep.subr.bf16.mxu0 0
        %2647 = vmatpush2.bf16.msra.mxu0 0
        %2648 = vmatprep.subr.bf16.mxu0 0
        %2649 = vmatpush2.bf16.msra.mxu0 0
        %2650 = vmatprep.subr.bf16.mxu0 0
        %2651 = vmatpush2.bf16.msra.mxu0 0
        %2652 = vmatprep.subr.bf16.mxu0 0
        %2653 = vmatpush2.bf16.msra.mxu0 0
        %2654 = vmatprep.subr.bf16.mxu0 0
        %2655 = vmatpush2.bf16.msra.mxu0 0
        %2656 = vmatprep.subr.bf16.mxu0 0
        %2657 = vmatpush2.bf16.msra.mxu0 0
        %2658 = vmatprep.subr.bf16.mxu0 0
        %2659 = vmatpush2.bf16.msra.mxu0 0
        %2660 = vmatprep.subr.bf16.mxu0 0
        %2661 = vmatpush2.bf16.msra.mxu0 0
        %2662 = vmatprep.mubr.bf16.mxu0 0
        %2663 = vmatmul.mubr.bf16.gmra.mxu0 %v2622
        %v2664 = vpop.f32.mrf.mxu0
        %v2665 = vadd.f32 0.0, %v2664
        %v2666 = vpop.f32.mrf.mxu0
        %v2667 = vpop.f32.mrf.mxu0
        %v2668 = vadd.f32 0.0, %v2667
        %v2669 = vpop.f32.mrf.mxu0
        %2670 = vmatprep.mubr.bf16.mxu0 0
        %2671 = vmatmul.mubr.bf16.gmra.mxu0 %v2625
        %v2672 = vpop.f32.mrf.mxu0
        %v2673 = vadd.f32 0.0, %v2672
        %v2674 = vpop.f32.mrf.mxu0
        %v2675 = vpop.f32.mrf.mxu0
        %v2676 = vadd.f32 0.0, %v2675
        %v2677 = vpop.f32.mrf.mxu0
        %2678 = vdwg.mxu0
        %2683 = vrot.lane.b32.xlu0 %v2665, 2
        %v2684 = vpop.permute.xlu0 %2683
        %2685 = vrot.lane.b32.xlu0 %v2668, 2
        %v2686 = vpop.permute.xlu0 %2685
        %2687 = vrot.lane.b32.xlu0 %v2673, 2
        %v2688 = vpop.permute.xlu0 %2687
        %2689 = vrot.lane.b32.xlu0 %v2676, 2
        %v2690 = vpop.permute.xlu0 %2689
        %vm2695 = vcmask 48144
        %2696 = vst.msk [vmem:[#allocation2] sm:$0xff] %vm2695, %v2684
        %2697 = vst.msk [vmem:[#allocation2 + $0x18] sm:$0xff] %vm2695, %v2686
        %2698 = vst.msk [vmem:[#allocation2 + $0x30] sm:$0xff] %vm2695, %v2688
        %2699 = vst.msk [vmem:[#allocation2 + $0x48] sm:$0xff] %vm2695, %v2690
        %2700 = vrot.lane.b32.xlu0 %v2665, 1
        %v2701 = vpop.permute.xlu0 %2700
        %2702 = vrot.lane.b32.xlu0 %v2668, 1
        %v2703 = vpop.permute.xlu0 %2702
        %2704 = vrot.lane.b32.xlu0 %v2673, 1
        %v2705 = vpop.permute.xlu0 %2704
        %2706 = vrot.lane.b32.xlu0 %v2676, 1
        %v2707 = vpop.permute.xlu0 %2706
        %vm2712 = vcmask 39944
        %2713 = vst.msk [vmem:[#allocation2 + $0x60] sm:$0xff] %vm2712, %v2701
        %2714 = vst.msk [vmem:[#allocation2 + $0x78] sm:$0xff] %vm2712, %v2703
        %2715 = vst.msk [vmem:[#allocation2 + $0x90] sm:$0xff] %vm2712, %v2705
        %2716 = vst.msk [vmem:[#allocation2 + $0xa8] sm:$0xff] %vm2712, %v2707
        %vm2717 = vcmask 31744
        %2718 = vst.msk [vmem:[#allocation2 + $0xc0] sm:$0xff] %vm2717, %v2665
        %2719 = vst.msk [vmem:[#allocation2 + $0xd8] sm:$0xff] %vm2717, %v2668
        %2720 = vst.msk [vmem:[#allocation2 + $0xf0] sm:$0xff] %vm2717, %v2673
        %2721 = vst.msk [vmem:[#allocation2 + $0x108] sm:$0xff] %vm2717, %v2676
        %2722 = vst.msk [vmem:[#allocation2] sm:$0xff] %vm1268, 0.0
        %2723 = vst.msk [vmem:[#allocation2 + $0x18] sm:$0xff] %vm1268, 0.0
        %2724 = vst.msk [vmem:[#allocation2 + $0x30] sm:$0xff] %vm1268, 0.0
        %2725 = vst.msk [vmem:[#allocation2 + $0x48] sm:$0xff] %vm1268, 0.0
        %vm2726 = vcmask 39968
        %2727 = vst.msk [vmem:[#allocation2 + $0xc0] sm:$0xff] %vm2726, 0.0
        %2728 = vst.msk [vmem:[#allocation2 + $0xd8] sm:$0xff] %vm2726, 0.0
        %2729 = vst.msk [vmem:[#allocation2 + $0xf0] sm:$0xff] %vm2726, 0.0
        %2730 = vst.msk [vmem:[#allocation2 + $0x108] sm:$0xff] %vm2726, 0.0
        %v2731 = vld [vmem:[#allocation2] sm:$0xff]
        %v2732 = vld [vmem:[#allocation2 + $0x18] sm:$0xff]
        %v2733 = vld [vmem:[#allocation2 + $0x30] sm:$0xff]
        %v2734 = vld [vmem:[#allocation2 + $0x48] sm:$0xff]
        %v2735 = vld [vmem:[#allocation2 + $0x60] sm:$0xff]
        %v2736 = vld [vmem:[#allocation2 + $0x78] sm:$0xff]
        %v2737 = vld [vmem:[#allocation2 + $0x90] sm:$0xff]
        %v2738 = vld [vmem:[#allocation2 + $0xa8] sm:$0xff]
        %v2739 = vld [vmem:[#allocation2 + $0xc0] sm:$0xff]
        %v2740 = vld [vmem:[#allocation2 + $0xd8] sm:$0xff]
        %v2741 = vld [vmem:[#allocation2 + $0xf0] sm:$0xff]
        %v2742 = vld [vmem:[#allocation2 + $0x108] sm:$0xff]
        %v2743 = vpack.c.bf16 %v2732, %v2731
        %v2744 = vpack.c.bf16 %v2734, %v2733
        %v2745 = vpack.c.bf16 %v2736, %v2735
        %v2746 = vpack.c.bf16 %v2738, %v2737
        %v2747 = vpack.c.bf16 %v2740, %v2739
        %v2748 = vpack.c.bf16 %v2742, %v2741
        %v2749 = vld [vmem:[%s17] sm:$0xf]
        %v2750 = vld [vmem:[%s17 + $0x4] sm:$0xf]
        %v2751 = vld [vmem:[%s17 + $0x8] sm:$0xf]
        %v2752 = vld [vmem:[%s17 + $0xc] sm:$0xf]
        %v2753 = vld [vmem:[%s17 + $0x10] sm:$0xf]
        %v2754 = vld [vmem:[%s17 + $0x14] sm:$0xf]
        %v2755 = vld [vmem:[%s17 + $0x18] sm:$0xf]
        %v2756 = vld [vmem:[%s17 + $0x1c] sm:$0xf]
        %v2757 = vld [vmem:[%s18] sm:$0xff]
        %v2758 = vld [vmem:[%s18 + $0x8] sm:$0xff]
        %v2759 = vld [vmem:[%s18 + $0x10] sm:$0xff]
        %v2760 = vld [vmem:[%s18 + $0x18] sm:$0xff]
        %v2761 = vld [vmem:[%s18 + $0x20] sm:$0xff]
        %v2762 = vld [vmem:[%s18 + $0x28] sm:$0xff]
        %v2763 = vld [vmem:[%s18 + $0x30] sm:$0xff]
        %v2764 = vld [vmem:[%s18 + $0x38] sm:$0xff]
        %2766 = vset.pattern.permute.xlu0 0
        %2767 = vperm.xlu0 %2766, %v2757
        %v2768 = vpop.permute.xlu0 %2767
        %2771 = vset.pattern.permute.xlu0 0
        %2772 = vperm.xlu0 %2771, %v2758
        %v2773 = vpop.permute.xlu0 %2772
        %2776 = vset.pattern.permute.xlu0 0
        %2777 = vperm.xlu0 %2776, %v2759
        %v2778 = vpop.permute.xlu0 %2777
        %2781 = vset.pattern.permute.xlu0 0
        %2782 = vperm.xlu0 %2781, %v2760
        %v2783 = vpop.permute.xlu0 %2782
        %2786 = vset.pattern.permute.xlu0 0
        %2787 = vperm.xlu0 %2786, %v2761
        %v2788 = vpop.permute.xlu0 %2787
        %2791 = vset.pattern.permute.xlu0 0
        %2792 = vperm.xlu0 %2791, %v2762
        %v2793 = vpop.permute.xlu0 %2792
        %2796 = vset.pattern.permute.xlu0 0
        %2797 = vperm.xlu0 %2796, %v2763
        %v2798 = vpop.permute.xlu0 %2797
        %2801 = vset.pattern.permute.xlu0 0
        %2802 = vperm.xlu0 %2801, %v2764
        %v2803 = vpop.permute.xlu0 %2802
        %v2813 = vunpack.c.l.b16 %v2749
        %v2814 = vunpack.c.l.b16 %v2750
        %v2815 = vunpack.c.l.b16 %v2751
        %v2816 = vunpack.c.l.b16 %v2752
        %v2817 = vunpack.c.l.b16 %v2753
        %v2818 = vunpack.c.l.b16 %v2754
        %v2819 = vunpack.c.l.b16 %v2755
        %v2820 = vunpack.c.l.b16 %v2756
        %v2821 = vpack.c.b16 %v2814, %v2813
        %v2822 = vpack.c.b16 %v2816, %v2815
        %v2823 = vpack.c.b16 %v2818, %v2817
        %v2824 = vpack.c.b16 %v2820, %v2819
        %2831 = vrot.lane.b32.xlu0 %v2743, 127
        %v2832 = vpop.permute.xlu0 %2831
        %2833 = vrot.lane.b32.xlu0 %v2744, 127
        %v2834 = vpop.permute.xlu0 %2833
        %2835 = vrot.lane.b32.xlu0 %v2745, 127
        %v2836 = vpop.permute.xlu0 %2835
        %2837 = vrot.lane.b32.xlu0 %v2746, 127
        %v2838 = vpop.permute.xlu0 %2837
        %2839 = vrot.lane.b32.xlu0 %v2747, 127
        %v2840 = vpop.permute.xlu0 %2839
        %2841 = vrot.lane.b32.xlu0 %v2748, 127
        %v2842 = vpop.permute.xlu0 %2841
        %v2850 = vsel %vm2304, %v2821, 0
        %v2853 = vsel %vm2304, %v2822, 0
        %v2856 = vsel %vm2304, %v2823, 0
        %v2859 = vsel %vm2304, %v2824, 0
        %2861 = vmatprep.subr.bf16.mxu0 0
        %2862 = vmatpush1.bf16.msra.mxu0 0
        %2863 = vmatprep.subr.bf16.mxu0 0
        %2864 = vmatpush1.bf16.msra.mxu0 0
        %2865 = vmatprep.subr.bf16.mxu0 0
        %2866 = vmatpush1.bf16.msra.mxu0 %v2842
        %2867 = vmatprep.subr.bf16.mxu0 0
        %2868 = vmatpush1.bf16.msra.mxu0 %v2840
        %2869 = vmatprep.subr.bf16.mxu0 0
        %2870 = vmatpush1.bf16.msra.mxu0 %v2838
        %2871 = vmatprep.subr.bf16.mxu0 0
        %2872 = vmatpush1.bf16.msra.mxu0 %v2836
        %2873 = vmatprep.subr.bf16.mxu0 0
        %2874 = vmatpush1.bf16.msra.mxu0 %v2834
        %2875 = vmatprep.subr.bf16.mxu0 0
        %2876 = vmatpush1.bf16.msra.mxu0 %v2832
        %2877 = vmatprep.subr.bf16.mxu0 0
        %2878 = vmatpush2.bf16.msra.mxu0 0
        %2879 = vmatprep.subr.bf16.mxu0 0
        %2880 = vmatpush2.bf16.msra.mxu0 0
        %2881 = vmatprep.subr.bf16.mxu0 0
        %2882 = vmatpush2.bf16.msra.mxu0 0
        %2883 = vmatprep.subr.bf16.mxu0 0
        %2884 = vmatpush2.bf16.msra.mxu0 0
        %2885 = vmatprep.subr.bf16.mxu0 0
        %2886 = vmatpush2.bf16.msra.mxu0 0
        %2887 = vmatprep.subr.bf16.mxu0 0
        %2888 = vmatpush2.bf16.msra.mxu0 0
        %2889 = vmatprep.subr.bf16.mxu0 0
        %2890 = vmatpush2.bf16.msra.mxu0 0
        %2891 = vmatprep.subr.bf16.mxu0 0
        %2892 = vmatpush2.bf16.msra.mxu0 0
        %2893 = vmatprep.mubr.bf16.mxu0 0
        %2894 = vmatmul.mubr.bf16.gmra.mxu0 %v2850
        %v2895 = vpop.f32.mrf.mxu0
        %v2896 = vadd.f32 %v2768, %v2895
        %v2897 = vpop.f32.mrf.mxu0
        %v2898 = vpop.f32.mrf.mxu0
        %v2899 = vadd.f32 %v2773, %v2898
        %v2900 = vpop.f32.mrf.mxu0
        %2901 = vmatprep.mubr.bf16.mxu0 0
        %2902 = vmatmul.mubr.bf16.gmra.mxu0 %v2853
        %v2903 = vpop.f32.mrf.mxu0
        %v2904 = vadd.f32 %v2778, %v2903
        %v2905 = vpop.f32.mrf.mxu0
        %v2906 = vpop.f32.mrf.mxu0
        %v2907 = vadd.f32 %v2783, %v2906
        %v2908 = vpop.f32.mrf.mxu0
        %2909 = vmatprep.mubr.bf16.mxu0 0
        %2910 = vmatmul.mubr.bf16.gmra.mxu0 %v2856
        %v2911 = vpop.f32.mrf.mxu0
        %v2912 = vadd.f32 %v2788, %v2911
        %v2913 = vpop.f32.mrf.mxu0
        %v2914 = vpop.f32.mrf.mxu0
        %v2915 = vadd.f32 %v2793, %v2914
        %v2916 = vpop.f32.mrf.mxu0
        %2917 = vmatprep.mubr.bf16.mxu0 0
        %2918 = vmatmul.mubr.bf16.gmra.mxu0 %v2859
        %v2919 = vpop.f32.mrf.mxu0
        %v2920 = vadd.f32 %v2798, %v2919
        %v2921 = vpop.f32.mrf.mxu0
        %v2922 = vpop.f32.mrf.mxu0
        %v2923 = vadd.f32 %v2803, %v2922
        %v2924 = vpop.f32.mrf.mxu0
        %2925 = vdwg.mxu0
        %v2926 = vmax.f32 %v2896, 0.0
        %v2927 = vmax.f32 %v2899, 0.0
        %v2928 = vmax.f32 %v2904, 0.0
        %v2929 = vmax.f32 %v2907, 0.0
        %v2930 = vmax.f32 %v2912, 0.0
        %v2931 = vmax.f32 %v2915, 0.0
        %v2932 = vmax.f32 %v2920, 0.0
        %v2933 = vmax.f32 %v2923, 0.0
        %2942 = vrot.lane.b32.xlu0 %v2926, 2
        %v2943 = vpop.permute.xlu0 %2942
        %2944 = vrot.lane.b32.xlu0 %v2927, 2
        %v2945 = vpop.permute.xlu0 %2944
        %2946 = vrot.lane.b32.xlu0 %v2928, 2
        %v2947 = vpop.permute.xlu0 %2946
        %2948 = vrot.lane.b32.xlu0 %v2929, 2
        %v2949 = vpop.permute.xlu0 %2948
        %2950 = vrot.lane.b32.xlu0 %v2930, 2
        %v2951 = vpop.permute.xlu0 %2950
        %2952 = vrot.lane.b32.xlu0 %v2931, 2
        %v2953 = vpop.permute.xlu0 %2952
        %2954 = vrot.lane.b32.xlu0 %v2932, 2
        %v2955 = vpop.permute.xlu0 %2954
        %2956 = vrot.lane.b32.xlu0 %v2933, 2
        %v2957 = vpop.permute.xlu0 %2956
        %2966 = vst.msk [vmem:[#allocation2] sm:$0xff] %vm2695, %v2943
        %2967 = vst.msk [vmem:[#allocation2 + $0x18] sm:$0xff] %vm2695, %v2945
        %2968 = vst.msk [vmem:[#allocation2 + $0x30] sm:$0xff] %vm2695, %v2947
        %2969 = vst.msk [vmem:[#allocation2 + $0x48] sm:$0xff] %vm2695, %v2949
        %2970 = vst.msk [vmem:[#allocation2 + $0x60] sm:$0xff] %vm2695, %v2951
        %2971 = vst.msk [vmem:[#allocation2 + $0x78] sm:$0xff] %vm2695, %v2953
        %2972 = vst.msk [vmem:[#allocation2 + $0x90] sm:$0xff] %vm2695, %v2955
        %2973 = vst.msk [vmem:[#allocation2 + $0xa8] sm:$0xff] %vm2695, %v2957
        %2974 = vrot.lane.b32.xlu0 %v2926, 1
        %v2975 = vpop.permute.xlu0 %2974
        %2976 = vrot.lane.b32.xlu0 %v2927, 1
        %v2977 = vpop.permute.xlu0 %2976
        %2978 = vrot.lane.b32.xlu0 %v2928, 1
        %v2979 = vpop.permute.xlu0 %2978
        %2980 = vrot.lane.b32.xlu0 %v2929, 1
        %v2981 = vpop.permute.xlu0 %2980
        %2982 = vrot.lane.b32.xlu0 %v2930, 1
        %v2983 = vpop.permute.xlu0 %2982
        %2984 = vrot.lane.b32.xlu0 %v2931, 1
        %v2985 = vpop.permute.xlu0 %2984
        %2986 = vrot.lane.b32.xlu0 %v2932, 1
        %v2987 = vpop.permute.xlu0 %2986
        %2988 = vrot.lane.b32.xlu0 %v2933, 1
        %v2989 = vpop.permute.xlu0 %2988
        %2998 = vst.msk [vmem:[#allocation2 + $0xc0] sm:$0xff] %vm2712, %v2975
        %2999 = vst.msk [vmem:[#allocation2 + $0xd8] sm:$0xff] %vm2712, %v2977
        %3000 = vst.msk [vmem:[#allocation2 + $0xf0] sm:$0xff] %vm2712, %v2979
        %3001 = vst.msk [vmem:[#allocation2 + $0x108] sm:$0xff] %vm2712, %v2981
        %3002 = vst.msk [vmem:[#allocation2 + $0x120] sm:$0xff] %vm2712, %v2983
        %3003 = vst.msk [vmem:[#allocation2 + $0x138] sm:$0xff] %vm2712, %v2985
        %3004 = vst.msk [vmem:[#allocation2 + $0x150] sm:$0xff] %vm2712, %v2987
        %3005 = vst.msk [vmem:[#allocation2 + $0x168] sm:$0xff] %vm2712, %v2989
        %3006 = vst.msk [vmem:[#allocation2 + $0x180] sm:$0xff] %vm2717, %v2926
        %3007 = vst.msk [vmem:[#allocation2 + $0x198] sm:$0xff] %vm2717, %v2927
        %3008 = vst.msk [vmem:[#allocation2 + $0x1b0] sm:$0xff] %vm2717, %v2928
        %3009 = vst.msk [vmem:[#allocation2 + $0x1c8] sm:$0xff] %vm2717, %v2929
        %3010 = vst.msk [vmem:[#allocation2 + $0x1e0] sm:$0xff] %vm2717, %v2930
        %3011 = vst.msk [vmem:[#allocation2 + $0x1f8] sm:$0xff] %vm2717, %v2931
        %3012 = vst.msk [vmem:[#allocation2 + $0x210] sm:$0xff] %vm2717, %v2932
        %3013 = vst.msk [vmem:[#allocation2 + $0x228] sm:$0xff] %vm2717, %v2933
        %3014 = vst.msk [vmem:[#allocation2] sm:$0xff] %vm1268, 0.0
        %3015 = vst.msk [vmem:[#allocation2 + $0x18] sm:$0xff] %vm1268, 0.0
        %3016 = vst.msk [vmem:[#allocation2 + $0x30] sm:$0xff] %vm1268, 0.0
        %3017 = vst.msk [vmem:[#allocation2 + $0x48] sm:$0xff] %vm1268, 0.0
        %3018 = vst.msk [vmem:[#allocation2 + $0x60] sm:$0xff] %vm1268, 0.0
        %3019 = vst.msk [vmem:[#allocation2 + $0x78] sm:$0xff] %vm1268, 0.0
        %3020 = vst.msk [vmem:[#allocation2 + $0x90] sm:$0xff] %vm1268, 0.0
        %3021 = vst.msk [vmem:[#allocation2 + $0xa8] sm:$0xff] %vm1268, 0.0
        %3022 = vst.msk [vmem:[#allocation2 + $0x180] sm:$0xff] %vm2726, 0.0
        %3023 = vst.msk [vmem:[#allocation2 + $0x198] sm:$0xff] %vm2726, 0.0
        %3024 = vst.msk [vmem:[#allocation2 + $0x1b0] sm:$0xff] %vm2726, 0.0
        %3025 = vst.msk [vmem:[#allocation2 + $0x1c8] sm:$0xff] %vm2726, 0.0
        %3026 = vst.msk [vmem:[#allocation2 + $0x1e0] sm:$0xff] %vm2726, 0.0
        %3027 = vst.msk [vmem:[#allocation2 + $0x1f8] sm:$0xff] %vm2726, 0.0
        %3028 = vst.msk [vmem:[#allocation2 + $0x210] sm:$0xff] %vm2726, 0.0
        %3029 = vst.msk [vmem:[#allocation2 + $0x228] sm:$0xff] %vm2726, 0.0
        %v3030 = vld [vmem:[#allocation2] sm:$0xff]
        %v3031 = vld [vmem:[#allocation2 + $0x18] sm:$0xff]
        %v3032 = vld [vmem:[#allocation2 + $0x30] sm:$0xff]
        %v3033 = vld [vmem:[#allocation2 + $0x48] sm:$0xff]
        %v3034 = vld [vmem:[#allocation2 + $0x60] sm:$0xff]
        %v3035 = vld [vmem:[#allocation2 + $0x78] sm:$0xff]
        %v3036 = vld [vmem:[#allocation2 + $0x90] sm:$0xff]
        %v3037 = vld [vmem:[#allocation2 + $0xa8] sm:$0xff]
        %v3038 = vld [vmem:[#allocation2 + $0xc0] sm:$0xff]
        %v3039 = vld [vmem:[#allocation2 + $0xd8] sm:$0xff]
        %v3040 = vld [vmem:[#allocation2 + $0xf0] sm:$0xff]
        %v3041 = vld [vmem:[#allocation2 + $0x108] sm:$0xff]
        %v3042 = vld [vmem:[#allocation2 + $0x120] sm:$0xff]
        %v3043 = vld [vmem:[#allocation2 + $0x138] sm:$0xff]
        %v3044 = vld [vmem:[#allocation2 + $0x150] sm:$0xff]
        %v3045 = vld [vmem:[#allocation2 + $0x168] sm:$0xff]
        %v3046 = vld [vmem:[#allocation2 + $0x180] sm:$0xff]
        %v3047 = vld [vmem:[#allocation2 + $0x198] sm:$0xff]
        %v3048 = vld [vmem:[#allocation2 + $0x1b0] sm:$0xff]
        %v3049 = vld [vmem:[#allocation2 + $0x1c8] sm:$0xff]
        %v3050 = vld [vmem:[#allocation2 + $0x1e0] sm:$0xff]
        %v3051 = vld [vmem:[#allocation2 + $0x1f8] sm:$0xff]
        %v3052 = vld [vmem:[#allocation2 + $0x210] sm:$0xff]
        %v3053 = vld [vmem:[#allocation2 + $0x228] sm:$0xff]
        %v3054 = vpack.c.bf16 %v3031, %v3030
        %v3055 = vpack.c.bf16 %v3033, %v3032
        %v3056 = vpack.c.bf16 %v3035, %v3034
        %v3057 = vpack.c.bf16 %v3037, %v3036
        %v3058 = vpack.c.bf16 %v3039, %v3038
        %v3059 = vpack.c.bf16 %v3041, %v3040
        %v3060 = vpack.c.bf16 %v3043, %v3042
        %v3061 = vpack.c.bf16 %v3045, %v3044
        %v3062 = vpack.c.bf16 %v3047, %v3046
        %v3063 = vpack.c.bf16 %v3049, %v3048
        %v3064 = vpack.c.bf16 %v3051, %v3050
        %v3065 = vpack.c.bf16 %v3053, %v3052
        %v3066 = vld [vmem:[%s19] sm:$0xff]
        %v3067 = vld [vmem:[%s19 + $0x8] sm:$0xff]
        %v3068 = vld [vmem:[%s19 + $0x10] sm:$0xff]
        %v3069 = vld [vmem:[%s19 + $0x18] sm:$0xff]
        %v3070 = vld [vmem:[%s19 + $0x20] sm:$0xff]
        %v3071 = vld [vmem:[%s19 + $0x28] sm:$0xff]
        %v3072 = vld [vmem:[%s19 + $0x30] sm:$0xff]
        %v3073 = vld [vmem:[%s19 + $0x38] sm:$0xff]
        %v3074 = vld [vmem:[%s20] sm:$0xff]
        %v3075 = vld [vmem:[%s20 + $0x8] sm:$0xff]
        %v3076 = vld [vmem:[%s20 + $0x10] sm:$0xff]
        %v3077 = vld [vmem:[%s20 + $0x18] sm:$0xff]
        %v3078 = vld [vmem:[%s20 + $0x20] sm:$0xff]
        %v3079 = vld [vmem:[%s20 + $0x28] sm:$0xff]
        %v3080 = vld [vmem:[%s20 + $0x30] sm:$0xff]
        %v3081 = vld [vmem:[%s20 + $0x38] sm:$0xff]
        %3083 = vset.pattern.permute.xlu0 0
        %3084 = vperm.xlu0 %3083, %v3074
        %v3085 = vpop.permute.xlu0 %3084
        %3088 = vset.pattern.permute.xlu0 0
        %3089 = vperm.xlu0 %3088, %v3075
        %v3090 = vpop.permute.xlu0 %3089
        %3093 = vset.pattern.permute.xlu0 0
        %3094 = vperm.xlu0 %3093, %v3076
        %v3095 = vpop.permute.xlu0 %3094
        %3098 = vset.pattern.permute.xlu0 0
        %3099 = vperm.xlu0 %3098, %v3077
        %v3100 = vpop.permute.xlu0 %3099
        %3103 = vset.pattern.permute.xlu0 0
        %3104 = vperm.xlu0 %3103, %v3078
        %v3105 = vpop.permute.xlu0 %3104
        %3108 = vset.pattern.permute.xlu0 0
        %3109 = vperm.xlu0 %3108, %v3079
        %v3110 = vpop.permute.xlu0 %3109
        %3113 = vset.pattern.permute.xlu0 0
        %3114 = vperm.xlu0 %3113, %v3080
        %v3115 = vpop.permute.xlu0 %3114
        %3118 = vset.pattern.permute.xlu0 0
        %3119 = vperm.xlu0 %3118, %v3081
        %v3120 = vpop.permute.xlu0 %3119
        %v3130 = vunpack.c.l.b16 %v3066
        %v3131 = vunpack.c.h.b16 %v3066
        %v3132 = vunpack.c.l.b16 %v3067
        %v3133 = vunpack.c.h.b16 %v3067
        %v3134 = vunpack.c.l.b16 %v3068
        %v3135 = vunpack.c.h.b16 %v3068
        %v3136 = vunpack.c.l.b16 %v3069
        %v3137 = vunpack.c.h.b16 %v3069
        %v3138 = vunpack.c.l.b16 %v3070
        %v3139 = vunpack.c.h.b16 %v3070
        %v3140 = vunpack.c.l.b16 %v3071
        %v3141 = vunpack.c.h.b16 %v3071
        %v3142 = vunpack.c.l.b16 %v3072
        %v3143 = vunpack.c.h.b16 %v3072
        %v3144 = vunpack.c.l.b16 %v3073
        %v3145 = vunpack.c.h.b16 %v3073
        %v3146 = vpack.c.b16 %v3132, %v3130
        %v3147 = vpack.c.b16 %v3133, %v3131
        %v3148 = vpack.c.b16 %v3136, %v3134
        %v3149 = vpack.c.b16 %v3137, %v3135
        %v3150 = vpack.c.b16 %v3140, %v3138
        %v3151 = vpack.c.b16 %v3141, %v3139
        %v3152 = vpack.c.b16 %v3144, %v3142
        %v3153 = vpack.c.b16 %v3145, %v3143
        %3170 = vrot.lane.b32.xlu0 %v3054, 127
        %v3171 = vpop.permute.xlu0 %3170
        %3172 = vrot.lane.b32.xlu0 %v3055, 127
        %v3173 = vpop.permute.xlu0 %3172
        %3174 = vrot.lane.b32.xlu0 %v3056, 127
        %v3175 = vpop.permute.xlu0 %3174
        %3176 = vrot.lane.b32.xlu0 %v3057, 127
        %v3177 = vpop.permute.xlu0 %3176
        %3178 = vrot.lane.b32.xlu0 %v3058, 127
        %v3179 = vpop.permute.xlu0 %3178
        %3180 = vrot.lane.b32.xlu0 %v3059, 127
        %v3181 = vpop.permute.xlu0 %3180
        %3182 = vrot.lane.b32.xlu0 %v3060, 127
        %v3183 = vpop.permute.xlu0 %3182
        %3184 = vrot.lane.b32.xlu0 %v3061, 127
        %v3185 = vpop.permute.xlu0 %3184
        %3186 = vrot.lane.b32.xlu0 %v3062, 127
        %v3187 = vpop.permute.xlu0 %3186
        %3188 = vrot.lane.b32.xlu0 %v3063, 127
        %v3189 = vpop.permute.xlu0 %3188
        %3190 = vrot.lane.b32.xlu0 %v3064, 127
        %v3191 = vpop.permute.xlu0 %3190
        %3192 = vrot.lane.b32.xlu0 %v3065, 127
        %v3193 = vpop.permute.xlu0 %3192
        %v3207 = vsel %vm1724, %v3147, 0
        %v3210 = vsel %vm1724, %v3149, 0
        %v3213 = vsel %vm1724, %v3151, 0
        %v3216 = vsel %vm1724, %v3153, 0
        %3218 = vmatprep.subr.bf16.mxu0 0
        %3219 = vmatpush1.bf16.msra.mxu0 %v3185
        %3220 = vmatprep.subr.bf16.mxu0 0
        %3221 = vmatpush1.bf16.msra.mxu0 %v3183
        %3222 = vmatprep.subr.bf16.mxu0 0
        %3223 = vmatpush1.bf16.msra.mxu0 %v3181
        %3224 = vmatprep.subr.bf16.mxu0 0
        %3225 = vmatpush1.bf16.msra.mxu0 %v3179
        %3226 = vmatprep.subr.bf16.mxu0 0
        %3227 = vmatpush1.bf16.msra.mxu0 %v3177
        %3228 = vmatprep.subr.bf16.mxu0 0
        %3229 = vmatpush1.bf16.msra.mxu0 %v3175
        %3230 = vmatprep.subr.bf16.mxu0 0
        %3231 = vmatpush1.bf16.msra.mxu0 %v3173
        %3232 = vmatprep.subr.bf16.mxu0 0
        %3233 = vmatpush1.bf16.msra.mxu0 %v3171
        %3234 = vmatprep.subr.bf16.mxu0 0
        %3235 = vmatpush2.bf16.msra.mxu0 0
        %3236 = vmatprep.subr.bf16.mxu0 0
        %3237 = vmatpush2.bf16.msra.mxu0 0
        %3238 = vmatprep.subr.bf16.mxu0 0
        %3239 = vmatpush2.bf16.msra.mxu0 0
        %3240 = vmatprep.subr.bf16.mxu0 0
        %3241 = vmatpush2.bf16.msra.mxu0 0
        %3242 = vmatprep.subr.bf16.mxu0 0
        %3243 = vmatpush2.bf16.msra.mxu0 %v3193
        %3244 = vmatprep.subr.bf16.mxu0 0
        %3245 = vmatpush2.bf16.msra.mxu0 %v3191
        %3246 = vmatprep.subr.bf16.mxu0 0
        %3247 = vmatpush2.bf16.msra.mxu0 %v3189
        %3248 = vmatprep.subr.bf16.mxu0 0
        %3249 = vmatpush2.bf16.msra.mxu0 %v3187
        %3250 = vmatprep.mubr.bf16.mxu0 %v3207
        %3251 = vmatmul.mubr.bf16.gmra.mxu0 %v3146
        %v3252 = vpop.f32.mrf.mxu0
        %v3253 = vadd.f32 %v3085, %v3252
        %v3254 = vpop.f32.mrf.mxu0
        %v3255 = vpop.f32.mrf.mxu0
        %v3256 = vadd.f32 %v3090, %v3255
        %v3257 = vpop.f32.mrf.mxu0
        %3258 = vmatprep.mubr.bf16.mxu0 %v3210
        %3259 = vmatmul.mubr.bf16.gmra.mxu0 %v3148
        %v3260 = vpop.f32.mrf.mxu0
        %v3261 = vadd.f32 %v3095, %v3260
        %v3262 = vpop.f32.mrf.mxu0
        %v3263 = vpop.f32.mrf.mxu0
        %v3264 = vadd.f32 %v3100, %v3263
        %v3265 = vpop.f32.mrf.mxu0
        %3266 = vmatprep.mubr.bf16.mxu0 %v3213
        %3267 = vmatmul.mubr.bf16.gmra.mxu0 %v3150
        %v3268 = vpop.f32.mrf.mxu0
        %v3269 = vadd.f32 %v3105, %v3268
        %v3270 = vpop.f32.mrf.mxu0
        %v3271 = vpop.f32.mrf.mxu0
        %v3272 = vadd.f32 %v3110, %v3271
        %v3273 = vpop.f32.mrf.mxu0
        %3274 = vmatprep.mubr.bf16.mxu0 %v3216
        %3275 = vmatmul.mubr.bf16.gmra.mxu0 %v3152
        %v3276 = vpop.f32.mrf.mxu0
        %v3277 = vadd.f32 %v3115, %v3276
        %v3278 = vpop.f32.mrf.mxu0
        %v3279 = vpop.f32.mrf.mxu0
        %v3280 = vadd.f32 %v3120, %v3279
        %v3281 = vpop.f32.mrf.mxu0
        %3282 = vdwg.mxu0
        %v3283 = vmax.f32 %v3253, 0.0
        %v3284 = vmax.f32 %v3256, 0.0
        %v3285 = vmax.f32 %v3261, 0.0
        %v3286 = vmax.f32 %v3264, 0.0
        %v3287 = vmax.f32 %v3269, 0.0
        %v3288 = vmax.f32 %v3272, 0.0
        %v3289 = vmax.f32 %v3277, 0.0
        %v3290 = vmax.f32 %v3280, 0.0
        %3291 = vst.msk [vmem:[#allocation2] sm:$0xff] %vm2717, %v3283
        %3292 = vst.msk [vmem:[#allocation2 + $0x18] sm:$0xff] %vm2717, %v3284
        %3293 = vst.msk [vmem:[#allocation2 + $0x30] sm:$0xff] %vm2717, %v3285
        %3294 = vst.msk [vmem:[#allocation2 + $0x48] sm:$0xff] %vm2717, %v3286
        %3295 = vst.msk [vmem:[#allocation2 + $0x60] sm:$0xff] %vm2717, %v3287
        %3296 = vst.msk [vmem:[#allocation2 + $0x78] sm:$0xff] %vm2717, %v3288
        %3297 = vst.msk [vmem:[#allocation2 + $0x90] sm:$0xff] %vm2717, %v3289
        %3298 = vst.msk [vmem:[#allocation2 + $0xa8] sm:$0xff] %vm2717, %v3290
        %v3299 = vld [vmem:[#allocation2] sm:$0xff]
        %v3300 = vld [vmem:[#allocation2 + $0x18] sm:$0xff]
        %v3301 = vld [vmem:[#allocation2 + $0x30] sm:$0xff]
        %v3302 = vld [vmem:[#allocation2 + $0x48] sm:$0xff]
        %v3303 = vld [vmem:[#allocation2 + $0x60] sm:$0xff]
        %v3304 = vld [vmem:[#allocation2 + $0x78] sm:$0xff]
        %v3305 = vld [vmem:[#allocation2 + $0x90] sm:$0xff]
        %v3306 = vld [vmem:[#allocation2 + $0xa8] sm:$0xff]
        %3315 = vrot.lane.b32.xlu0 %v3299, 127
        %v3316 = vpop.permute.xlu0 %3315
        %3317 = vrot.lane.b32.xlu0 %v3300, 127
        %v3318 = vpop.permute.xlu0 %3317
        %3319 = vrot.lane.b32.xlu0 %v3301, 127
        %v3320 = vpop.permute.xlu0 %3319
        %3321 = vrot.lane.b32.xlu0 %v3302, 127
        %v3322 = vpop.permute.xlu0 %3321
        %3323 = vrot.lane.b32.xlu0 %v3303, 127
        %v3324 = vpop.permute.xlu0 %3323
        %3325 = vrot.lane.b32.xlu0 %v3304, 127
        %v3326 = vpop.permute.xlu0 %3325
        %3327 = vrot.lane.b32.xlu0 %v3305, 127
        %v3328 = vpop.permute.xlu0 %3327
        %3329 = vrot.lane.b32.xlu0 %v3306, 127
        %v3330 = vpop.permute.xlu0 %3329
        %v3339 = vmax.f32 %v3299, %v3316
        %v3340 = vmax.f32 %v3300, %v3318
        %v3341 = vmax.f32 %v3301, %v3320
        %v3342 = vmax.f32 %v3302, %v3322
        %v3343 = vmax.f32 %v3303, %v3324
        %v3344 = vmax.f32 %v3304, %v3326
        %v3345 = vmax.f32 %v3305, %v3328
        %v3346 = vmax.f32 %v3306, %v3330
        %3347 = vrot.lane.b32.xlu0 %v3299, 126
        %v3348 = vpop.permute.xlu0 %3347
        %3349 = vrot.lane.b32.xlu0 %v3300, 126
        %v3350 = vpop.permute.xlu0 %3349
        %3351 = vrot.lane.b32.xlu0 %v3301, 126
        %v3352 = vpop.permute.xlu0 %3351
        %3353 = vrot.lane.b32.xlu0 %v3302, 126
        %v3354 = vpop.permute.xlu0 %3353
        %3355 = vrot.lane.b32.xlu0 %v3303, 126
        %v3356 = vpop.permute.xlu0 %3355
        %3357 = vrot.lane.b32.xlu0 %v3304, 126
        %v3358 = vpop.permute.xlu0 %3357
        %3359 = vrot.lane.b32.xlu0 %v3305, 126
        %v3360 = vpop.permute.xlu0 %3359
        %3361 = vrot.lane.b32.xlu0 %v3306, 126
        %v3362 = vpop.permute.xlu0 %3361
        %v3371 = vmax.f32 %v3339, %v3348
        %v3372 = vmax.f32 %v3340, %v3350
        %v3373 = vmax.f32 %v3341, %v3352
        %v3374 = vmax.f32 %v3342, %v3354
        %v3375 = vmax.f32 %v3343, %v3356
        %v3376 = vmax.f32 %v3344, %v3358
        %v3377 = vmax.f32 %v3345, %v3360
        %v3378 = vmax.f32 %v3346, %v3362
        %3379 = vrot.lane.b32.xlu0 %v3299, 125
        %v3380 = vpop.permute.xlu0 %3379
        %3381 = vrot.lane.b32.xlu0 %v3300, 125
        %v3382 = vpop.permute.xlu0 %3381
        %3383 = vrot.lane.b32.xlu0 %v3301, 125
        %v3384 = vpop.permute.xlu0 %3383
        %3385 = vrot.lane.b32.xlu0 %v3302, 125
        %v3386 = vpop.permute.xlu0 %3385
        %3387 = vrot.lane.b32.xlu0 %v3303, 125
        %v3388 = vpop.permute.xlu0 %3387
        %3389 = vrot.lane.b32.xlu0 %v3304, 125
        %v3390 = vpop.permute.xlu0 %3389
        %3391 = vrot.lane.b32.xlu0 %v3305, 125
        %v3392 = vpop.permute.xlu0 %3391
        %3393 = vrot.lane.b32.xlu0 %v3306, 125
        %v3394 = vpop.permute.xlu0 %3393
        %v3403 = vmax.f32 %v3371, %v3380
        %v3404 = vmax.f32 %v3372, %v3382
        %v3405 = vmax.f32 %v3373, %v3384
        %v3406 = vmax.f32 %v3374, %v3386
        %v3407 = vmax.f32 %v3375, %v3388
        %v3408 = vmax.f32 %v3376, %v3390
        %v3409 = vmax.f32 %v3377, %v3392
        %v3410 = vmax.f32 %v3378, %v3394
        %v3411 = vld [vmem:[%s21] sm:$0xff]
        %v3412 = vld [vmem:[%s21 + $0x8] sm:$0xff]
        %v3413 = vld [vmem:[%s21 + $0x10] sm:$0xff]
        %v3414 = vld [vmem:[%s21 + $0x18] sm:$0xff]
        %v3415 = vld [vmem:[%s21 + $0x20] sm:$0x7]
        %v3417 = vsel %vm1724, %v3411, 0
        %v3420 = vsel %vm1724, %v3412, 0
        %v3423 = vsel %vm1724, %v3413, 0
        %v3426 = vsel %vm1724, %v3414, 0
        %v3429 = vsel %vm1724, %v3415, 0
        %3431 = vmatprep.subr.mxu0 0.0
        %3432 = vmatpush1.msra.mxu0 0.0
        %3433 = vmatprep.subr.mxu0 0.0
        %3434 = vmatpush1.msra.mxu0 0.0
        %3435 = vmatprep.subr.mxu0 0.0
        %3436 = vmatpush1.msra.mxu0 0.0
        %3437 = vmatprep.subr.mxu0 0.0
        %3438 = vmatpush1.msra.mxu0 0.0
        %3439 = vmatprep.subr.mxu0 0.0
        %3440 = vmatpush1.msra.mxu0 0.0
        %3441 = vmatprep.subr.mxu0 0.0
        %3442 = vmatpush1.msra.mxu0 0.0
        %3443 = vmatprep.subr.mxu0 0.0
        %3444 = vmatpush1.msra.mxu0 0.0
        %3445 = vmatprep.subr.mxu0 0.0
        %3446 = vmatpush1.msra.mxu0 0.0
        %3447 = vmatprep.subr.mxu0 0.0
        %3448 = vmatpush1.msra.mxu0 %v3410
        %3449 = vmatprep.subr.mxu0 0.0
        %3450 = vmatpush1.msra.mxu0 %v3409
        %3451 = vmatprep.subr.mxu0 0.0
        %3452 = vmatpush1.msra.mxu0 %v3408
        %3453 = vmatprep.subr.mxu0 0.0
        %3454 = vmatpush1.msra.mxu0 %v3407
        %3455 = vmatprep.subr.mxu0 0.0
        %3456 = vmatpush1.msra.mxu0 %v3406
        %3457 = vmatprep.subr.mxu0 0.0
        %3458 = vmatpush1.msra.mxu0 %v3405
        %3459 = vmatprep.subr.mxu0 0.0
        %3460 = vmatpush1.msra.mxu0 %v3404
        %3461 = vmatprep.subr.mxu0 0.0
        %3462 = vmatpush1.msra.mxu0 %v3403
        %3463 = vmatprep.subr.mxu0 0.0
        %3464 = vmatpush2.msra.mxu0 0.0
        %3465 = vmatprep.subr.mxu0 0.0
        %3466 = vmatpush2.msra.mxu0 0.0
        %3467 = vmatprep.subr.mxu0 0.0
        %3468 = vmatpush2.msra.mxu0 0.0
        %3469 = vmatprep.subr.mxu0 0.0
        %3470 = vmatpush2.msra.mxu0 0.0
        %3471 = vmatprep.subr.mxu0 0.0
        %3472 = vmatpush2.msra.mxu0 0.0
        %3473 = vmatprep.subr.mxu0 0.0
        %3474 = vmatpush2.msra.mxu0 0.0
        %3475 = vmatprep.subr.mxu0 0.0
        %3476 = vmatpush2.msra.mxu0 0.0
        %3477 = vmatprep.subr.mxu0 0.0
        %3478 = vmatpush2.msra.mxu0 0.0
        %3479 = vmatprep.subr.mxu0 0.0
        %3480 = vmatpush2.msra.mxu0 0.0
        %3481 = vmatprep.subr.mxu0 0.0
        %3482 = vmatpush2.msra.mxu0 0.0
        %3483 = vmatprep.subr.mxu0 0.0
        %3484 = vmatpush2.msra.mxu0 0.0
        %3485 = vmatprep.subr.mxu0 0.0
        %3486 = vmatpush2.msra.mxu0 0.0
        %3487 = vmatprep.subr.mxu0 0.0
        %3488 = vmatpush2.msra.mxu0 0.0
        %3489 = vmatprep.subr.mxu0 0.0
        %3490 = vmatpush2.msra.mxu0 0.0
        %3491 = vmatprep.subr.mxu0 0.0
        %3492 = vmatpush2.msra.mxu0 0.0
        %3493 = vmatprep.subr.mxu0 0.0
        %3494 = vmatpush2.msra.mxu0 0.0
        %3495 = vmatprep.mubr.f32.mxu0 0.0
        %3496 = vmatmul.mubr.f32.gmra.mxu0 %v3417
        %v3497 = vpop.f32.mrf.mxu0
        %v3498 = vadd.f32 0.0, %v3497
        %v3499 = vpop.f32.mrf.mxu0
        %3500 = vmatprep.mubr.f32.mxu0 0.0
        %3501 = vmatmul.mubr.f32.gmra.mxu0 %v3420
        %v3502 = vpop.f32.mrf.mxu0
        %v3503 = vadd.f32 0.0, %v3502
        %v3504 = vpop.f32.mrf.mxu0
        %3505 = vmatprep.mubr.f32.mxu0 0.0
        %3506 = vmatmul.mubr.f32.gmra.mxu0 %v3423
        %v3507 = vpop.f32.mrf.mxu0
        %v3508 = vadd.f32 0.0, %v3507
        %v3509 = vpop.f32.mrf.mxu0
        %3510 = vmatprep.mubr.f32.mxu0 0.0
        %3511 = vmatmul.mubr.f32.gmra.mxu0 %v3426
        %v3512 = vpop.f32.mrf.mxu0
        %v3513 = vadd.f32 0.0, %v3512
        %v3514 = vpop.f32.mrf.mxu0
        %3515 = vmatprep.mubr.f32.mxu0 0.0
        %3516 = vmatmul.mubr.f32.gmra.mxu0 %v3429
        %v3517 = vpop.f32.mrf.mxu0
        %v3518 = vadd.f32 0.0, %v3517
        %v3519 = vpop.f32.mrf.mxu0
        %3520 = vdwg.mxu0
        %v3521 = vadd.f32 %v3498, 0.0
        %v3522 = vadd.f32 %v3503, 0.0
        %v3523 = vadd.f32 %v3508, 0.0
        %v3524 = vadd.f32 %v3513, 0.0
        %v3525 = vadd.f32 %v3518, 0.0
        %v3526 = vld [vmem:[%s22] sm:$0xff]
        %v3527 = vld [vmem:[%s22 + $0x8] sm:$0xff]
        %v3528 = vld [vmem:[%s22 + $0x10] sm:$0xff]
        %v3529 = vld [vmem:[%s22 + $0x18] sm:$0xff]
        %v3530 = vld [vmem:[%s22 + $0x20] sm:$0x7]
        %v3531 = vadd.f32 %v3521, %v3526
        %v3532 = vadd.f32 %v3522, %v3527
        %v3533 = vadd.f32 %v3523, %v3528
        %v3534 = vadd.f32 %v3524, %v3529
        %v3535 = vadd.f32 %v3525, %v3530
        %v3536 = vsel %vm1257, %v3531, -inf
        %v3537 = vsel %vm1257, %v3532, -inf
        %v3538 = vsel %vm1257, %v3533, -inf
        %v3539 = vsel %vm1257, %v3534, -inf
        %vm3540 = vcmask 2048
        %v3541 = vsel %vm3540, %v3535, -inf
        %v3542 = vmax.f32 %v3536, %v3541
        %v3543 = vmax.f32 %v3542, %v3537
        %v3544 = vmax.f32 %v3538, %v3539
        %v3545 = vmax.f32 %v3543, %v3544
        %v3546 = vrot.slane %v3545, 4
        %v3547 = vmax.f32 %v3545, %v3546
        %v3548 = vrot.slane %v3547, 2
        %v3549 = vmax.f32 %v3547, %v3548
        %v3550 = vrot.slane %v3549, 1
        %v3551 = vmax.f32 %v3549, %v3550
        %v3552 = vsub.f32 %v3531, %v3551
        %v3553 = vsub.f32 %v3532, %v3551
        %v3554 = vsub.f32 %v3533, %v3551
        %v3555 = vsub.f32 %v3534, %v3551
        %v3556 = vsub.f32 %v3535, %v3551
        %v3557 = vmul.f32 %v3552, 1.442695
        %v3558 = vpow.pop %v3557
        %v3559 = vmul.f32 %v3553, 1.442695
        %v3560 = vpow.pop %v3559
        %v3561 = vmul.f32 %v3554, 1.442695
        %v3562 = vpow.pop %v3561
        %v3563 = vmul.f32 %v3555, 1.442695
        %v3564 = vpow.pop %v3563
        %v3565 = vmul.f32 %v3556, 1.442695
        %v3566 = vpow.pop %v3565
        %v3567 = vsel %vm1257, %v3558, 0.0
        %v3568 = vsel %vm1257, %v3560, 0.0
        %v3569 = vadd.f32 %v3567, %v3568
        %v3570 = vsel %vm1257, %v3562, 0.0
        %v3571 = vadd.f32 %v3569, %v3570
        %v3572 = vsel %vm1257, %v3564, 0.0
        %v3573 = vadd.f32 %v3571, %v3572
        %v3574 = vsel %vm3540, %v3566, 0.0
        %v3575 = vadd.f32 %v3573, %v3574
        %v3576 = vrot.slane %v3575, 4
        %v3577 = vadd.f32 %v3575, %v3576
        %v3578 = vrot.slane %v3577, 2
        %v3579 = vadd.f32 %v3577, %v3578
        %v3580 = vrot.slane %v3579, 1
        %v3581 = vadd.f32 %v3579, %v3580
        %v3582 = vlog2.pop %v3581
        %v3583 = vmul.f32 %v3582, 0.6931472
        %v3584 = vsub.f32 %v3552, %v3583
        %v3585 = vsub.f32 %v3553, %v3583
        %v3586 = vsub.f32 %v3554, %v3583
        %v3587 = vsub.f32 %v3555, %v3583
        %v3588 = vsub.f32 %v3556, %v3583
        %3589 = vst.msk [vmem:[%s811] sm:$0xff] %vm1257, %v3584
        %3590 = vst.msk [vmem:[%s811 + $0x8] sm:$0xff] %vm1257, %v3585
        %3591 = vst.msk [vmem:[%s811 + $0x10] sm:$0xff] %vm1257, %v3586
        %3592 = vst.msk [vmem:[%s811 + $0x18] sm:$0xff] %vm1257, %v3587
        %3593 = vst.msk [vmem:[%s811 + $0x20] sm:$0x7] %vm3540, %v3588
        %p3594 = scmp.lt.s32.totalorder %s40, 1
        %s3595 = scalar_select %p3594, %s40, 1
        %s3596 = smul.addr %s3595, 5
        %s3597 = smul.addr %s3596, 8
        %s3598 = scalar_lea.vmem %s26, %s3597
        // Predicated region
        $region129: #{tpu_custom_call.1} parent=123 // pred_check
          %p3599 = pneg %p609
        $region130: #{tpu_custom_call.1} parent=123 // pred_check_branch
          %3601 = sbr.rel (%p3599) target = $region132
        $region131: #{tpu_custom_call.1} parent=123 // pred_region
          _
        $region132: #{tpu_custom_call.1} parent=123 // pred_fallthru
          _
      $region124: #{tpu_custom_call.1} parent=5 // pred_fallthru
        _
      %p3602 = scmp.le.s32.totalorder 2, %s35
      // Predicated region
      $region133: #{tpu_custom_call.1} parent=5 // pred_check
        %p3603 = pneg %p3602
      $region134: #{tpu_custom_call.1} parent=5 // pred_check_branch
        %3605 = sbr.rel (%p3603) target = $region136
      $region135: #{tpu_custom_call.1} parent=5 // pred_region
        %s3606 = ssub.s32 %s35, 2
        // Predicated region
        $region137: #{tpu_custom_call.1} parent=135 // pred_check
          %p3607 = pneg %p615
        $region138: #{tpu_custom_call.1} parent=135 // pred_check_branch
          %3609 = sbr.rel (%p3607) target = $region140
        $region139: #{tpu_custom_call.1} parent=135 // pred_region
          %p3610 = scmp.lt.s32.totalorder %s41, 1
          %s3611 = scalar_select %p3610, %s41, 1
          %s3612 = smul.addr %s3611, 5
          %s3613 = smul.addr %s3612, 8
          %s3614 = scalar_lea.vmem %s26, %s3613
        $region140: #{tpu_custom_call.1} parent=135 // pred_fallthru
          _
      $region136: #{tpu_custom_call.1} parent=5 // pred_fallthru
        _
    $region6: #{tpu_custom_call.1} parent=1 // loop_footer
      %s39 = sadd.s32 1, %s35
    $region7: #{tpu_custom_call.1} parent=1 // loop_footer_branch
      %34 = sbr.rel target = $region3
    $region8: #{tpu_custom_call.1} parent=1 // loop_exit
      _
    %3615 = vsyncpa [#allocation4], 1
    %s3616 = scalar_lea.sflag [#allocation4], 1
    %3617 = vsyncpa %s3616, 1

</llo_original>
